<compile_context>
chip_gen: v7x
topology: tpu7x:2x2x1
jax: 0.10.0
libtpu: 0.0.40
codegen_flags: <defaults>
</compile_context>

<pallas_src>
import jax
import jax.numpy as jnp
from jax import lax
from jax.experimental import pallas as pl
from jax.experimental.pallas import tpu as pltpu

# ---------------- small synthetic BERT config ----------------
VOCAB = 128
MAX_POS = 16
HIDDEN = 32
N_HEADS = 4
HEAD_DIM = HIDDEN // N_HEADS
INTERMEDIATE = 64
N_LAYERS = 2
NUM_LABELS = 24
CLS_HIDDEN = 128
LN_EPS = 1e-12
ATTN_SCALE = 1.0 / float(HEAD_DIM) ** 0.5


# ---------------- in-kernel helpers (traced inside the Pallas body) ----------
def _layer_norm(x, g, b):
    mu = jnp.mean(x, axis=-1, keepdims=True)
    xc = x - mu
    var = jnp.mean(xc * xc, axis=-1, keepdims=True)
    return xc * lax.rsqrt(var + LN_EPS) * g + b


def _gelu_tanh(x):
    # TODO(synk): HF BERT default is erf-GELU; tanh approximation used here.
    c = jnp.float32(0.7978845608028654)  # sqrt(2/pi)
    return 0.5 * x * (1.0 + jnp.tanh(c * (x + 0.044715 * x * x * x)))


# ---------------- the single fused kernel ----------------
def _fused_bert_kernel(x_ref, mask_ref, emb_g_ref, emb_b_ref,
                       wqkv_ref, bqkv_ref, wo_ref, bo_ref,
                       ln1g_ref, ln1b_ref, w1_ref, b1_ref,
                       w2_ref, b2_ref, ln2g_ref, ln2b_ref,
                       wc1_ref, bc1_ref, wc2_ref, bc2_ref,
                       out_ref):
    # One grid point == one batch element. x_ref: (S, H) embedding sum.
    x = x_ref[...].astype(jnp.float32)            # (S, H)
    add_mask = mask_ref[0]                        # (1, S) additive key mask

    # Embedding LayerNorm.
    x = _layer_norm(x, emb_g_ref[...], emb_b_ref[...])

    # Encoder layers (unrolled; all weights + activations VMEM-resident).
    for l in range(N_LAYERS):
        # Fused QKV projection: (S, H) @ (H, 3H) -> (S, 3H)
        qkv = jnp.dot(x, wqkv_ref[l], preferred_element_type=jnp.float32) + bqkv_ref[l]

        # Multi-head attention from the slab via static per-head lane slices.
        ctx_heads = []
        for h in range(N_HEADS):
            lo = h * HEAD_DIM
            qh = qkv[:, lo:lo + HEAD_DIM]                               # (S, Dh)
            kh = qkv[:, HIDDEN + lo:HIDDEN + lo + HEAD_DIM]             # (S, Dh)
            vh = qkv[:, 2 * HIDDEN + lo:2 * HIDDEN + lo + HEAD_DIM]     # (S, Dh)
            # scores = q @ k^T  (contraction over last dims of both)
            s = lax.dot_general(qh, kh, (((1,), (1,)), ((), ())),
                                preferred_element_type=jnp.float32)     # (S, S)
            s = s * ATTN_SCALE + add_mask
            s = s - jnp.max(s, axis=-1, keepdims=True)
            p = jnp.exp(s)
            p = p * pl.reciprocal(jnp.sum(p, axis=-1, keepdims=True), approx=True)
            ctx_heads.append(jnp.dot(p, vh, preferred_element_type=jnp.float32))
        ctx = jnp.concatenate(ctx_heads, axis=-1)                       # (S, H)

        attn = jnp.dot(ctx, wo_ref[l], preferred_element_type=jnp.float32) + bo_ref[l]
        x = _layer_norm(attn + x, ln1g_ref[l], ln1b_ref[l])

        hmid = jnp.dot(x, w1_ref[l], preferred_element_type=jnp.float32) + b1_ref[l]
        hmid = _gelu_tanh(hmid)
        ffn = jnp.dot(hmid, w2_ref[l], preferred_element_type=jnp.float32) + b2_ref[l]
        x = _layer_norm(ffn + x, ln2g_ref[l], ln2b_ref[l])

    # torch.mean(last_hidden_state, dim=1)  (includes padded positions, as in ref)
    pooled = jnp.mean(x, axis=0, keepdims=True)                         # (1, H)

    # Classifier head: Linear(H,128) -> ReLU -> Dropout(identity, eval) -> Linear(128,24)
    z = jnp.dot(pooled, wc1_ref[...], preferred_element_type=jnp.float32) + bc1_ref[...]
    z = jnp.maximum(z, 0.0)
    # TODO(synk): Dropout(0.3) is identity in eval/inference mode (no RNG used).
    logits = jnp.dot(z, wc2_ref[...], preferred_element_type=jnp.float32) + bc2_ref[...]
    out_ref[0] = logits.astype(out_ref.dtype)


def fused_bert_classifier(x2, ext_mask, kp):
    """x2: (B*S, H) embedding sum; ext_mask: (B, 1, S) additive mask."""
    B = ext_mask.shape[0]
    S = ext_mask.shape[2]
    zero2 = lambda b: (0, 0)
    zero3 = lambda b: (0, 0, 0)
    logits = pl.pallas_call(
        _fused_bert_kernel,
        out_shape=jax.ShapeDtypeStruct((B, 1, NUM_LABELS), jnp.float32),
        grid=(B,),
        in_specs=[
            pl.BlockSpec((S, HIDDEN), lambda b: (b, 0)),               # x slab rows of batch b
            pl.BlockSpec((1, 1, S), lambda b: (b, 0, 0)),              # additive mask
            pl.BlockSpec((1, HIDDEN), zero2),                          # emb LN gamma
            pl.BlockSpec((1, HIDDEN), zero2),                          # emb LN beta
            pl.BlockSpec((N_LAYERS, HIDDEN, 3 * HIDDEN), zero3),       # fused QKV weights
            pl.BlockSpec((N_LAYERS, 1, 3 * HIDDEN), zero3),            # fused QKV bias
            pl.BlockSpec((N_LAYERS, HIDDEN, HIDDEN), zero3),           # attn out W
            pl.BlockSpec((N_LAYERS, 1, HIDDEN), zero3),                # attn out b
            pl.BlockSpec((N_LAYERS, 1, HIDDEN), zero3),                # ln1 gamma
            pl.BlockSpec((N_LAYERS, 1, HIDDEN), zero3),                # ln1 beta
            pl.BlockSpec((N_LAYERS, HIDDEN, INTERMEDIATE), zero3),     # ffn W1
            pl.BlockSpec((N_LAYERS, 1, INTERMEDIATE), zero3),          # ffn b1
            pl.BlockSpec((N_LAYERS, INTERMEDIATE, HIDDEN), zero3),     # ffn W2
            pl.BlockSpec((N_LAYERS, 1, HIDDEN), zero3),                # ffn b2
            pl.BlockSpec((N_LAYERS, 1, HIDDEN), zero3),                # ln2 gamma
            pl.BlockSpec((N_LAYERS, 1, HIDDEN), zero3),                # ln2 beta
            pl.BlockSpec((HIDDEN, CLS_HIDDEN), zero2),                 # classifier W1
            pl.BlockSpec((1, CLS_HIDDEN), zero2),                      # classifier b1
            pl.BlockSpec((CLS_HIDDEN, NUM_LABELS), zero2),             # classifier W2
            pl.BlockSpec((1, NUM_LABELS), zero2),                      # classifier b2
        ],
        out_specs=pl.BlockSpec((1, 1, NUM_LABELS), lambda b: (b, 0, 0)),
        compiler_params=pltpu.CompilerParams(
            dimension_semantics=("parallel",)),                        # shards batch over TCs on v7x
    )(x2, ext_mask,
      kp["emb_ln_g"], kp["emb_ln_b"],
      kp["wqkv"], kp["bqkv"], kp["wo"], kp["bo"],
      kp["ln1_g"], kp["ln1_b"], kp["w1"], kp["b1"],
      kp["w2"], kp["b2"], kp["ln2_g"], kp["ln2_b"],
      kp["wc1"], kp["bc1"], kp["wc2"], kp["bc2"])
    return logits.reshape(B, NUM_LABELS)


# ---------------- deterministic parameter init ----------------
def init_params(key):
    keys = iter(jax.random.split(key, 8 + 8 * N_LAYERS))

    def w(shape, scale=0.02):
        return scale * jax.random.normal(next(keys), shape, dtype=jnp.float32)

    params = {
        "word_emb": w((VOCAB, HIDDEN)),
        "pos_emb": w((MAX_POS, HIDDEN)),
        "type_emb": w((2, HIDDEN)),
        "emb_ln_g": jnp.ones((HIDDEN,), jnp.float32),
        "emb_ln_b": jnp.zeros((HIDDEN,), jnp.float32),
        "layers": [],
        "wc1": w((HIDDEN, CLS_HIDDEN)),
        "bc1": jnp.zeros((CLS_HIDDEN,), jnp.float32),
        "wc2": w((CLS_HIDDEN, NUM_LABELS)),
        "bc2": jnp.zeros((NUM_LABELS,), jnp.float32),
    }
    for _ in range(N_LAYERS):
        params["layers"].append({
            "wq": w((HIDDEN, HIDDEN)), "bq": jnp.zeros((HIDDEN,), jnp.float32),
            "wk": w((HIDDEN, HIDDEN)), "bk": jnp.zeros((HIDDEN,), jnp.float32),
            "wv": w((HIDDEN, HIDDEN)), "bv": jnp.zeros((HIDDEN,), jnp.float32),
            "wo": w((HIDDEN, HIDDEN)), "bo": jnp.zeros((HIDDEN,), jnp.float32),
            "ln1_g": jnp.ones((HIDDEN,), jnp.float32),
            "ln1_b": jnp.zeros((HIDDEN,), jnp.float32),
            "w1": w((HIDDEN, INTERMEDIATE)),
            "b1": jnp.zeros((INTERMEDIATE,), jnp.float32),
            "w2": w((INTERMEDIATE, HIDDEN)),
            "b2": jnp.zeros((HIDDEN,), jnp.float32),
            "ln2_g": jnp.ones((HIDDEN,), jnp.float32),
            "ln2_b": jnp.zeros((HIDDEN,), jnp.float32),
        })
    return params


def pack_params(params):
    """One-time packing outside the hot path: fuse QKV, stack per-layer weights,
    and pre-reshape biases / LN params to lane-aligned (.., 1, N) tensors."""
    L = params["layers"]
    st = lambda f: jnp.stack([f(l) for l in L])
    return {
        "word_emb": params["word_emb"],
        "pos_emb": params["pos_emb"],
        "type_emb": params["type_emb"],
        "emb_ln_g": params["emb_ln_g"].reshape(1, HIDDEN),
        "emb_ln_b": params["emb_ln_b"].reshape(1, HIDDEN),
        "wqkv": st(lambda l: jnp.concatenate([l["wq"], l["wk"], l["wv"]], axis=1)),
        "bqkv": st(lambda l: jnp.concatenate([l["bq"], l["bk"], l["bv"]]).reshape(1, 3 * HIDDEN)),
        "wo": st(lambda l: l["wo"]),
        "bo": st(lambda l: l["bo"].reshape(1, HIDDEN)),
        "ln1_g": st(lambda l: l["ln1_g"].reshape(1, HIDDEN)),
        "ln1_b": st(lambda l: l["ln1_b"].reshape(1, HIDDEN)),
        "w1": st(lambda l: l["w1"]),
        "b1": st(lambda l: l["b1"].reshape(1, INTERMEDIATE)),
        "w2": st(lambda l: l["w2"]),
        "b2": st(lambda l: l["b2"].reshape(1, HIDDEN)),
        "ln2_g": st(lambda l: l["ln2_g"].reshape(1, HIDDEN)),
        "ln2_b": st(lambda l: l["ln2_b"].reshape(1, HIDDEN)),
        "wc1": params["wc1"],
        "bc1": params["bc1"].reshape(1, CLS_HIDDEN),
        "wc2": params["wc2"],
        "bc2": params["bc2"].reshape(1, NUM_LABELS),
    }


# ---------------- forward pass (gather glue in JAX, all compute in Pallas) ----
def bert_classifier_forward(kp, input_ids, attention_mask):
    B, S = input_ids.shape
    # Embedding lookup (gather) is JAX glue; everything downstream runs in the
    # single fused Pallas kernel.
    x = (kp["word_emb"][input_ids]
         + kp["pos_emb"][jnp.arange(S)][None, :, :]
         + kp["type_emb"][0][None, None, :])
    x2 = x.reshape(B * S, HIDDEN).astype(jnp.float32)
    ext = ((1.0 - attention_mask.astype(jnp.float32)) * -10000.0).reshape(B, 1, S)
    return fused_bert_classifier(x2, ext, kp)


if __name__ == "__main__":
    key = jax.random.PRNGKey(0)
    pkey, ikey = jax.random.split(key)
    params = init_params(pkey)
    kparams = pack_params(params)   # one-time packing, outside jit hot path

    B, S = 2, 8
    input_ids = jax.random.randint(ikey, (B, S), 0, VOCAB, dtype=jnp.int32)
    attention_mask = jnp.ones((B, S), dtype=jnp.int32).at[1, 6:].set(0)

    fwd = jax.jit(bert_classifier_forward)
    logits = fwd(kparams, input_ids, attention_mask)
    jax.block_until_ready(logits)
    assert logits.shape == (B, NUM_LABELS) and logits.dtype == jnp.float32
    print("KERNEL_OK")
</pallas_src>

<mosaic_0001>
module attributes {stable_mosaic.version = 11 : i64} {
  func.func @_fused_bert_kernel(%arg0: i32, %arg1: memref<8x32xf32, #tpu.memory_space<vmem>>, %arg2: memref<1x1x8xf32, #tpu.memory_space<vmem>>, %arg3: memref<1x32xf32, #tpu.memory_space<vmem>>, %arg4: memref<1x32xf32, #tpu.memory_space<vmem>>, %arg5: memref<2x32x96xf32, #tpu.memory_space<vmem>>, %arg6: memref<2x1x96xf32, #tpu.memory_space<vmem>>, %arg7: memref<2x32x32xf32, #tpu.memory_space<vmem>>, %arg8: memref<2x1x32xf32, #tpu.memory_space<vmem>>, %arg9: memref<2x1x32xf32, #tpu.memory_space<vmem>>, %arg10: memref<2x1x32xf32, #tpu.memory_space<vmem>>, %arg11: memref<2x32x64xf32, #tpu.memory_space<vmem>>, %arg12: memref<2x1x64xf32, #tpu.memory_space<vmem>>, %arg13: memref<2x64x32xf32, #tpu.memory_space<vmem>>, %arg14: memref<2x1x32xf32, #tpu.memory_space<vmem>>, %arg15: memref<2x1x32xf32, #tpu.memory_space<vmem>>, %arg16: memref<2x1x32xf32, #tpu.memory_space<vmem>>, %arg17: memref<32x128xf32, #tpu.memory_space<vmem>>, %arg18: memref<1x128xf32, #tpu.memory_space<vmem>>, %arg19: memref<128x24xf32, #tpu.memory_space<vmem>>, %arg20: memref<1x24xf32, #tpu.memory_space<vmem>>, %arg21: memref<1x1x24xf32, #tpu.memory_space<vmem>>) attributes {dimension_semantics = [#tpu.dimension_semantics<parallel>], iteration_bounds = array<i64: 2>, scalar_prefetch = 0 : i64, scratch_operands = 0 : i64, tpu.core_type = #tpu.core_type<tc>, window_params = [{transform_indices = @transform_0, window_bounds = array<i64: 8, 32>}, {transform_indices = @transform_1, window_bounds = array<i64: 1, 1, 8>}, {pipeline_mode = #tpu.pipeline_mode<synchronous>, transform_indices = @transform_2, window_bounds = array<i64: 1, 32>}, {pipeline_mode = #tpu.pipeline_mode<synchronous>, transform_indices = @transform_3, window_bounds = array<i64: 1, 32>}, {pipeline_mode = #tpu.pipeline_mode<synchronous>, transform_indices = @transform_4, window_bounds = array<i64: 2, 32, 96>}, {pipeline_mode = #tpu.pipeline_mode<synchronous>, transform_indices = @transform_5, window_bounds = array<i64: 2, 1, 96>}, {pipeline_mode = #tpu.pipeline_mode<synchronous>, transform_indices = @transform_6, window_bounds = array<i64: 2, 32, 32>}, {pipeline_mode = #tpu.pipeline_mode<synchronous>, transform_indices = @transform_7, window_bounds = array<i64: 2, 1, 32>}, {pipeline_mode = #tpu.pipeline_mode<synchronous>, transform_indices = @transform_8, window_bounds = array<i64: 2, 1, 32>}, {pipeline_mode = #tpu.pipeline_mode<synchronous>, transform_indices = @transform_9, window_bounds = array<i64: 2, 1, 32>}, {pipeline_mode = #tpu.pipeline_mode<synchronous>, transform_indices = @transform_10, window_bounds = array<i64: 2, 32, 64>}, {pipeline_mode = #tpu.pipeline_mode<synchronous>, transform_indices = @transform_11, window_bounds = array<i64: 2, 1, 64>}, {pipeline_mode = #tpu.pipeline_mode<synchronous>, transform_indices = @transform_12, window_bounds = array<i64: 2, 64, 32>}, {pipeline_mode = #tpu.pipeline_mode<synchronous>, transform_indices = @transform_13, window_bounds = array<i64: 2, 1, 32>}, {pipeline_mode = #tpu.pipeline_mode<synchronous>, transform_indices = @transform_14, window_bounds = array<i64: 2, 1, 32>}, {pipeline_mode = #tpu.pipeline_mode<synchronous>, transform_indices = @transform_15, window_bounds = array<i64: 2, 1, 32>}, {pipeline_mode = #tpu.pipeline_mode<synchronous>, transform_indices = @transform_16, window_bounds = array<i64: 32, 128>}, {pipeline_mode = #tpu.pipeline_mode<synchronous>, transform_indices = @transform_17, window_bounds = array<i64: 1, 128>}, {pipeline_mode = #tpu.pipeline_mode<synchronous>, transform_indices = @transform_18, window_bounds = array<i64: 128, 24>}, {pipeline_mode = #tpu.pipeline_mode<synchronous>, transform_indices = @transform_19, window_bounds = array<i64: 1, 24>}, {transform_indices = @transform_20, window_bounds = array<i64: 1, 1, 24>}]} {
    %c0 = arith.constant 0 : index
    %c0_0 = arith.constant 0 : index
    %0 = vector.load %arg1[%c0, %c0_0] : memref<8x32xf32, #tpu.memory_space<vmem>>, vector<8x32xf32>
    %c0_1 = arith.constant 0 : index
    %c0_2 = arith.constant 0 : index
    %c0_3 = arith.constant 0 : index
    %1 = vector.load %arg2[%c0_1, %c0_2, %c0_3] : memref<1x1x8xf32, #tpu.memory_space<vmem>>, vector<1x1x8xf32>
    %2 = vector.shape_cast %1 : vector<1x1x8xf32> to vector<1x8xf32>
    %c0_4 = arith.constant 0 : index
    %c0_5 = arith.constant 0 : index
    %3 = vector.load %arg3[%c0_4, %c0_5] : memref<1x32xf32, #tpu.memory_space<vmem>>, vector<1x32xf32>
    %c0_6 = arith.constant 0 : index
    %c0_7 = arith.constant 0 : index
    %4 = vector.load %arg4[%c0_6, %c0_7] : memref<1x32xf32, #tpu.memory_space<vmem>>, vector<1x32xf32>
    %cst = arith.constant dense<0.000000e+00> : vector<8xf32>
    %5 = vector.multi_reduction <add>, %0, %cst [1] : vector<8x32xf32> to vector<8xf32>
    %6 = vector.shape_cast %5 : vector<8xf32> to vector<8x1xf32>
    %cst_8 = arith.constant 3.200000e+01 : f32
    %7 = vector.broadcast %cst_8 : f32 to vector<8x1xf32>
    %8 = arith.divf %6, %7 : vector<8x1xf32>
    %9 = vector.broadcast %8 : vector<8x1xf32> to vector<8x32xf32>
    %10 = arith.subf %0, %9 : vector<8x32xf32>
    %11 = arith.mulf %10, %10 : vector<8x32xf32>
    %cst_9 = arith.constant dense<0.000000e+00> : vector<8xf32>
    %12 = vector.multi_reduction <add>, %11, %cst_9 [1] : vector<8x32xf32> to vector<8xf32>
    %13 = vector.shape_cast %12 : vector<8xf32> to vector<8x1xf32>
    %cst_10 = arith.constant 3.200000e+01 : f32
    %14 = vector.broadcast %cst_10 : f32 to vector<8x1xf32>
    %15 = arith.divf %13, %14 : vector<8x1xf32>
    %cst_11 = arith.constant 9.99999996E-13 : f32
    %16 = vector.broadcast %cst_11 : f32 to vector<8x1xf32>
    %17 = arith.addf %15, %16 : vector<8x1xf32>
    %18 = math.rsqrt %17 : vector<8x1xf32>
    %19 = vector.broadcast %18 : vector<8x1xf32> to vector<8x32xf32>
    %20 = arith.mulf %10, %19 : vector<8x32xf32>
    %21 = vector.broadcast %3 : vector<1x32xf32> to vector<8x32xf32>
    %22 = arith.mulf %20, %21 : vector<8x32xf32>
    %23 = vector.broadcast %4 : vector<1x32xf32> to vector<8x32xf32>
    %24 = arith.addf %22, %23 : vector<8x32xf32>
    %c0_12 = arith.constant 0 : index
    %c0_13 = arith.constant 0 : index
    %c0_14 = arith.constant 0 : index
    %25 = vector.load %arg5[%c0_12, %c0_13, %c0_14] : memref<2x32x96xf32, #tpu.memory_space<vmem>>, vector<1x32x96xf32>
    %26 = vector.shape_cast %25 : vector<1x32x96xf32> to vector<32x96xf32>
    %cst_15 = arith.constant dense<0.000000e+00> : vector<8x96xf32>
    %27 = tpu.matmul %24, %26, %cst_15 {dimension_numbers = #tpu.dot_dimension_numbers<[1], [0], [0], [1], [0, 0, 1, 1], [], []>} : vector<8x32xf32>, vector<32x96xf32>, vector<8x96xf32> -> vector<8x96xf32>
    %c0_16 = arith.constant 0 : index
    %c0_17 = arith.constant 0 : index
    %c0_18 = arith.constant 0 : index
    %28 = vector.load %arg6[%c0_16, %c0_17, %c0_18] : memref<2x1x96xf32, #tpu.memory_space<vmem>>, vector<1x1x96xf32>
    %29 = vector.shape_cast %28 : vector<1x1x96xf32> to vector<1x96xf32>
    %30 = vector.broadcast %29 : vector<1x96xf32> to vector<8x96xf32>
    %31 = arith.addf %27, %30 : vector<8x96xf32>
    %32 = vector.extract_strided_slice %31 {offsets = [0, 0], sizes = [8, 8], strides = [1, 1]} : vector<8x96xf32> to vector<8x8xf32>
    %33 = vector.extract_strided_slice %31 {offsets = [0, 32], sizes = [8, 8], strides = [1, 1]} : vector<8x96xf32> to vector<8x8xf32>
    %34 = vector.extract_strided_slice %31 {offsets = [0, 64], sizes = [8, 8], strides = [1, 1]} : vector<8x96xf32> to vector<8x8xf32>
    %cst_19 = arith.constant dense<0.000000e+00> : vector<8x8xf32>
    %35 = tpu.matmul %32, %33, %cst_19 {dimension_numbers = #tpu.dot_dimension_numbers<[1], [1], [0], [0], [0, 0, 1, 0], [], []>} : vector<8x8xf32>, vector<8x8xf32>, vector<8x8xf32> -> vector<8x8xf32>
    %cst_20 = arith.constant 0.353553385 : f32
    %36 = vector.broadcast %cst_20 : f32 to vector<8x8xf32>
    %37 = arith.mulf %35, %36 : vector<8x8xf32>
    %38 = vector.broadcast %2 : vector<1x8xf32> to vector<8x8xf32>
    %39 = arith.addf %37, %38 : vector<8x8xf32>
    %cst_21 = arith.constant dense<0xFF800000> : vector<8xf32>
    %40 = vector.multi_reduction <maximumf>, %39, %cst_21 [1] : vector<8x8xf32> to vector<8xf32>
    %41 = vector.shape_cast %40 : vector<8xf32> to vector<8x1xf32>
    %42 = vector.broadcast %41 : vector<8x1xf32> to vector<8x8xf32>
    %43 = arith.subf %39, %42 : vector<8x8xf32>
    %44 = math.exp %43 : vector<8x8xf32>
    %cst_22 = arith.constant dense<0.000000e+00> : vector<8xf32>
    %45 = vector.multi_reduction <add>, %44, %cst_22 [1] : vector<8x8xf32> to vector<8xf32>
    %46 = vector.shape_cast %45 : vector<8xf32> to vector<8x1xf32>
    %47 = tpu.reciprocal %46 {approx = true} : vector<8x1xf32> -> vector<8x1xf32>
    %48 = vector.broadcast %47 : vector<8x1xf32> to vector<8x8xf32>
    %49 = arith.mulf %44, %48 : vector<8x8xf32>
    %cst_23 = arith.constant dense<0.000000e+00> : vector<8x8xf32>
    %50 = tpu.matmul %49, %34, %cst_23 {dimension_numbers = #tpu.dot_dimension_numbers<[1], [0], [0], [1], [0, 0, 1, 1], [], []>} : vector<8x8xf32>, vector<8x8xf32>, vector<8x8xf32> -> vector<8x8xf32>
    %51 = vector.extract_strided_slice %31 {offsets = [0, 8], sizes = [8, 8], strides = [1, 1]} : vector<8x96xf32> to vector<8x8xf32>
    %52 = vector.extract_strided_slice %31 {offsets = [0, 40], sizes = [8, 8], strides = [1, 1]} : vector<8x96xf32> to vector<8x8xf32>
    %53 = vector.extract_strided_slice %31 {offsets = [0, 72], sizes = [8, 8], strides = [1, 1]} : vector<8x96xf32> to vector<8x8xf32>
    %cst_24 = arith.constant dense<0.000000e+00> : vector<8x8xf32>
    %54 = tpu.matmul %51, %52, %cst_24 {dimension_numbers = #tpu.dot_dimension_numbers<[1], [1], [0], [0], [0, 0, 1, 0], [], []>} : vector<8x8xf32>, vector<8x8xf32>, vector<8x8xf32> -> vector<8x8xf32>
    %cst_25 = arith.constant 0.353553385 : f32
    %55 = vector.broadcast %cst_25 : f32 to vector<8x8xf32>
    %56 = arith.mulf %54, %55 : vector<8x8xf32>
    %57 = vector.broadcast %2 : vector<1x8xf32> to vector<8x8xf32>
    %58 = arith.addf %56, %57 : vector<8x8xf32>
    %cst_26 = arith.constant dense<0xFF800000> : vector<8xf32>
    %59 = vector.multi_reduction <maximumf>, %58, %cst_26 [1] : vector<8x8xf32> to vector<8xf32>
    %60 = vector.shape_cast %59 : vector<8xf32> to vector<8x1xf32>
    %61 = vector.broadcast %60 : vector<8x1xf32> to vector<8x8xf32>
    %62 = arith.subf %58, %61 : vector<8x8xf32>
    %63 = math.exp %62 : vector<8x8xf32>
    %cst_27 = arith.constant dense<0.000000e+00> : vector<8xf32>
    %64 = vector.multi_reduction <add>, %63, %cst_27 [1] : vector<8x8xf32> to vector<8xf32>
    %65 = vector.shape_cast %64 : vector<8xf32> to vector<8x1xf32>
    %66 = tpu.reciprocal %65 {approx = true} : vector<8x1xf32> -> vector<8x1xf32>
    %67 = vector.broadcast %66 : vector<8x1xf32> to vector<8x8xf32>
    %68 = arith.mulf %63, %67 : vector<8x8xf32>
    %cst_28 = arith.constant dense<0.000000e+00> : vector<8x8xf32>
    %69 = tpu.matmul %68, %53, %cst_28 {dimension_numbers = #tpu.dot_dimension_numbers<[1], [0], [0], [1], [0, 0, 1, 1], [], []>} : vector<8x8xf32>, vector<8x8xf32>, vector<8x8xf32> -> vector<8x8xf32>
    %70 = vector.extract_strided_slice %31 {offsets = [0, 16], sizes = [8, 8], strides = [1, 1]} : vector<8x96xf32> to vector<8x8xf32>
    %71 = vector.extract_strided_slice %31 {offsets = [0, 48], sizes = [8, 8], strides = [1, 1]} : vector<8x96xf32> to vector<8x8xf32>
    %72 = vector.extract_strided_slice %31 {offsets = [0, 80], sizes = [8, 8], strides = [1, 1]} : vector<8x96xf32> to vector<8x8xf32>
    %cst_29 = arith.constant dense<0.000000e+00> : vector<8x8xf32>
    %73 = tpu.matmul %70, %71, %cst_29 {dimension_numbers = #tpu.dot_dimension_numbers<[1], [1], [0], [0], [0, 0, 1, 0], [], []>} : vector<8x8xf32>, vector<8x8xf32>, vector<8x8xf32> -> vector<8x8xf32>
    %cst_30 = arith.constant 0.353553385 : f32
    %74 = vector.broadcast %cst_30 : f32 to vector<8x8xf32>
    %75 = arith.mulf %73, %74 : vector<8x8xf32>
    %76 = vector.broadcast %2 : vector<1x8xf32> to vector<8x8xf32>
    %77 = arith.addf %75, %76 : vector<8x8xf32>
    %cst_31 = arith.constant dense<0xFF800000> : vector<8xf32>
    %78 = vector.multi_reduction <maximumf>, %77, %cst_31 [1] : vector<8x8xf32> to vector<8xf32>
    %79 = vector.shape_cast %78 : vector<8xf32> to vector<8x1xf32>
    %80 = vector.broadcast %79 : vector<8x1xf32> to vector<8x8xf32>
    %81 = arith.subf %77, %80 : vector<8x8xf32>
    %82 = math.exp %81 : vector<8x8xf32>
    %cst_32 = arith.constant dense<0.000000e+00> : vector<8xf32>
    %83 = vector.multi_reduction <add>, %82, %cst_32 [1] : vector<8x8xf32> to vector<8xf32>
    %84 = vector.shape_cast %83 : vector<8xf32> to vector<8x1xf32>
    %85 = tpu.reciprocal %84 {approx = true} : vector<8x1xf32> -> vector<8x1xf32>
    %86 = vector.broadcast %85 : vector<8x1xf32> to vector<8x8xf32>
    %87 = arith.mulf %82, %86 : vector<8x8xf32>
    %cst_33 = arith.constant dense<0.000000e+00> : vector<8x8xf32>
    %88 = tpu.matmul %87, %72, %cst_33 {dimension_numbers = #tpu.dot_dimension_numbers<[1], [0], [0], [1], [0, 0, 1, 1], [], []>} : vector<8x8xf32>, vector<8x8xf32>, vector<8x8xf32> -> vector<8x8xf32>
    %89 = vector.extract_strided_slice %31 {offsets = [0, 24], sizes = [8, 8], strides = [1, 1]} : vector<8x96xf32> to vector<8x8xf32>
    %90 = vector.extract_strided_slice %31 {offsets = [0, 56], sizes = [8, 8], strides = [1, 1]} : vector<8x96xf32> to vector<8x8xf32>
    %91 = vector.extract_strided_slice %31 {offsets = [0, 88], sizes = [8, 8], strides = [1, 1]} : vector<8x96xf32> to vector<8x8xf32>
    %cst_34 = arith.constant dense<0.000000e+00> : vector<8x8xf32>
    %92 = tpu.matmul %89, %90, %cst_34 {dimension_numbers = #tpu.dot_dimension_numbers<[1], [1], [0], [0], [0, 0, 1, 0], [], []>} : vector<8x8xf32>, vector<8x8xf32>, vector<8x8xf32> -> vector<8x8xf32>
    %cst_35 = arith.constant 0.353553385 : f32
    %93 = vector.broadcast %cst_35 : f32 to vector<8x8xf32>
    %94 = arith.mulf %92, %93 : vector<8x8xf32>
    %95 = vector.broadcast %2 : vector<1x8xf32> to vector<8x8xf32>
    %96 = arith.addf %94, %95 : vector<8x8xf32>
    %cst_36 = arith.constant dense<0xFF800000> : vector<8xf32>
    %97 = vector.multi_reduction <maximumf>, %96, %cst_36 [1] : vector<8x8xf32> to vector<8xf32>
    %98 = vector.shape_cast %97 : vector<8xf32> to vector<8x1xf32>
    %99 = vector.broadcast %98 : vector<8x1xf32> to vector<8x8xf32>
    %100 = arith.subf %96, %99 : vector<8x8xf32>
    %101 = math.exp %100 : vector<8x8xf32>
    %cst_37 = arith.constant dense<0.000000e+00> : vector<8xf32>
    %102 = vector.multi_reduction <add>, %101, %cst_37 [1] : vector<8x8xf32> to vector<8xf32>
    %103 = vector.shape_cast %102 : vector<8xf32> to vector<8x1xf32>
    %104 = tpu.reciprocal %103 {approx = true} : vector<8x1xf32> -> vector<8x1xf32>
    %105 = vector.broadcast %104 : vector<8x1xf32> to vector<8x8xf32>
    %106 = arith.mulf %101, %105 : vector<8x8xf32>
    %cst_38 = arith.constant dense<0.000000e+00> : vector<8x8xf32>
    %107 = tpu.matmul %106, %91, %cst_38 {dimension_numbers = #tpu.dot_dimension_numbers<[1], [0], [0], [1], [0, 0, 1, 1], [], []>} : vector<8x8xf32>, vector<8x8xf32>, vector<8x8xf32> -> vector<8x8xf32>
    %108 = tpu.concatenate %50, %69, %88, %107 in 1 : vector<8x8xf32>, vector<8x8xf32>, vector<8x8xf32>, vector<8x8xf32> -> vector<8x32xf32>
    %c0_39 = arith.constant 0 : index
    %c0_40 = arith.constant 0 : index
    %c0_41 = arith.constant 0 : index
    %109 = vector.load %arg7[%c0_39, %c0_40, %c0_41] : memref<2x32x32xf32, #tpu.memory_space<vmem>>, vector<1x32x32xf32>
    %110 = vector.shape_cast %109 : vector<1x32x32xf32> to vector<32x32xf32>
    %cst_42 = arith.constant dense<0.000000e+00> : vector<8x32xf32>
    %111 = tpu.matmul %108, %110, %cst_42 {dimension_numbers = #tpu.dot_dimension_numbers<[1], [0], [0], [1], [0, 0, 1, 1], [], []>} : vector<8x32xf32>, vector<32x32xf32>, vector<8x32xf32> -> vector<8x32xf32>
    %c0_43 = arith.constant 0 : index
    %c0_44 = arith.constant 0 : index
    %c0_45 = arith.constant 0 : index
    %112 = vector.load %arg8[%c0_43, %c0_44, %c0_45] : memref<2x1x32xf32, #tpu.memory_space<vmem>>, vector<1x1x32xf32>
    %113 = vector.shape_cast %112 : vector<1x1x32xf32> to vector<1x32xf32>
    %114 = vector.broadcast %113 : vector<1x32xf32> to vector<8x32xf32>
    %115 = arith.addf %111, %114 : vector<8x32xf32>
    %116 = arith.addf %115, %24 : vector<8x32xf32>
    %c0_46 = arith.constant 0 : index
    %c0_47 = arith.constant 0 : index
    %c0_48 = arith.constant 0 : index
    %117 = vector.load %arg9[%c0_46, %c0_47, %c0_48] : memref<2x1x32xf32, #tpu.memory_space<vmem>>, vector<1x1x32xf32>
    %118 = vector.shape_cast %117 : vector<1x1x32xf32> to vector<1x32xf32>
    %c0_49 = arith.constant 0 : index
    %c0_50 = arith.constant 0 : index
    %c0_51 = arith.constant 0 : index
    %119 = vector.load %arg10[%c0_49, %c0_50, %c0_51] : memref<2x1x32xf32, #tpu.memory_space<vmem>>, vector<1x1x32xf32>
    %120 = vector.shape_cast %119 : vector<1x1x32xf32> to vector<1x32xf32>
    %cst_52 = arith.constant dense<0.000000e+00> : vector<8xf32>
    %121 = vector.multi_reduction <add>, %116, %cst_52 [1] : vector<8x32xf32> to vector<8xf32>
    %122 = vector.shape_cast %121 : vector<8xf32> to vector<8x1xf32>
    %cst_53 = arith.constant 3.200000e+01 : f32
    %123 = vector.broadcast %cst_53 : f32 to vector<8x1xf32>
    %124 = arith.divf %122, %123 : vector<8x1xf32>
    %125 = vector.broadcast %124 : vector<8x1xf32> to vector<8x32xf32>
    %126 = arith.subf %116, %125 : vector<8x32xf32>
    %127 = arith.mulf %126, %126 : vector<8x32xf32>
    %cst_54 = arith.constant dense<0.000000e+00> : vector<8xf32>
    %128 = vector.multi_reduction <add>, %127, %cst_54 [1] : vector<8x32xf32> to vector<8xf32>
    %129 = vector.shape_cast %128 : vector<8xf32> to vector<8x1xf32>
    %cst_55 = arith.constant 3.200000e+01 : f32
    %130 = vector.broadcast %cst_55 : f32 to vector<8x1xf32>
    %131 = arith.divf %129, %130 : vector<8x1xf32>
    %cst_56 = arith.constant 9.99999996E-13 : f32
    %132 = vector.broadcast %cst_56 : f32 to vector<8x1xf32>
    %133 = arith.addf %131, %132 : vector<8x1xf32>
    %134 = math.rsqrt %133 : vector<8x1xf32>
    %135 = vector.broadcast %134 : vector<8x1xf32> to vector<8x32xf32>
    %136 = arith.mulf %126, %135 : vector<8x32xf32>
    %137 = vector.broadcast %118 : vector<1x32xf32> to vector<8x32xf32>
    %138 = arith.mulf %136, %137 : vector<8x32xf32>
    %139 = vector.broadcast %120 : vector<1x32xf32> to vector<8x32xf32>
    %140 = arith.addf %138, %139 : vector<8x32xf32>
    %c0_57 = arith.constant 0 : index
    %c0_58 = arith.constant 0 : index
    %c0_59 = arith.constant 0 : index
    %141 = vector.load %arg11[%c0_57, %c0_58, %c0_59] : memref<2x32x64xf32, #tpu.memory_space<vmem>>, vector<1x32x64xf32>
    %142 = vector.shape_cast %141 : vector<1x32x64xf32> to vector<32x64xf32>
    %cst_60 = arith.constant dense<0.000000e+00> : vector<8x64xf32>
    %143 = tpu.matmul %140, %142, %cst_60 {dimension_numbers = #tpu.dot_dimension_numbers<[1], [0], [0], [1], [0, 0, 1, 1], [], []>} : vector<8x32xf32>, vector<32x64xf32>, vector<8x64xf32> -> vector<8x64xf32>
    %c0_61 = arith.constant 0 : index
    %c0_62 = arith.constant 0 : index
    %c0_63 = arith.constant 0 : index
    %144 = vector.load %arg12[%c0_61, %c0_62, %c0_63] : memref<2x1x64xf32, #tpu.memory_space<vmem>>, vector<1x1x64xf32>
    %145 = vector.shape_cast %144 : vector<1x1x64xf32> to vector<1x64xf32>
    %146 = vector.broadcast %145 : vector<1x64xf32> to vector<8x64xf32>
    %147 = arith.addf %143, %146 : vector<8x64xf32>
    %cst_64 = arith.constant 5.000000e-01 : f32
    %148 = vector.broadcast %cst_64 : f32 to vector<8x64xf32>
    %149 = arith.mulf %148, %147 : vector<8x64xf32>
    %cst_65 = arith.constant 4.471500e-02 : f32
    %150 = vector.broadcast %cst_65 : f32 to vector<8x64xf32>
    %151 = arith.mulf %150, %147 : vector<8x64xf32>
    %152 = arith.mulf %151, %147 : vector<8x64xf32>
    %153 = arith.mulf %152, %147 : vector<8x64xf32>
    %154 = arith.addf %147, %153 : vector<8x64xf32>
    %cst_66 = arith.constant 0.797884583 : f32
    %155 = vector.broadcast %cst_66 : f32 to vector<8x64xf32>
    %156 = arith.mulf %155, %154 : vector<8x64xf32>
    %157 = math.tanh %156 : vector<8x64xf32>
    %cst_67 = arith.constant 1.000000e+00 : f32
    %158 = vector.broadcast %cst_67 : f32 to vector<8x64xf32>
    %159 = arith.addf %158, %157 : vector<8x64xf32>
    %160 = arith.mulf %149, %159 : vector<8x64xf32>
    %c0_68 = arith.constant 0 : index
    %c0_69 = arith.constant 0 : index
    %c0_70 = arith.constant 0 : index
    %161 = vector.load %arg13[%c0_68, %c0_69, %c0_70] : memref<2x64x32xf32, #tpu.memory_space<vmem>>, vector<1x64x32xf32>
    %162 = vector.shape_cast %161 : vector<1x64x32xf32> to vector<64x32xf32>
    %cst_71 = arith.constant dense<0.000000e+00> : vector<8x32xf32>
    %163 = tpu.matmul %160, %162, %cst_71 {dimension_numbers = #tpu.dot_dimension_numbers<[1], [0], [0], [1], [0, 0, 1, 1], [], []>} : vector<8x64xf32>, vector<64x32xf32>, vector<8x32xf32> -> vector<8x32xf32>
    %c0_72 = arith.constant 0 : index
    %c0_73 = arith.constant 0 : index
    %c0_74 = arith.constant 0 : index
    %164 = vector.load %arg14[%c0_72, %c0_73, %c0_74] : memref<2x1x32xf32, #tpu.memory_space<vmem>>, vector<1x1x32xf32>
    %165 = vector.shape_cast %164 : vector<1x1x32xf32> to vector<1x32xf32>
    %166 = vector.broadcast %165 : vector<1x32xf32> to vector<8x32xf32>
    %167 = arith.addf %163, %166 : vector<8x32xf32>
    %168 = arith.addf %167, %140 : vector<8x32xf32>
    %c0_75 = arith.constant 0 : index
    %c0_76 = arith.constant 0 : index
    %c0_77 = arith.constant 0 : index
    %169 = vector.load %arg15[%c0_75, %c0_76, %c0_77] : memref<2x1x32xf32, #tpu.memory_space<vmem>>, vector<1x1x32xf32>
    %170 = vector.shape_cast %169 : vector<1x1x32xf32> to vector<1x32xf32>
    %c0_78 = arith.constant 0 : index
    %c0_79 = arith.constant 0 : index
    %c0_80 = arith.constant 0 : index
    %171 = vector.load %arg16[%c0_78, %c0_79, %c0_80] : memref<2x1x32xf32, #tpu.memory_space<vmem>>, vector<1x1x32xf32>
    %172 = vector.shape_cast %171 : vector<1x1x32xf32> to vector<1x32xf32>
    %cst_81 = arith.constant dense<0.000000e+00> : vector<8xf32>
    %173 = vector.multi_reduction <add>, %168, %cst_81 [1] : vector<8x32xf32> to vector<8xf32>
    %174 = vector.shape_cast %173 : vector<8xf32> to vector<8x1xf32>
    %cst_82 = arith.constant 3.200000e+01 : f32
    %175 = vector.broadcast %cst_82 : f32 to vector<8x1xf32>
    %176 = arith.divf %174, %175 : vector<8x1xf32>
    %177 = vector.broadcast %176 : vector<8x1xf32> to vector<8x32xf32>
    %178 = arith.subf %168, %177 : vector<8x32xf32>
    %179 = arith.mulf %178, %178 : vector<8x32xf32>
    %cst_83 = arith.constant dense<0.000000e+00> : vector<8xf32>
    %180 = vector.multi_reduction <add>, %179, %cst_83 [1] : vector<8x32xf32> to vector<8xf32>
    %181 = vector.shape_cast %180 : vector<8xf32> to vector<8x1xf32>
    %cst_84 = arith.constant 3.200000e+01 : f32
    %182 = vector.broadcast %cst_84 : f32 to vector<8x1xf32>
    %183 = arith.divf %181, %182 : vector<8x1xf32>
    %cst_85 = arith.constant 9.99999996E-13 : f32
    %184 = vector.broadcast %cst_85 : f32 to vector<8x1xf32>
    %185 = arith.addf %183, %184 : vector<8x1xf32>
    %186 = math.rsqrt %185 : vector<8x1xf32>
    %187 = vector.broadcast %186 : vector<8x1xf32> to vector<8x32xf32>
    %188 = arith.mulf %178, %187 : vector<8x32xf32>
    %189 = vector.broadcast %170 : vector<1x32xf32> to vector<8x32xf32>
    %190 = arith.mulf %188, %189 : vector<8x32xf32>
    %191 = vector.broadcast %172 : vector<1x32xf32> to vector<8x32xf32>
    %192 = arith.addf %190, %191 : vector<8x32xf32>
    %c1 = arith.constant 1 : index
    %c0_86 = arith.constant 0 : index
    %c0_87 = arith.constant 0 : index
    %193 = vector.load %arg5[%c1, %c0_86, %c0_87] : memref<2x32x96xf32, #tpu.memory_space<vmem>>, vector<1x32x96xf32>
    %194 = vector.shape_cast %193 : vector<1x32x96xf32> to vector<32x96xf32>
    %cst_88 = arith.constant dense<0.000000e+00> : vector<8x96xf32>
    %195 = tpu.matmul %192, %194, %cst_88 {dimension_numbers = #tpu.dot_dimension_numbers<[1], [0], [0], [1], [0, 0, 1, 1], [], []>} : vector<8x32xf32>, vector<32x96xf32>, vector<8x96xf32> -> vector<8x96xf32>
    %c1_89 = arith.constant 1 : index
    %c0_90 = arith.constant 0 : index
    %c0_91 = arith.constant 0 : index
    %196 = vector.load %arg6[%c1_89, %c0_90, %c0_91] : memref<2x1x96xf32, #tpu.memory_space<vmem>>, vector<1x1x96xf32>
    %197 = vector.shape_cast %196 : vector<1x1x96xf32> to vector<1x96xf32>
    %198 = vector.broadcast %197 : vector<1x96xf32> to vector<8x96xf32>
    %199 = arith.addf %195, %198 : vector<8x96xf32>
    %200 = vector.extract_strided_slice %199 {offsets = [0, 0], sizes = [8, 8], strides = [1, 1]} : vector<8x96xf32> to vector<8x8xf32>
    %201 = vector.extract_strided_slice %199 {offsets = [0, 32], sizes = [8, 8], strides = [1, 1]} : vector<8x96xf32> to vector<8x8xf32>
    %202 = vector.extract_strided_slice %199 {offsets = [0, 64], sizes = [8, 8], strides = [1, 1]} : vector<8x96xf32> to vector<8x8xf32>
    %cst_92 = arith.constant dense<0.000000e+00> : vector<8x8xf32>
    %203 = tpu.matmul %200, %201, %cst_92 {dimension_numbers = #tpu.dot_dimension_numbers<[1], [1], [0], [0], [0, 0, 1, 0], [], []>} : vector<8x8xf32>, vector<8x8xf32>, vector<8x8xf32> -> vector<8x8xf32>
    %cst_93 = arith.constant 0.353553385 : f32
    %204 = vector.broadcast %cst_93 : f32 to vector<8x8xf32>
    %205 = arith.mulf %203, %204 : vector<8x8xf32>
    %206 = vector.broadcast %2 : vector<1x8xf32> to vector<8x8xf32>
    %207 = arith.addf %205, %206 : vector<8x8xf32>
    %cst_94 = arith.constant dense<0xFF800000> : vector<8xf32>
    %208 = vector.multi_reduction <maximumf>, %207, %cst_94 [1] : vector<8x8xf32> to vector<8xf32>
    %209 = vector.shape_cast %208 : vector<8xf32> to vector<8x1xf32>
    %210 = vector.broadcast %209 : vector<8x1xf32> to vector<8x8xf32>
    %211 = arith.subf %207, %210 : vector<8x8xf32>
    %212 = math.exp %211 : vector<8x8xf32>
    %cst_95 = arith.constant dense<0.000000e+00> : vector<8xf32>
    %213 = vector.multi_reduction <add>, %212, %cst_95 [1] : vector<8x8xf32> to vector<8xf32>
    %214 = vector.shape_cast %213 : vector<8xf32> to vector<8x1xf32>
    %215 = tpu.reciprocal %214 {approx = true} : vector<8x1xf32> -> vector<8x1xf32>
    %216 = vector.broadcast %215 : vector<8x1xf32> to vector<8x8xf32>
    %217 = arith.mulf %212, %216 : vector<8x8xf32>
    %cst_96 = arith.constant dense<0.000000e+00> : vector<8x8xf32>
    %218 = tpu.matmul %217, %202, %cst_96 {dimension_numbers = #tpu.dot_dimension_numbers<[1], [0], [0], [1], [0, 0, 1, 1], [], []>} : vector<8x8xf32>, vector<8x8xf32>, vector<8x8xf32> -> vector<8x8xf32>
    %219 = vector.extract_strided_slice %199 {offsets = [0, 8], sizes = [8, 8], strides = [1, 1]} : vector<8x96xf32> to vector<8x8xf32>
    %220 = vector.extract_strided_slice %199 {offsets = [0, 40], sizes = [8, 8], strides = [1, 1]} : vector<8x96xf32> to vector<8x8xf32>
    %221 = vector.extract_strided_slice %199 {offsets = [0, 72], sizes = [8, 8], strides = [1, 1]} : vector<8x96xf32> to vector<8x8xf32>
    %cst_97 = arith.constant dense<0.000000e+00> : vector<8x8xf32>
    %222 = tpu.matmul %219, %220, %cst_97 {dimension_numbers = #tpu.dot_dimension_numbers<[1], [1], [0], [0], [0, 0, 1, 0], [], []>} : vector<8x8xf32>, vector<8x8xf32>, vector<8x8xf32> -> vector<8x8xf32>
    %cst_98 = arith.constant 0.353553385 : f32
    %223 = vector.broadcast %cst_98 : f32 to vector<8x8xf32>
    %224 = arith.mulf %222, %223 : vector<8x8xf32>
    %225 = vector.broadcast %2 : vector<1x8xf32> to vector<8x8xf32>
    %226 = arith.addf %224, %225 : vector<8x8xf32>
    %cst_99 = arith.constant dense<0xFF800000> : vector<8xf32>
    %227 = vector.multi_reduction <maximumf>, %226, %cst_99 [1] : vector<8x8xf32> to vector<8xf32>
    %228 = vector.shape_cast %227 : vector<8xf32> to vector<8x1xf32>
    %229 = vector.broadcast %228 : vector<8x1xf32> to vector<8x8xf32>
    %230 = arith.subf %226, %229 : vector<8x8xf32>
    %231 = math.exp %230 : vector<8x8xf32>
    %cst_100 = arith.constant dense<0.000000e+00> : vector<8xf32>
    %232 = vector.multi_reduction <add>, %231, %cst_100 [1] : vector<8x8xf32> to vector<8xf32>
    %233 = vector.shape_cast %232 : vector<8xf32> to vector<8x1xf32>
    %234 = tpu.reciprocal %233 {approx = true} : vector<8x1xf32> -> vector<8x1xf32>
    %235 = vector.broadcast %234 : vector<8x1xf32> to vector<8x8xf32>
    %236 = arith.mulf %231, %235 : vector<8x8xf32>
    %cst_101 = arith.constant dense<0.000000e+00> : vector<8x8xf32>
    %237 = tpu.matmul %236, %221, %cst_101 {dimension_numbers = #tpu.dot_dimension_numbers<[1], [0], [0], [1], [0, 0, 1, 1], [], []>} : vector<8x8xf32>, vector<8x8xf32>, vector<8x8xf32> -> vector<8x8xf32>
    %238 = vector.extract_strided_slice %199 {offsets = [0, 16], sizes = [8, 8], strides = [1, 1]} : vector<8x96xf32> to vector<8x8xf32>
    %239 = vector.extract_strided_slice %199 {offsets = [0, 48], sizes = [8, 8], strides = [1, 1]} : vector<8x96xf32> to vector<8x8xf32>
    %240 = vector.extract_strided_slice %199 {offsets = [0, 80], sizes = [8, 8], strides = [1, 1]} : vector<8x96xf32> to vector<8x8xf32>
    %cst_102 = arith.constant dense<0.000000e+00> : vector<8x8xf32>
    %241 = tpu.matmul %238, %239, %cst_102 {dimension_numbers = #tpu.dot_dimension_numbers<[1], [1], [0], [0], [0, 0, 1, 0], [], []>} : vector<8x8xf32>, vector<8x8xf32>, vector<8x8xf32> -> vector<8x8xf32>
    %cst_103 = arith.constant 0.353553385 : f32
    %242 = vector.broadcast %cst_103 : f32 to vector<8x8xf32>
    %243 = arith.mulf %241, %242 : vector<8x8xf32>
    %244 = vector.broadcast %2 : vector<1x8xf32> to vector<8x8xf32>
    %245 = arith.addf %243, %244 : vector<8x8xf32>
    %cst_104 = arith.constant dense<0xFF800000> : vector<8xf32>
    %246 = vector.multi_reduction <maximumf>, %245, %cst_104 [1] : vector<8x8xf32> to vector<8xf32>
    %247 = vector.shape_cast %246 : vector<8xf32> to vector<8x1xf32>
    %248 = vector.broadcast %247 : vector<8x1xf32> to vector<8x8xf32>
    %249 = arith.subf %245, %248 : vector<8x8xf32>
    %250 = math.exp %249 : vector<8x8xf32>
    %cst_105 = arith.constant dense<0.000000e+00> : vector<8xf32>
    %251 = vector.multi_reduction <add>, %250, %cst_105 [1] : vector<8x8xf32> to vector<8xf32>
    %252 = vector.shape_cast %251 : vector<8xf32> to vector<8x1xf32>
    %253 = tpu.reciprocal %252 {approx = true} : vector<8x1xf32> -> vector<8x1xf32>
    %254 = vector.broadcast %253 : vector<8x1xf32> to vector<8x8xf32>
    %255 = arith.mulf %250, %254 : vector<8x8xf32>
    %cst_106 = arith.constant dense<0.000000e+00> : vector<8x8xf32>
    %256 = tpu.matmul %255, %240, %cst_106 {dimension_numbers = #tpu.dot_dimension_numbers<[1], [0], [0], [1], [0, 0, 1, 1], [], []>} : vector<8x8xf32>, vector<8x8xf32>, vector<8x8xf32> -> vector<8x8xf32>
    %257 = vector.extract_strided_slice %199 {offsets = [0, 24], sizes = [8, 8], strides = [1, 1]} : vector<8x96xf32> to vector<8x8xf32>
    %258 = vector.extract_strided_slice %199 {offsets = [0, 56], sizes = [8, 8], strides = [1, 1]} : vector<8x96xf32> to vector<8x8xf32>
    %259 = vector.extract_strided_slice %199 {offsets = [0, 88], sizes = [8, 8], strides = [1, 1]} : vector<8x96xf32> to vector<8x8xf32>
    %cst_107 = arith.constant dense<0.000000e+00> : vector<8x8xf32>
    %260 = tpu.matmul %257, %258, %cst_107 {dimension_numbers = #tpu.dot_dimension_numbers<[1], [1], [0], [0], [0, 0, 1, 0], [], []>} : vector<8x8xf32>, vector<8x8xf32>, vector<8x8xf32> -> vector<8x8xf32>
    %cst_108 = arith.constant 0.353553385 : f32
    %261 = vector.broadcast %cst_108 : f32 to vector<8x8xf32>
    %262 = arith.mulf %260, %261 : vector<8x8xf32>
    %263 = vector.broadcast %2 : vector<1x8xf32> to vector<8x8xf32>
    %264 = arith.addf %262, %263 : vector<8x8xf32>
    %cst_109 = arith.constant dense<0xFF800000> : vector<8xf32>
    %265 = vector.multi_reduction <maximumf>, %264, %cst_109 [1] : vector<8x8xf32> to vector<8xf32>
    %266 = vector.shape_cast %265 : vector<8xf32> to vector<8x1xf32>
    %267 = vector.broadcast %266 : vector<8x1xf32> to vector<8x8xf32>
    %268 = arith.subf %264, %267 : vector<8x8xf32>
    %269 = math.exp %268 : vector<8x8xf32>
    %cst_110 = arith.constant dense<0.000000e+00> : vector<8xf32>
    %270 = vector.multi_reduction <add>, %269, %cst_110 [1] : vector<8x8xf32> to vector<8xf32>
    %271 = vector.shape_cast %270 : vector<8xf32> to vector<8x1xf32>
    %272 = tpu.reciprocal %271 {approx = true} : vector<8x1xf32> -> vector<8x1xf32>
    %273 = vector.broadcast %272 : vector<8x1xf32> to vector<8x8xf32>
    %274 = arith.mulf %269, %273 : vector<8x8xf32>
    %cst_111 = arith.constant dense<0.000000e+00> : vector<8x8xf32>
    %275 = tpu.matmul %274, %259, %cst_111 {dimension_numbers = #tpu.dot_dimension_numbers<[1], [0], [0], [1], [0, 0, 1, 1], [], []>} : vector<8x8xf32>, vector<8x8xf32>, vector<8x8xf32> -> vector<8x8xf32>
    %276 = tpu.concatenate %218, %237, %256, %275 in 1 : vector<8x8xf32>, vector<8x8xf32>, vector<8x8xf32>, vector<8x8xf32> -> vector<8x32xf32>
    %c1_112 = arith.constant 1 : index
    %c0_113 = arith.constant 0 : index
    %c0_114 = arith.constant 0 : index
    %277 = vector.load %arg7[%c1_112, %c0_113, %c0_114] : memref<2x32x32xf32, #tpu.memory_space<vmem>>, vector<1x32x32xf32>
    %278 = vector.shape_cast %277 : vector<1x32x32xf32> to vector<32x32xf32>
    %cst_115 = arith.constant dense<0.000000e+00> : vector<8x32xf32>
    %279 = tpu.matmul %276, %278, %cst_115 {dimension_numbers = #tpu.dot_dimension_numbers<[1], [0], [0], [1], [0, 0, 1, 1], [], []>} : vector<8x32xf32>, vector<32x32xf32>, vector<8x32xf32> -> vector<8x32xf32>
    %c1_116 = arith.constant 1 : index
    %c0_117 = arith.constant 0 : index
    %c0_118 = arith.constant 0 : index
    %280 = vector.load %arg8[%c1_116, %c0_117, %c0_118] : memref<2x1x32xf32, #tpu.memory_space<vmem>>, vector<1x1x32xf32>
    %281 = vector.shape_cast %280 : vector<1x1x32xf32> to vector<1x32xf32>
    %282 = vector.broadcast %281 : vector<1x32xf32> to vector<8x32xf32>
    %283 = arith.addf %279, %282 : vector<8x32xf32>
    %284 = arith.addf %283, %192 : vector<8x32xf32>
    %c1_119 = arith.constant 1 : index
    %c0_120 = arith.constant 0 : index
    %c0_121 = arith.constant 0 : index
    %285 = vector.load %arg9[%c1_119, %c0_120, %c0_121] : memref<2x1x32xf32, #tpu.memory_space<vmem>>, vector<1x1x32xf32>
    %286 = vector.shape_cast %285 : vector<1x1x32xf32> to vector<1x32xf32>
    %c1_122 = arith.constant 1 : index
    %c0_123 = arith.constant 0 : index
    %c0_124 = arith.constant 0 : index
    %287 = vector.load %arg10[%c1_122, %c0_123, %c0_124] : memref<2x1x32xf32, #tpu.memory_space<vmem>>, vector<1x1x32xf32>
    %288 = vector.shape_cast %287 : vector<1x1x32xf32> to vector<1x32xf32>
    %cst_125 = arith.constant dense<0.000000e+00> : vector<8xf32>
    %289 = vector.multi_reduction <add>, %284, %cst_125 [1] : vector<8x32xf32> to vector<8xf32>
    %290 = vector.shape_cast %289 : vector<8xf32> to vector<8x1xf32>
    %cst_126 = arith.constant 3.200000e+01 : f32
    %291 = vector.broadcast %cst_126 : f32 to vector<8x1xf32>
    %292 = arith.divf %290, %291 : vector<8x1xf32>
    %293 = vector.broadcast %292 : vector<8x1xf32> to vector<8x32xf32>
    %294 = arith.subf %284, %293 : vector<8x32xf32>
    %295 = arith.mulf %294, %294 : vector<8x32xf32>
    %cst_127 = arith.constant dense<0.000000e+00> : vector<8xf32>
    %296 = vector.multi_reduction <add>, %295, %cst_127 [1] : vector<8x32xf32> to vector<8xf32>
    %297 = vector.shape_cast %296 : vector<8xf32> to vector<8x1xf32>
    %cst_128 = arith.constant 3.200000e+01 : f32
    %298 = vector.broadcast %cst_128 : f32 to vector<8x1xf32>
    %299 = arith.divf %297, %298 : vector<8x1xf32>
    %cst_129 = arith.constant 9.99999996E-13 : f32
    %300 = vector.broadcast %cst_129 : f32 to vector<8x1xf32>
    %301 = arith.addf %299, %300 : vector<8x1xf32>
    %302 = math.rsqrt %301 : vector<8x1xf32>
    %303 = vector.broadcast %302 : vector<8x1xf32> to vector<8x32xf32>
    %304 = arith.mulf %294, %303 : vector<8x32xf32>
    %305 = vector.broadcast %286 : vector<1x32xf32> to vector<8x32xf32>
    %306 = arith.mulf %304, %305 : vector<8x32xf32>
    %307 = vector.broadcast %288 : vector<1x32xf32> to vector<8x32xf32>
    %308 = arith.addf %306, %307 : vector<8x32xf32>
    %c1_130 = arith.constant 1 : index
    %c0_131 = arith.constant 0 : index
    %c0_132 = arith.constant 0 : index
    %309 = vector.load %arg11[%c1_130, %c0_131, %c0_132] : memref<2x32x64xf32, #tpu.memory_space<vmem>>, vector<1x32x64xf32>
    %310 = vector.shape_cast %309 : vector<1x32x64xf32> to vector<32x64xf32>
    %cst_133 = arith.constant dense<0.000000e+00> : vector<8x64xf32>
    %311 = tpu.matmul %308, %310, %cst_133 {dimension_numbers = #tpu.dot_dimension_numbers<[1], [0], [0], [1], [0, 0, 1, 1], [], []>} : vector<8x32xf32>, vector<32x64xf32>, vector<8x64xf32> -> vector<8x64xf32>
    %c1_134 = arith.constant 1 : index
    %c0_135 = arith.constant 0 : index
    %c0_136 = arith.constant 0 : index
    %312 = vector.load %arg12[%c1_134, %c0_135, %c0_136] : memref<2x1x64xf32, #tpu.memory_space<vmem>>, vector<1x1x64xf32>
    %313 = vector.shape_cast %312 : vector<1x1x64xf32> to vector<1x64xf32>
    %314 = vector.broadcast %313 : vector<1x64xf32> to vector<8x64xf32>
    %315 = arith.addf %311, %314 : vector<8x64xf32>
    %cst_137 = arith.constant 5.000000e-01 : f32
    %316 = vector.broadcast %cst_137 : f32 to vector<8x64xf32>
    %317 = arith.mulf %316, %315 : vector<8x64xf32>
    %cst_138 = arith.constant 4.471500e-02 : f32
    %318 = vector.broadcast %cst_138 : f32 to vector<8x64xf32>
    %319 = arith.mulf %318, %315 : vector<8x64xf32>
    %320 = arith.mulf %319, %315 : vector<8x64xf32>
    %321 = arith.mulf %320, %315 : vector<8x64xf32>
    %322 = arith.addf %315, %321 : vector<8x64xf32>
    %cst_139 = arith.constant 0.797884583 : f32
    %323 = vector.broadcast %cst_139 : f32 to vector<8x64xf32>
    %324 = arith.mulf %323, %322 : vector<8x64xf32>
    %325 = math.tanh %324 : vector<8x64xf32>
    %cst_140 = arith.constant 1.000000e+00 : f32
    %326 = vector.broadcast %cst_140 : f32 to vector<8x64xf32>
    %327 = arith.addf %326, %325 : vector<8x64xf32>
    %328 = arith.mulf %317, %327 : vector<8x64xf32>
    %c1_141 = arith.constant 1 : index
    %c0_142 = arith.constant 0 : index
    %c0_143 = arith.constant 0 : index
    %329 = vector.load %arg13[%c1_141, %c0_142, %c0_143] : memref<2x64x32xf32, #tpu.memory_space<vmem>>, vector<1x64x32xf32>
    %330 = vector.shape_cast %329 : vector<1x64x32xf32> to vector<64x32xf32>
    %cst_144 = arith.constant dense<0.000000e+00> : vector<8x32xf32>
    %331 = tpu.matmul %328, %330, %cst_144 {dimension_numbers = #tpu.dot_dimension_numbers<[1], [0], [0], [1], [0, 0, 1, 1], [], []>} : vector<8x64xf32>, vector<64x32xf32>, vector<8x32xf32> -> vector<8x32xf32>
    %c1_145 = arith.constant 1 : index
    %c0_146 = arith.constant 0 : index
    %c0_147 = arith.constant 0 : index
    %332 = vector.load %arg14[%c1_145, %c0_146, %c0_147] : memref<2x1x32xf32, #tpu.memory_space<vmem>>, vector<1x1x32xf32>
    %333 = vector.shape_cast %332 : vector<1x1x32xf32> to vector<1x32xf32>
    %334 = vector.broadcast %333 : vector<1x32xf32> to vector<8x32xf32>
    %335 = arith.addf %331, %334 : vector<8x32xf32>
    %336 = arith.addf %335, %308 : vector<8x32xf32>
    %c1_148 = arith.constant 1 : index
    %c0_149 = arith.constant 0 : index
    %c0_150 = arith.constant 0 : index
    %337 = vector.load %arg15[%c1_148, %c0_149, %c0_150] : memref<2x1x32xf32, #tpu.memory_space<vmem>>, vector<1x1x32xf32>
    %338 = vector.shape_cast %337 : vector<1x1x32xf32> to vector<1x32xf32>
    %c1_151 = arith.constant 1 : index
    %c0_152 = arith.constant 0 : index
    %c0_153 = arith.constant 0 : index
    %339 = vector.load %arg16[%c1_151, %c0_152, %c0_153] : memref<2x1x32xf32, #tpu.memory_space<vmem>>, vector<1x1x32xf32>
    %340 = vector.shape_cast %339 : vector<1x1x32xf32> to vector<1x32xf32>
    %cst_154 = arith.constant dense<0.000000e+00> : vector<8xf32>
    %341 = vector.multi_reduction <add>, %336, %cst_154 [1] : vector<8x32xf32> to vector<8xf32>
    %342 = vector.shape_cast %341 : vector<8xf32> to vector<8x1xf32>
    %cst_155 = arith.constant 3.200000e+01 : f32
    %343 = vector.broadcast %cst_155 : f32 to vector<8x1xf32>
    %344 = arith.divf %342, %343 : vector<8x1xf32>
    %345 = vector.broadcast %344 : vector<8x1xf32> to vector<8x32xf32>
    %346 = arith.subf %336, %345 : vector<8x32xf32>
    %347 = arith.mulf %346, %346 : vector<8x32xf32>
    %cst_156 = arith.constant dense<0.000000e+00> : vector<8xf32>
    %348 = vector.multi_reduction <add>, %347, %cst_156 [1] : vector<8x32xf32> to vector<8xf32>
    %349 = vector.shape_cast %348 : vector<8xf32> to vector<8x1xf32>
    %cst_157 = arith.constant 3.200000e+01 : f32
    %350 = vector.broadcast %cst_157 : f32 to vector<8x1xf32>
    %351 = arith.divf %349, %350 : vector<8x1xf32>
    %cst_158 = arith.constant 9.99999996E-13 : f32
    %352 = vector.broadcast %cst_158 : f32 to vector<8x1xf32>
    %353 = arith.addf %351, %352 : vector<8x1xf32>
    %354 = math.rsqrt %353 : vector<8x1xf32>
    %355 = vector.broadcast %354 : vector<8x1xf32> to vector<8x32xf32>
    %356 = arith.mulf %346, %355 : vector<8x32xf32>
    %357 = vector.broadcast %338 : vector<1x32xf32> to vector<8x32xf32>
    %358 = arith.mulf %356, %357 : vector<8x32xf32>
    %359 = vector.broadcast %340 : vector<1x32xf32> to vector<8x32xf32>
    %360 = arith.addf %358, %359 : vector<8x32xf32>
    %cst_159 = arith.constant dense<0.000000e+00> : vector<32xf32>
    %361 = vector.multi_reduction <add>, %360, %cst_159 [0] : vector<8x32xf32> to vector<32xf32>
    %362 = vector.shape_cast %361 : vector<32xf32> to vector<1x32xf32>
    %cst_160 = arith.constant 8.000000e+00 : f32
    %363 = vector.broadcast %cst_160 : f32 to vector<1x32xf32>
    %364 = arith.divf %362, %363 : vector<1x32xf32>
    %c0_161 = arith.constant 0 : index
    %c0_162 = arith.constant 0 : index
    %365 = vector.load %arg17[%c0_161, %c0_162] : memref<32x128xf32, #tpu.memory_space<vmem>>, vector<32x128xf32>
    %cst_163 = arith.constant dense<0.000000e+00> : vector<1x128xf32>
    %366 = tpu.matmul %364, %365, %cst_163 {dimension_numbers = #tpu.dot_dimension_numbers<[1], [0], [0], [1], [0, 0, 1, 1], [], []>} : vector<1x32xf32>, vector<32x128xf32>, vector<1x128xf32> -> vector<1x128xf32>
    %c0_164 = arith.constant 0 : index
    %c0_165 = arith.constant 0 : index
    %367 = vector.load %arg18[%c0_164, %c0_165] : memref<1x128xf32, #tpu.memory_space<vmem>>, vector<1x128xf32>
    %368 = arith.addf %366, %367 : vector<1x128xf32>
    %cst_166 = arith.constant 0.000000e+00 : f32
    %369 = vector.broadcast %cst_166 : f32 to vector<1x128xf32>
    %370 = arith.maximumf %368, %369 : vector<1x128xf32>
    %c0_167 = arith.constant 0 : index
    %c0_168 = arith.constant 0 : index
    %371 = vector.load %arg19[%c0_167, %c0_168] : memref<128x24xf32, #tpu.memory_space<vmem>>, vector<128x24xf32>
    %cst_169 = arith.constant dense<0.000000e+00> : vector<1x24xf32>
    %372 = tpu.matmul %370, %371, %cst_169 {dimension_numbers = #tpu.dot_dimension_numbers<[1], [0], [0], [1], [0, 0, 1, 1], [], []>} : vector<1x128xf32>, vector<128x24xf32>, vector<1x24xf32> -> vector<1x24xf32>
    %c0_170 = arith.constant 0 : index
    %c0_171 = arith.constant 0 : index
    %373 = vector.load %arg20[%c0_170, %c0_171] : memref<1x24xf32, #tpu.memory_space<vmem>>, vector<1x24xf32>
    %374 = arith.addf %372, %373 : vector<1x24xf32>
    %c0_172 = arith.constant 0 : index
    %c0_173 = arith.constant 0 : index
    %c0_174 = arith.constant 0 : index
    %375 = vector.load %arg21[%c0_172, %c0_173, %c0_174] : memref<1x1x24xf32, #tpu.memory_space<vmem>>, vector<1x1x24xf32>
    %376 = vector.shape_cast %375 : vector<1x1x24xf32> to vector<1x24xf32>
    %377 = vector.shape_cast %374 : vector<1x24xf32> to vector<1x1x24xf32>
    tpu.vector_store %arg21[%c0_172, %c0_173, %c0_174], %377 {strides = array<i32>} : memref<1x1x24xf32, #tpu.memory_space<vmem>>, vector<1x1x24xf32>,
    return
  }
  func.func @transform_0(%arg0: i32) -> (i32, i32) {
    %c0_i32 = arith.constant 0 : i32
    %c0_i32_0 = arith.constant 0 : i32
    return %arg0, %c0_i32 : i32, i32
  }
  func.func @transform_1(%arg0: i32) -> (i32, i32, i32) {
    %c0_i32 = arith.constant 0 : i32
    %c0_i32_0 = arith.constant 0 : i32
    %c0_i32_1 = arith.constant 0 : i32
    return %arg0, %c0_i32, %c0_i32_0 : i32, i32, i32
  }
  func.func @transform_2(%arg0: i32) -> (i32, i32) {
    %c0_i32 = arith.constant 0 : i32
    %c0_i32_0 = arith.constant 0 : i32
    %c0_i32_1 = arith.constant 0 : i32
    return %c0_i32, %c0_i32_0 : i32, i32
  }
  func.func @transform_3(%arg0: i32) -> (i32, i32) {
    %c0_i32 = arith.constant 0 : i32
    %c0_i32_0 = arith.constant 0 : i32
    %c0_i32_1 = arith.constant 0 : i32
    return %c0_i32, %c0_i32_0 : i32, i32
  }
  func.func @transform_4(%arg0: i32) -> (i32, i32, i32) {
    %c0_i32 = arith.constant 0 : i32
    %c0_i32_0 = arith.constant 0 : i32
    %c0_i32_1 = arith.constant 0 : i32
    %c0_i32_2 = arith.constant 0 : i32
    return %c0_i32, %c0_i32_0, %c0_i32_1 : i32, i32, i32
  }
  func.func @transform_5(%arg0: i32) -> (i32, i32, i32) {
    %c0_i32 = arith.constant 0 : i32
    %c0_i32_0 = arith.constant 0 : i32
    %c0_i32_1 = arith.constant 0 : i32
    %c0_i32_2 = arith.constant 0 : i32
    return %c0_i32, %c0_i32_0, %c0_i32_1 : i32, i32, i32
  }
  func.func @transform_6(%arg0: i32) -> (i32, i32, i32) {
    %c0_i32 = arith.constant 0 : i32
    %c0_i32_0 = arith.constant 0 : i32
    %c0_i32_1 = arith.constant 0 : i32
    %c0_i32_2 = arith.constant 0 : i32
    return %c0_i32, %c0_i32_0, %c0_i32_1 : i32, i32, i32
  }
  func.func @transform_7(%arg0: i32) -> (i32, i32, i32) {
    %c0_i32 = arith.constant 0 : i32
    %c0_i32_0 = arith.constant 0 : i32
    %c0_i32_1 = arith.constant 0 : i32
    %c0_i32_2 = arith.constant 0 : i32
    return %c0_i32, %c0_i32_0, %c0_i32_1 : i32, i32, i32
  }
  func.func @transform_8(%arg0: i32) -> (i32, i32, i32) {
    %c0_i32 = arith.constant 0 : i32
    %c0_i32_0 = arith.constant 0 : i32
    %c0_i32_1 = arith.constant 0 : i32
    %c0_i32_2 = arith.constant 0 : i32
    return %c0_i32, %c0_i32_0, %c0_i32_1 : i32, i32, i32
  }
  func.func @transform_9(%arg0: i32) -> (i32, i32, i32) {
    %c0_i32 = arith.constant 0 : i32
    %c0_i32_0 = arith.constant 0 : i32
    %c0_i32_1 = arith.constant 0 : i32
    %c0_i32_2 = arith.constant 0 : i32
    return %c0_i32, %c0_i32_0, %c0_i32_1 : i32, i32, i32
  }
  func.func @transform_10(%arg0: i32) -> (i32, i32, i32) {
    %c0_i32 = arith.constant 0 : i32
    %c0_i32_0 = arith.constant 0 : i32
    %c0_i32_1 = arith.constant 0 : i32
    %c0_i32_2 = arith.constant 0 : i32
    return %c0_i32, %c0_i32_0, %c0_i32_1 : i32, i32, i32
  }
  func.func @transform_11(%arg0: i32) -> (i32, i32, i32) {
    %c0_i32 = arith.constant 0 : i32
    %c0_i32_0 = arith.constant 0 : i32
    %c0_i32_1 = arith.constant 0 : i32
    %c0_i32_2 = arith.constant 0 : i32
    return %c0_i32, %c0_i32_0, %c0_i32_1 : i32, i32, i32
  }
  func.func @transform_12(%arg0: i32) -> (i32, i32, i32) {
    %c0_i32 = arith.constant 0 : i32
    %c0_i32_0 = arith.constant 0 : i32
    %c0_i32_1 = arith.constant 0 : i32
    %c0_i32_2 = arith.constant 0 : i32
    return %c0_i32, %c0_i32_0, %c0_i32_1 : i32, i32, i32
  }
  func.func @transform_13(%arg0: i32) -> (i32, i32, i32) {
    %c0_i32 = arith.constant 0 : i32
    %c0_i32_0 = arith.constant 0 : i32
    %c0_i32_1 = arith.constant 0 : i32
    %c0_i32_2 = arith.constant 0 : i32
    return %c0_i32, %c0_i32_0, %c0_i32_1 : i32, i32, i32
  }
  func.func @transform_14(%arg0: i32) -> (i32, i32, i32) {
    %c0_i32 = arith.constant 0 : i32
    %c0_i32_0 = arith.constant 0 : i32
    %c0_i32_1 = arith.constant 0 : i32
    %c0_i32_2 = arith.constant 0 : i32
    return %c0_i32, %c0_i32_0, %c0_i32_1 : i32, i32, i32
  }
  func.func @transform_15(%arg0: i32) -> (i32, i32, i32) {
    %c0_i32 = arith.constant 0 : i32
    %c0_i32_0 = arith.constant 0 : i32
    %c0_i32_1 = arith.constant 0 : i32
    %c0_i32_2 = arith.constant 0 : i32
    return %c0_i32, %c0_i32_0, %c0_i32_1 : i32, i32, i32
  }
  func.func @transform_16(%arg0: i32) -> (i32, i32) {
    %c0_i32 = arith.constant 0 : i32
    %c0_i32_0 = arith.constant 0 : i32
    %c0_i32_1 = arith.constant 0 : i32
    return %c0_i32, %c0_i32_0 : i32, i32
  }
  func.func @transform_17(%arg0: i32) -> (i32, i32) {
    %c0_i32 = arith.constant 0 : i32
    %c0_i32_0 = arith.constant 0 : i32
    %c0_i32_1 = arith.constant 0 : i32
    return %c0_i32, %c0_i32_0 : i32, i32
  }
  func.func @transform_18(%arg0: i32) -> (i32, i32) {
    %c0_i32 = arith.constant 0 : i32
    %c0_i32_0 = arith.constant 0 : i32
    %c0_i32_1 = arith.constant 0 : i32
    return %c0_i32, %c0_i32_0 : i32, i32
  }
  func.func @transform_19(%arg0: i32) -> (i32, i32) {
    %c0_i32 = arith.constant 0 : i32
    %c0_i32_0 = arith.constant 0 : i32
    %c0_i32_1 = arith.constant 0 : i32
    return %c0_i32, %c0_i32_0 : i32, i32
  }
  func.func @transform_20(%arg0: i32) -> (i32, i32, i32) {
    %c0_i32 = arith.constant 0 : i32
    %c0_i32_0 = arith.constant 0 : i32
    %c0_i32_1 = arith.constant 0 : i32
    return %arg0, %c0_i32, %c0_i32_0 : i32, i32, i32
  }
}

</mosaic_0001>

<llo_original>
// kernel: bert_classifier_forward.1
$region0: #{bert_classifier_forward.1}
  #allocation0 [shape = 'u32[]', space=smem, size = 0x4, offset = 0x4, fixed_abs, tag = 'smem constant byte address 0x4 - core index']
  #allocation1 [shape = 'u32[144,128]{1,0:T(1,128)}', space=vmem, size = 0x12000, scoped, tag = 'internal scratch']
  %s0 = inlined_call_operand.vmem [shape: f32[16,32], index: 0, kind: input, shape index: {}]
  %s1 = inlined_call_operand.vmem [shape: f32[2,1,8], index: 1, kind: input, shape index: {}]
  %s2 = inlined_call_operand.vmem [shape: f32[1,32], index: 2, kind: input, shape index: {}]
  %s3 = inlined_call_operand.vmem [shape: f32[1,32], index: 3, kind: input, shape index: {}]
  %s4 = inlined_call_operand.vmem [shape: f32[2,32,96], index: 4, kind: input, shape index: {}]
  %s5 = inlined_call_operand.vmem [shape: f32[2,1,96], index: 5, kind: input, shape index: {}]
  %s6 = inlined_call_operand.vmem [shape: f32[2,32,32], index: 6, kind: input, shape index: {}]
  %s7 = inlined_call_operand.vmem [shape: f32[2,1,32], index: 7, kind: input, shape index: {}]
  %s8 = inlined_call_operand.vmem [shape: f32[2,1,32], index: 8, kind: input, shape index: {}]
  %s9 = inlined_call_operand.vmem [shape: f32[2,1,32], index: 9, kind: input, shape index: {}]
  %s10 = inlined_call_operand.vmem [shape: f32[2,32,64], index: 10, kind: input, shape index: {}]
  %s11 = inlined_call_operand.vmem [shape: f32[2,1,64], index: 11, kind: input, shape index: {}]
  %s12 = inlined_call_operand.vmem [shape: f32[2,64,32], index: 12, kind: input, shape index: {}]
  %s13 = inlined_call_operand.vmem [shape: f32[2,1,32], index: 13, kind: input, shape index: {}]
  %s14 = inlined_call_operand.vmem [shape: f32[2,1,32], index: 14, kind: input, shape index: {}]
  %s15 = inlined_call_operand.vmem [shape: f32[2,1,32], index: 15, kind: input, shape index: {}]
  %s16 = inlined_call_operand.vmem [shape: f32[32,128], index: 16, kind: input, shape index: {}]
  %s17 = inlined_call_operand.vmem [shape: f32[1,128], index: 17, kind: input, shape index: {}]
  %s18 = inlined_call_operand.vmem [shape: f32[128,24], index: 18, kind: input, shape index: {}]
  %s19 = inlined_call_operand.vmem [shape: f32[1,24], index: 19, kind: input, shape index: {}]
  %s20 = inlined_call_operand.hbm [shape: f32[2,1,24], index: 20, kind: output, shape index: {}]
  %s21 = sld [smem:[#allocation0]]
  $region113: #{bert_classifier_forward.1} parent=0
    _
  %s23 = ssub.s32 1, %s21
  %s24 = scalar_select 0, %s23, %s21
  $region1: #{bert_classifier_forward.1} parent=0
    #allocation2 [shape = 'u8[1024]{0}', space=vmem, size = 0x400, scoped, tag = 'output window, operand 0']
    #allocation3 [shape = 's32[2]{0}', space=sflag, size = 0x8, scoped, tag = 'scoped memory for bert_classifier_forward.1']
    %25 = vsyncpa [#allocation3], 0
    %s26 = scalar_lea.sflag [#allocation3], 1
    %27 = vsyncpa %s26, 0
    loop: start=0, step=1, limit=4
    $region2: #{bert_classifier_forward.1} parent=1 // loop_pre_header
      _
    $region3: #{bert_classifier_forward.1} parent=1 // loop_header
      %s29 = sphi 0, %s33
      %p30 = scmp.ge.s32.totalorder %s29, 4
      %s39 = sphi 0, %s41
      %s42 = sphi 0, %s39
      %s43 = sphi 0, %s42
      %s59 = sphi 0, %s43
      %s65 = sphi 0, %s67
      %s68 = sphi 0, %s65
      %s69 = sphi 0, %s68
      %s85 = sphi 0, %s69
      %s89 = sphi 0, %s89
      %s91 = sphi 0, %s89
      %s92 = sphi 0, %s91
      %s106 = sphi 0, %s92
      %s110 = sphi 0, %s110
      %s112 = sphi 0, %s110
      %s113 = sphi 0, %s112
      %s127 = sphi 0, %s113
      %s131 = sphi 0, %s131
      %s133 = sphi 0, %s131
      %s134 = sphi 0, %s133
      %s148 = sphi 0, %s134
      %s152 = sphi 0, %s152
      %s154 = sphi 0, %s152
      %s155 = sphi 0, %s154
      %s169 = sphi 0, %s155
      %s173 = sphi 0, %s173
      %s175 = sphi 0, %s173
      %s176 = sphi 0, %s175
      %s190 = sphi 0, %s176
      %s194 = sphi 0, %s194
      %s196 = sphi 0, %s194
      %s197 = sphi 0, %s196
      %s211 = sphi 0, %s197
      %s215 = sphi 0, %s215
      %s217 = sphi 0, %s215
      %s218 = sphi 0, %s217
      %s232 = sphi 0, %s218
      %s236 = sphi 0, %s236
      %s238 = sphi 0, %s236
      %s239 = sphi 0, %s238
      %s253 = sphi 0, %s239
      %s257 = sphi 0, %s257
      %s259 = sphi 0, %s257
      %s260 = sphi 0, %s259
      %s274 = sphi 0, %s260
      %s278 = sphi 0, %s278
      %s280 = sphi 0, %s278
      %s281 = sphi 0, %s280
      %s295 = sphi 0, %s281
      %s299 = sphi 0, %s299
      %s301 = sphi 0, %s299
      %s302 = sphi 0, %s301
      %s316 = sphi 0, %s302
      %s320 = sphi 0, %s320
      %s322 = sphi 0, %s320
      %s323 = sphi 0, %s322
      %s337 = sphi 0, %s323
      %s341 = sphi 0, %s341
      %s343 = sphi 0, %s341
      %s344 = sphi 0, %s343
      %s358 = sphi 0, %s344
      %s362 = sphi 0, %s362
      %s364 = sphi 0, %s362
      %s365 = sphi 0, %s364
      %s379 = sphi 0, %s365
      %s383 = sphi 0, %s383
      %s385 = sphi 0, %s383
      %s386 = sphi 0, %s385
      %s400 = sphi 0, %s386
      %s404 = sphi 0, %s404
      %s406 = sphi 0, %s404
      %s407 = sphi 0, %s406
      %s421 = sphi 0, %s407
      %s425 = sphi 0, %s425
      %s427 = sphi 0, %s425
      %s428 = sphi 0, %s427
      %s442 = sphi 0, %s428
      %s446 = sphi 0, %s446
      %s448 = sphi 0, %s446
      %s449 = sphi 0, %s448
      %s463 = sphi 0, %s449
      %s469 = sphi 0, %s471
      %s472 = sphi 0, %s469
      %s473 = sphi 0, %s472
      %s489 = sphi 0, %s473
    $region4: #{bert_classifier_forward.1} parent=1 // loop_header_branch
      %32 = sbr.rel (%p30) target = $region8
    $region5: #{bert_classifier_forward.1} parent=1 // loop_body
      %s34 = ssub.s32 %s29, 1
      %s35 = ssub.s32 %s29, 2
      %s36 = sadd.s32 %s29, 1
      %s37 = ssub.s32 %s29, %s36
      %p38 = scmp.eq.s32.totalorder %s37, 0
      %s40 = sadd.s32 %s39, 1
      %s41 = scalar_select %p38, %s39, %s40
      %p44 = pneg %p38
      %p45 = scmp.eq.s32.totalorder %s29, 1
      %p46 = por %p44, %p45
      %p47 = scmp.ne.s32.totalorder %s39, %s42
      %p48 = scmp.eq.s32.totalorder %s29, 0
      %p49 = por %p47, %p48
      %p50 = scmp.ne.s32.totalorder %s39, %s42
      %p51 = scmp.eq.s32.totalorder %s34, 1
      %p52 = por %p50, %p51
      %p53 = scmp.ne.s32.totalorder %s42, %s43
      %p54 = scmp.eq.s32.totalorder %s34, 0
      %p55 = por %p53, %p54
      %p56 = scmp.ne.s32.totalorder %s42, %s43
      %p57 = scmp.eq.s32.totalorder %s35, 1
      %p58 = por %p56, %p57
      %p60 = scmp.ne.s32.totalorder %s43, %s59
      %p61 = scmp.eq.s32.totalorder %s35, 0
      %p62 = por %p60, %p61
      %s63 = ssub.s32 %s29, %s36
      %p64 = scmp.eq.s32.totalorder %s63, 0
      %s66 = sadd.s32 %s65, 1
      %s67 = scalar_select %p64, %s65, %s66
      %p70 = pneg %p64
      %p71 = scmp.eq.s32.totalorder %s29, 1
      %p72 = por %p70, %p71
      %p73 = scmp.ne.s32.totalorder %s65, %s68
      %p74 = scmp.eq.s32.totalorder %s29, 0
      %p75 = por %p73, %p74
      %p76 = scmp.ne.s32.totalorder %s65, %s68
      %p77 = scmp.eq.s32.totalorder %s34, 1
      %p78 = por %p76, %p77
      %p79 = scmp.ne.s32.totalorder %s68, %s69
      %p80 = scmp.eq.s32.totalorder %s34, 0
      %p81 = por %p79, %p80
      %p82 = scmp.ne.s32.totalorder %s68, %s69
      %p83 = scmp.eq.s32.totalorder %s35, 1
      %p84 = por %p82, %p83
      %p86 = scmp.ne.s32.totalorder %s69, %s85
      %p87 = scmp.eq.s32.totalorder %s35, 0
      %p88 = por %p86, %p87
      %s90 = sadd.s32 %s89, 1
      %p93 = scmp.eq.s32.totalorder %s29, 1
      %p94 = scmp.ne.s32.totalorder %s89, %s91
      %p95 = scmp.eq.s32.totalorder %s29, 0
      %p96 = por %p94, %p95
      %p97 = scmp.ne.s32.totalorder %s89, %s91
      %p98 = scmp.eq.s32.totalorder %s34, 1
      %p99 = por %p97, %p98
      %p100 = scmp.ne.s32.totalorder %s91, %s92
      %p101 = scmp.eq.s32.totalorder %s34, 0
      %p102 = por %p100, %p101
      %p103 = scmp.ne.s32.totalorder %s91, %s92
      %p104 = scmp.eq.s32.totalorder %s35, 1
      %p105 = por %p103, %p104
      %p107 = scmp.ne.s32.totalorder %s92, %s106
      %p108 = scmp.eq.s32.totalorder %s35, 0
      %p109 = por %p107, %p108
      %s111 = sadd.s32 %s110, 1
      %p114 = scmp.eq.s32.totalorder %s29, 1
      %p115 = scmp.ne.s32.totalorder %s110, %s112
      %p116 = scmp.eq.s32.totalorder %s29, 0
      %p117 = por %p115, %p116
      %p118 = scmp.ne.s32.totalorder %s110, %s112
      %p119 = scmp.eq.s32.totalorder %s34, 1
      %p120 = por %p118, %p119
      %p121 = scmp.ne.s32.totalorder %s112, %s113
      %p122 = scmp.eq.s32.totalorder %s34, 0
      %p123 = por %p121, %p122
      %p124 = scmp.ne.s32.totalorder %s112, %s113
      %p125 = scmp.eq.s32.totalorder %s35, 1
      %p126 = por %p124, %p125
      %p128 = scmp.ne.s32.totalorder %s113, %s127
      %p129 = scmp.eq.s32.totalorder %s35, 0
      %p130 = por %p128, %p129
      %s132 = sadd.s32 %s131, 1
      %p135 = scmp.eq.s32.totalorder %s29, 1
      %p136 = scmp.ne.s32.totalorder %s131, %s133
      %p137 = scmp.eq.s32.totalorder %s29, 0
      %p138 = por %p136, %p137
      %p139 = scmp.ne.s32.totalorder %s131, %s133
      %p140 = scmp.eq.s32.totalorder %s34, 1
      %p141 = por %p139, %p140
      %p142 = scmp.ne.s32.totalorder %s133, %s134
      %p143 = scmp.eq.s32.totalorder %s34, 0
      %p144 = por %p142, %p143
      %p145 = scmp.ne.s32.totalorder %s133, %s134
      %p146 = scmp.eq.s32.totalorder %s35, 1
      %p147 = por %p145, %p146
      %p149 = scmp.ne.s32.totalorder %s134, %s148
      %p150 = scmp.eq.s32.totalorder %s35, 0
      %p151 = por %p149, %p150
      %s153 = sadd.s32 %s152, 1
      %p156 = scmp.eq.s32.totalorder %s29, 1
      %p157 = scmp.ne.s32.totalorder %s152, %s154
      %p158 = scmp.eq.s32.totalorder %s29, 0
      %p159 = por %p157, %p158
      %p160 = scmp.ne.s32.totalorder %s152, %s154
      %p161 = scmp.eq.s32.totalorder %s34, 1
      %p162 = por %p160, %p161
      %p163 = scmp.ne.s32.totalorder %s154, %s155
      %p164 = scmp.eq.s32.totalorder %s34, 0
      %p165 = por %p163, %p164
      %p166 = scmp.ne.s32.totalorder %s154, %s155
      %p167 = scmp.eq.s32.totalorder %s35, 1
      %p168 = por %p166, %p167
      %p170 = scmp.ne.s32.totalorder %s155, %s169
      %p171 = scmp.eq.s32.totalorder %s35, 0
      %p172 = por %p170, %p171
      %s174 = sadd.s32 %s173, 1
      %p177 = scmp.eq.s32.totalorder %s29, 1
      %p178 = scmp.ne.s32.totalorder %s173, %s175
      %p179 = scmp.eq.s32.totalorder %s29, 0
      %p180 = por %p178, %p179
      %p181 = scmp.ne.s32.totalorder %s173, %s175
      %p182 = scmp.eq.s32.totalorder %s34, 1
      %p183 = por %p181, %p182
      %p184 = scmp.ne.s32.totalorder %s175, %s176
      %p185 = scmp.eq.s32.totalorder %s34, 0
      %p186 = por %p184, %p185
      %p187 = scmp.ne.s32.totalorder %s175, %s176
      %p188 = scmp.eq.s32.totalorder %s35, 1
      %p189 = por %p187, %p188
      %p191 = scmp.ne.s32.totalorder %s176, %s190
      %p192 = scmp.eq.s32.totalorder %s35, 0
      %p193 = por %p191, %p192
      %s195 = sadd.s32 %s194, 1
      %p198 = scmp.eq.s32.totalorder %s29, 1
      %p199 = scmp.ne.s32.totalorder %s194, %s196
      %p200 = scmp.eq.s32.totalorder %s29, 0
      %p201 = por %p199, %p200
      %p202 = scmp.ne.s32.totalorder %s194, %s196
      %p203 = scmp.eq.s32.totalorder %s34, 1
      %p204 = por %p202, %p203
      %p205 = scmp.ne.s32.totalorder %s196, %s197
      %p206 = scmp.eq.s32.totalorder %s34, 0
      %p207 = por %p205, %p206
      %p208 = scmp.ne.s32.totalorder %s196, %s197
      %p209 = scmp.eq.s32.totalorder %s35, 1
      %p210 = por %p208, %p209
      %p212 = scmp.ne.s32.totalorder %s197, %s211
      %p213 = scmp.eq.s32.totalorder %s35, 0
      %p214 = por %p212, %p213
      %s216 = sadd.s32 %s215, 1
      %p219 = scmp.eq.s32.totalorder %s29, 1
      %p220 = scmp.ne.s32.totalorder %s215, %s217
      %p221 = scmp.eq.s32.totalorder %s29, 0
      %p222 = por %p220, %p221
      %p223 = scmp.ne.s32.totalorder %s215, %s217
      %p224 = scmp.eq.s32.totalorder %s34, 1
      %p225 = por %p223, %p224
      %p226 = scmp.ne.s32.totalorder %s217, %s218
      %p227 = scmp.eq.s32.totalorder %s34, 0
      %p228 = por %p226, %p227
      %p229 = scmp.ne.s32.totalorder %s217, %s218
      %p230 = scmp.eq.s32.totalorder %s35, 1
      %p231 = por %p229, %p230
      %p233 = scmp.ne.s32.totalorder %s218, %s232
      %p234 = scmp.eq.s32.totalorder %s35, 0
      %p235 = por %p233, %p234
      %s237 = sadd.s32 %s236, 1
      %p240 = scmp.eq.s32.totalorder %s29, 1
      %p241 = scmp.ne.s32.totalorder %s236, %s238
      %p242 = scmp.eq.s32.totalorder %s29, 0
      %p243 = por %p241, %p242
      %p244 = scmp.ne.s32.totalorder %s236, %s238
      %p245 = scmp.eq.s32.totalorder %s34, 1
      %p246 = por %p244, %p245
      %p247 = scmp.ne.s32.totalorder %s238, %s239
      %p248 = scmp.eq.s32.totalorder %s34, 0
      %p249 = por %p247, %p248
      %p250 = scmp.ne.s32.totalorder %s238, %s239
      %p251 = scmp.eq.s32.totalorder %s35, 1
      %p252 = por %p250, %p251
      %p254 = scmp.ne.s32.totalorder %s239, %s253
      %p255 = scmp.eq.s32.totalorder %s35, 0
      %p256 = por %p254, %p255
      %s258 = sadd.s32 %s257, 1
      %p261 = scmp.eq.s32.totalorder %s29, 1
      %p262 = scmp.ne.s32.totalorder %s257, %s259
      %p263 = scmp.eq.s32.totalorder %s29, 0
      %p264 = por %p262, %p263
      %p265 = scmp.ne.s32.totalorder %s257, %s259
      %p266 = scmp.eq.s32.totalorder %s34, 1
      %p267 = por %p265, %p266
      %p268 = scmp.ne.s32.totalorder %s259, %s260
      %p269 = scmp.eq.s32.totalorder %s34, 0
      %p270 = por %p268, %p269
      %p271 = scmp.ne.s32.totalorder %s259, %s260
      %p272 = scmp.eq.s32.totalorder %s35, 1
      %p273 = por %p271, %p272
      %p275 = scmp.ne.s32.totalorder %s260, %s274
      %p276 = scmp.eq.s32.totalorder %s35, 0
      %p277 = por %p275, %p276
      %s279 = sadd.s32 %s278, 1
      %p282 = scmp.eq.s32.totalorder %s29, 1
      %p283 = scmp.ne.s32.totalorder %s278, %s280
      %p284 = scmp.eq.s32.totalorder %s29, 0
      %p285 = por %p283, %p284
      %p286 = scmp.ne.s32.totalorder %s278, %s280
      %p287 = scmp.eq.s32.totalorder %s34, 1
      %p288 = por %p286, %p287
      %p289 = scmp.ne.s32.totalorder %s280, %s281
      %p290 = scmp.eq.s32.totalorder %s34, 0
      %p291 = por %p289, %p290
      %p292 = scmp.ne.s32.totalorder %s280, %s281
      %p293 = scmp.eq.s32.totalorder %s35, 1
      %p294 = por %p292, %p293
      %p296 = scmp.ne.s32.totalorder %s281, %s295
      %p297 = scmp.eq.s32.totalorder %s35, 0
      %p298 = por %p296, %p297
      %s300 = sadd.s32 %s299, 1
      %p303 = scmp.eq.s32.totalorder %s29, 1
      %p304 = scmp.ne.s32.totalorder %s299, %s301
      %p305 = scmp.eq.s32.totalorder %s29, 0
      %p306 = por %p304, %p305
      %p307 = scmp.ne.s32.totalorder %s299, %s301
      %p308 = scmp.eq.s32.totalorder %s34, 1
      %p309 = por %p307, %p308
      %p310 = scmp.ne.s32.totalorder %s301, %s302
      %p311 = scmp.eq.s32.totalorder %s34, 0
      %p312 = por %p310, %p311
      %p313 = scmp.ne.s32.totalorder %s301, %s302
      %p314 = scmp.eq.s32.totalorder %s35, 1
      %p315 = por %p313, %p314
      %p317 = scmp.ne.s32.totalorder %s302, %s316
      %p318 = scmp.eq.s32.totalorder %s35, 0
      %p319 = por %p317, %p318
      %s321 = sadd.s32 %s320, 1
      %p324 = scmp.eq.s32.totalorder %s29, 1
      %p325 = scmp.ne.s32.totalorder %s320, %s322
      %p326 = scmp.eq.s32.totalorder %s29, 0
      %p327 = por %p325, %p326
      %p328 = scmp.ne.s32.totalorder %s320, %s322
      %p329 = scmp.eq.s32.totalorder %s34, 1
      %p330 = por %p328, %p329
      %p331 = scmp.ne.s32.totalorder %s322, %s323
      %p332 = scmp.eq.s32.totalorder %s34, 0
      %p333 = por %p331, %p332
      %p334 = scmp.ne.s32.totalorder %s322, %s323
      %p335 = scmp.eq.s32.totalorder %s35, 1
      %p336 = por %p334, %p335
      %p338 = scmp.ne.s32.totalorder %s323, %s337
      %p339 = scmp.eq.s32.totalorder %s35, 0
      %p340 = por %p338, %p339
      %s342 = sadd.s32 %s341, 1
      %p345 = scmp.eq.s32.totalorder %s29, 1
      %p346 = scmp.ne.s32.totalorder %s341, %s343
      %p347 = scmp.eq.s32.totalorder %s29, 0
      %p348 = por %p346, %p347
      %p349 = scmp.ne.s32.totalorder %s341, %s343
      %p350 = scmp.eq.s32.totalorder %s34, 1
      %p351 = por %p349, %p350
      %p352 = scmp.ne.s32.totalorder %s343, %s344
      %p353 = scmp.eq.s32.totalorder %s34, 0
      %p354 = por %p352, %p353
      %p355 = scmp.ne.s32.totalorder %s343, %s344
      %p356 = scmp.eq.s32.totalorder %s35, 1
      %p357 = por %p355, %p356
      %p359 = scmp.ne.s32.totalorder %s344, %s358
      %p360 = scmp.eq.s32.totalorder %s35, 0
      %p361 = por %p359, %p360
      %s363 = sadd.s32 %s362, 1
      %p366 = scmp.eq.s32.totalorder %s29, 1
      %p367 = scmp.ne.s32.totalorder %s362, %s364
      %p368 = scmp.eq.s32.totalorder %s29, 0
      %p369 = por %p367, %p368
      %p370 = scmp.ne.s32.totalorder %s362, %s364
      %p371 = scmp.eq.s32.totalorder %s34, 1
      %p372 = por %p370, %p371
      %p373 = scmp.ne.s32.totalorder %s364, %s365
      %p374 = scmp.eq.s32.totalorder %s34, 0
      %p375 = por %p373, %p374
      %p376 = scmp.ne.s32.totalorder %s364, %s365
      %p377 = scmp.eq.s32.totalorder %s35, 1
      %p378 = por %p376, %p377
      %p380 = scmp.ne.s32.totalorder %s365, %s379
      %p381 = scmp.eq.s32.totalorder %s35, 0
      %p382 = por %p380, %p381
      %s384 = sadd.s32 %s383, 1
      %p387 = scmp.eq.s32.totalorder %s29, 1
      %p388 = scmp.ne.s32.totalorder %s383, %s385
      %p389 = scmp.eq.s32.totalorder %s29, 0
      %p390 = por %p388, %p389
      %p391 = scmp.ne.s32.totalorder %s383, %s385
      %p392 = scmp.eq.s32.totalorder %s34, 1
      %p393 = por %p391, %p392
      %p394 = scmp.ne.s32.totalorder %s385, %s386
      %p395 = scmp.eq.s32.totalorder %s34, 0
      %p396 = por %p394, %p395
      %p397 = scmp.ne.s32.totalorder %s385, %s386
      %p398 = scmp.eq.s32.totalorder %s35, 1
      %p399 = por %p397, %p398
      %p401 = scmp.ne.s32.totalorder %s386, %s400
      %p402 = scmp.eq.s32.totalorder %s35, 0
      %p403 = por %p401, %p402
      %s405 = sadd.s32 %s404, 1
      %p408 = scmp.eq.s32.totalorder %s29, 1
      %p409 = scmp.ne.s32.totalorder %s404, %s406
      %p410 = scmp.eq.s32.totalorder %s29, 0
      %p411 = por %p409, %p410
      %p412 = scmp.ne.s32.totalorder %s404, %s406
      %p413 = scmp.eq.s32.totalorder %s34, 1
      %p414 = por %p412, %p413
      %p415 = scmp.ne.s32.totalorder %s406, %s407
      %p416 = scmp.eq.s32.totalorder %s34, 0
      %p417 = por %p415, %p416
      %p418 = scmp.ne.s32.totalorder %s406, %s407
      %p419 = scmp.eq.s32.totalorder %s35, 1
      %p420 = por %p418, %p419
      %p422 = scmp.ne.s32.totalorder %s407, %s421
      %p423 = scmp.eq.s32.totalorder %s35, 0
      %p424 = por %p422, %p423
      %s426 = sadd.s32 %s425, 1
      %p429 = scmp.eq.s32.totalorder %s29, 1
      %p430 = scmp.ne.s32.totalorder %s425, %s427
      %p431 = scmp.eq.s32.totalorder %s29, 0
      %p432 = por %p430, %p431
      %p433 = scmp.ne.s32.totalorder %s425, %s427
      %p434 = scmp.eq.s32.totalorder %s34, 1
      %p435 = por %p433, %p434
      %p436 = scmp.ne.s32.totalorder %s427, %s428
      %p437 = scmp.eq.s32.totalorder %s34, 0
      %p438 = por %p436, %p437
      %p439 = scmp.ne.s32.totalorder %s427, %s428
      %p440 = scmp.eq.s32.totalorder %s35, 1
      %p441 = por %p439, %p440
      %p443 = scmp.ne.s32.totalorder %s428, %s442
      %p444 = scmp.eq.s32.totalorder %s35, 0
      %p445 = por %p443, %p444
      %s447 = sadd.s32 %s446, 1
      %p450 = scmp.eq.s32.totalorder %s29, 1
      %p451 = scmp.ne.s32.totalorder %s446, %s448
      %p452 = scmp.eq.s32.totalorder %s29, 0
      %p453 = por %p451, %p452
      %p454 = scmp.ne.s32.totalorder %s446, %s448
      %p455 = scmp.eq.s32.totalorder %s34, 1
      %p456 = por %p454, %p455
      %p457 = scmp.ne.s32.totalorder %s448, %s449
      %p458 = scmp.eq.s32.totalorder %s34, 0
      %p459 = por %p457, %p458
      %p460 = scmp.ne.s32.totalorder %s448, %s449
      %p461 = scmp.eq.s32.totalorder %s35, 1
      %p462 = por %p460, %p461
      %p464 = scmp.ne.s32.totalorder %s449, %s463
      %p465 = scmp.eq.s32.totalorder %s35, 0
      %p466 = por %p464, %p465
      %s467 = ssub.s32 %s29, %s36
      %p468 = scmp.eq.s32.totalorder %s467, 0
      %s470 = sadd.s32 %s469, 1
      %s471 = scalar_select %p468, %s469, %s470
      %p474 = pneg %p468
      %p475 = scmp.eq.s32.totalorder %s29, 1
      %p476 = por %p474, %p475
      %p477 = scmp.ne.s32.totalorder %s469, %s472
      %p478 = scmp.eq.s32.totalorder %s29, 0
      %p479 = por %p477, %p478
      %p480 = scmp.ne.s32.totalorder %s469, %s472
      %p481 = scmp.eq.s32.totalorder %s34, 1
      %p482 = por %p480, %p481
      %p483 = scmp.ne.s32.totalorder %s472, %s473
      %p484 = scmp.eq.s32.totalorder %s34, 0
      %p485 = por %p483, %p484
      %p486 = scmp.ne.s32.totalorder %s472, %s473
      %p487 = scmp.eq.s32.totalorder %s35, 1
      %p488 = por %p486, %p487
      %p490 = scmp.ne.s32.totalorder %s473, %s489
      %p491 = scmp.eq.s32.totalorder %s35, 0
      %p492 = por %p490, %p491
      %p493 = scmp.le.s32.totalorder 1, %s29
      %p494 = scmp.lt.s32.totalorder %s29, 3
      %p495 = pnand %p493, %p494
      %p496 = pneg %p495
      // Predicated region
      $region9: #{bert_classifier_forward.1} parent=5 // pred_check
        _
      $region10: #{bert_classifier_forward.1} parent=5 // pred_check_branch
        %498 = sbr.rel (%p495) target = $region12
      $region11: #{bert_classifier_forward.1} parent=5 // pred_region
        %s499 = ssub.s32 %s29, 1
        // Predicated region
        $region13: #{bert_classifier_forward.1} parent=11 // pred_check
          %p500 = pneg %p102
        $region14: #{bert_classifier_forward.1} parent=11 // pred_check_branch
          %502 = sbr.rel (%p500) target = $region16
        $region15: #{bert_classifier_forward.1} parent=11 // pred_region
          _
        $region16: #{bert_classifier_forward.1} parent=11 // pred_fallthru
          _
        // Predicated region
        $region17: #{bert_classifier_forward.1} parent=11 // pred_check
          %p503 = pneg %p123
        $region18: #{bert_classifier_forward.1} parent=11 // pred_check_branch
          %505 = sbr.rel (%p503) target = $region20
        $region19: #{bert_classifier_forward.1} parent=11 // pred_region
          _
        $region20: #{bert_classifier_forward.1} parent=11 // pred_fallthru
          _
        // Predicated region
        $region21: #{bert_classifier_forward.1} parent=11 // pred_check
          %p506 = pneg %p144
        $region22: #{bert_classifier_forward.1} parent=11 // pred_check_branch
          %508 = sbr.rel (%p506) target = $region24
        $region23: #{bert_classifier_forward.1} parent=11 // pred_region
          _
        $region24: #{bert_classifier_forward.1} parent=11 // pred_fallthru
          _
        // Predicated region
        $region25: #{bert_classifier_forward.1} parent=11 // pred_check
          %p509 = pneg %p165
        $region26: #{bert_classifier_forward.1} parent=11 // pred_check_branch
          %511 = sbr.rel (%p509) target = $region28
        $region27: #{bert_classifier_forward.1} parent=11 // pred_region
          _
        $region28: #{bert_classifier_forward.1} parent=11 // pred_fallthru
          _
        // Predicated region
        $region29: #{bert_classifier_forward.1} parent=11 // pred_check
          %p512 = pneg %p186
        $region30: #{bert_classifier_forward.1} parent=11 // pred_check_branch
          %514 = sbr.rel (%p512) target = $region32
        $region31: #{bert_classifier_forward.1} parent=11 // pred_region
          _
        $region32: #{bert_classifier_forward.1} parent=11 // pred_fallthru
          _
        // Predicated region
        $region33: #{bert_classifier_forward.1} parent=11 // pred_check
          %p515 = pneg %p207
        $region34: #{bert_classifier_forward.1} parent=11 // pred_check_branch
          %517 = sbr.rel (%p515) target = $region36
        $region35: #{bert_classifier_forward.1} parent=11 // pred_region
          _
        $region36: #{bert_classifier_forward.1} parent=11 // pred_fallthru
          _
        // Predicated region
        $region37: #{bert_classifier_forward.1} parent=11 // pred_check
          %p518 = pneg %p228
        $region38: #{bert_classifier_forward.1} parent=11 // pred_check_branch
          %520 = sbr.rel (%p518) target = $region40
        $region39: #{bert_classifier_forward.1} parent=11 // pred_region
          _
        $region40: #{bert_classifier_forward.1} parent=11 // pred_fallthru
          _
        // Predicated region
        $region41: #{bert_classifier_forward.1} parent=11 // pred_check
          %p521 = pneg %p249
        $region42: #{bert_classifier_forward.1} parent=11 // pred_check_branch
          %523 = sbr.rel (%p521) target = $region44
        $region43: #{bert_classifier_forward.1} parent=11 // pred_region
          _
        $region44: #{bert_classifier_forward.1} parent=11 // pred_fallthru
          _
        // Predicated region
        $region45: #{bert_classifier_forward.1} parent=11 // pred_check
          %p524 = pneg %p270
        $region46: #{bert_classifier_forward.1} parent=11 // pred_check_branch
          %526 = sbr.rel (%p524) target = $region48
        $region47: #{bert_classifier_forward.1} parent=11 // pred_region
          _
        $region48: #{bert_classifier_forward.1} parent=11 // pred_fallthru
          _
        // Predicated region
        $region49: #{bert_classifier_forward.1} parent=11 // pred_check
          %p527 = pneg %p291
        $region50: #{bert_classifier_forward.1} parent=11 // pred_check_branch
          %529 = sbr.rel (%p527) target = $region52
        $region51: #{bert_classifier_forward.1} parent=11 // pred_region
          _
        $region52: #{bert_classifier_forward.1} parent=11 // pred_fallthru
          _
        // Predicated region
        $region53: #{bert_classifier_forward.1} parent=11 // pred_check
          %p530 = pneg %p312
        $region54: #{bert_classifier_forward.1} parent=11 // pred_check_branch
          %532 = sbr.rel (%p530) target = $region56
        $region55: #{bert_classifier_forward.1} parent=11 // pred_region
          _
        $region56: #{bert_classifier_forward.1} parent=11 // pred_fallthru
          _
        // Predicated region
        $region57: #{bert_classifier_forward.1} parent=11 // pred_check
          %p533 = pneg %p333
        $region58: #{bert_classifier_forward.1} parent=11 // pred_check_branch
          %535 = sbr.rel (%p533) target = $region60
        $region59: #{bert_classifier_forward.1} parent=11 // pred_region
          _
        $region60: #{bert_classifier_forward.1} parent=11 // pred_fallthru
          _
        // Predicated region
        $region61: #{bert_classifier_forward.1} parent=11 // pred_check
          %p536 = pneg %p354
        $region62: #{bert_classifier_forward.1} parent=11 // pred_check_branch
          %538 = sbr.rel (%p536) target = $region64
        $region63: #{bert_classifier_forward.1} parent=11 // pred_region
          _
        $region64: #{bert_classifier_forward.1} parent=11 // pred_fallthru
          _
        // Predicated region
        $region65: #{bert_classifier_forward.1} parent=11 // pred_check
          %p539 = pneg %p375
        $region66: #{bert_classifier_forward.1} parent=11 // pred_check_branch
          %541 = sbr.rel (%p539) target = $region68
        $region67: #{bert_classifier_forward.1} parent=11 // pred_region
          _
        $region68: #{bert_classifier_forward.1} parent=11 // pred_fallthru
          _
        // Predicated region
        $region69: #{bert_classifier_forward.1} parent=11 // pred_check
          %p542 = pneg %p396
        $region70: #{bert_classifier_forward.1} parent=11 // pred_check_branch
          %544 = sbr.rel (%p542) target = $region72
        $region71: #{bert_classifier_forward.1} parent=11 // pred_region
          _
        $region72: #{bert_classifier_forward.1} parent=11 // pred_fallthru
          _
        // Predicated region
        $region73: #{bert_classifier_forward.1} parent=11 // pred_check
          %p545 = pneg %p417
        $region74: #{bert_classifier_forward.1} parent=11 // pred_check_branch
          %547 = sbr.rel (%p545) target = $region76
        $region75: #{bert_classifier_forward.1} parent=11 // pred_region
          _
        $region76: #{bert_classifier_forward.1} parent=11 // pred_fallthru
          _
        // Predicated region
        $region77: #{bert_classifier_forward.1} parent=11 // pred_check
          %p548 = pneg %p438
        $region78: #{bert_classifier_forward.1} parent=11 // pred_check_branch
          %550 = sbr.rel (%p548) target = $region80
        $region79: #{bert_classifier_forward.1} parent=11 // pred_region
          _
        $region80: #{bert_classifier_forward.1} parent=11 // pred_fallthru
          _
        // Predicated region
        $region81: #{bert_classifier_forward.1} parent=11 // pred_check
          %p551 = pneg %p459
        $region82: #{bert_classifier_forward.1} parent=11 // pred_check_branch
          %553 = sbr.rel (%p551) target = $region84
        $region83: #{bert_classifier_forward.1} parent=11 // pred_region
          _
        $region84: #{bert_classifier_forward.1} parent=11 // pred_fallthru
          _
      $region12: #{bert_classifier_forward.1} parent=5 // pred_fallthru
        _
      %p554 = scmp.lt.s32.totalorder %s29, 2
      // Predicated region
      $region85: #{bert_classifier_forward.1} parent=5 // pred_check
        %p555 = pneg %p554
      $region86: #{bert_classifier_forward.1} parent=5 // pred_check_branch
        %557 = sbr.rel (%p555) target = $region88
      $region87: #{bert_classifier_forward.1} parent=5 // pred_region
        // Predicated region
        $region89: #{bert_classifier_forward.1} parent=87 // pred_check
          %p558 = pneg %p49
        $region90: #{bert_classifier_forward.1} parent=87 // pred_check_branch
          %560 = sbr.rel (%p558) target = $region92
        $region91: #{bert_classifier_forward.1} parent=87 // pred_region
          %p561 = scmp.lt.s32.totalorder %s29, 1
          %s562 = scalar_select %p561, %s29, 1
          %s563 = smul.addr %s562, 8
          %s564 = scalar_lea.vmem %s0, %s563
        $region92: #{bert_classifier_forward.1} parent=87 // pred_fallthru
          _
        // Predicated region
        $region93: #{bert_classifier_forward.1} parent=87 // pred_check
          %p565 = pneg %p75
        $region94: #{bert_classifier_forward.1} parent=87 // pred_check_branch
          %567 = sbr.rel (%p565) target = $region96
        $region95: #{bert_classifier_forward.1} parent=87 // pred_region
          %p568 = scmp.lt.s32.totalorder %s29, 1
          %s569 = scalar_select %p568, %s29, 1
          %s570 = scalar_lea.vmem %s1, %s569
        $region96: #{bert_classifier_forward.1} parent=87 // pred_fallthru
          _
      $region88: #{bert_classifier_forward.1} parent=5 // pred_fallthru
        _
      %p571 = scmp.le.s32.totalorder 1, %s29
      %p572 = scmp.lt.s32.totalorder %s29, 3
      %p573 = pnand %p571, %p572
      %p574 = pneg %p573
      // Predicated region
      $region97: #{bert_classifier_forward.1} parent=5 // pred_check
        _
      $region98: #{bert_classifier_forward.1} parent=5 // pred_check_branch
        %576 = sbr.rel (%p573) target = $region100
      $region99: #{bert_classifier_forward.1} parent=5 // pred_region
        %s577 = ssub.s32 %s29, 1
        %p578 = scmp.lt.s32.totalorder %s34, 1
        %s579 = scalar_select %p578, %s34, 1
        %s580 = smul.addr %s579, 8
        %s581 = scalar_lea.vmem %s0, %s580
        %p582 = pneg %p55
        %p583 = pneg %p52
        %p584 = scmp.lt.s32.totalorder %s34, 1
        %s585 = scalar_select %p584, %s34, 1
        %s586 = scalar_lea.vmem %s1, %s585
        %p587 = pneg %p81
        %p588 = pneg %p78
        %p589 = pneg %p102
        %p590 = pneg %p99
        %p591 = pneg %p123
        %p592 = pneg %p120
        %p593 = pneg %p144
        %p594 = pneg %p141
        %p595 = pneg %p165
        %p596 = pneg %p162
        %p597 = pneg %p186
        %p598 = pneg %p183
        %p599 = pneg %p207
        %p600 = pneg %p204
        %p601 = pneg %p228
        %p602 = pneg %p225
        %p603 = pneg %p249
        %p604 = pneg %p246
        %p605 = pneg %p270
        %p606 = pneg %p267
        %p607 = pneg %p291
        %p608 = pneg %p288
        %p609 = pneg %p312
        %p610 = pneg %p309
        %p611 = pneg %p333
        %p612 = pneg %p330
        %p613 = pneg %p354
        %p614 = pneg %p351
        %p615 = pneg %p375
        %p616 = pneg %p372
        %p617 = pneg %p396
        %p618 = pneg %p393
        %p619 = pneg %p417
        %p620 = pneg %p414
        %p621 = pneg %p438
        %p622 = pneg %p435
        %p623 = pneg %p459
        %p624 = pneg %p456
        %p625 = pneg %p485
        %p626 = pneg %p482
        %s627 = sand.u32 %s472, 1
        %s628 = scalar_lea.sflag [#allocation3], %s627
        %s629 = sand.u32 %s472, 1
        %s630 = scalar_lea.vmem [#allocation2], %s629
        %p631 = scmp.lt.s32.totalorder %s34, 1
        %s632 = scalar_select %p631, %s34, 1
        %s633 = smul.addr %s632, 8
        %s634 = scalar_lea.vmem %s0, %s633
        %p635 = scmp.lt.s32.totalorder %s34, 1
        %s636 = scalar_select %p635, %s34, 1
        %s637 = scalar_lea.vmem %s1, %s636
        %v638 = vld [vmem:[%s634] sm:$0xff]
        %v639 = vld [vmem:[%s637] sm:$0x1]
        %v640 = vld [vmem:[%s2] sm:$0x1]
        %v641 = vld [vmem:[%s3] sm:$0x1]
        %vm642 = vcmask 261120
        %v643 = vsel %vm642, %v638, 0.0
        %644 = vadd.xlane.f32.xlu0 %v643
        %v645 = vpop.xlane.xlu0 %644
        %v646 = vrcp.pop 32.0
        %v647 = vmul.f32 %v645, %v646
        %v648 = vsub.f32 %v638, %v647
        %v649 = vmul.f32 %v648, %v648
        %v650 = vsel %vm642, %v649, 0.0
        %651 = vadd.xlane.f32.xlu0 %v650
        %v652 = vpop.xlane.xlu0 %651
        %v653 = vmul.f32 %v652, %v646
        %v654 = vadd.f32 %v653, 1e-12
        %v655 = vrsqrt.pop %v654
        %v656 = vmul.f32 %v648, %v655
        %v658 = vlaneseq
        %v659 = vshrl.u32 %v658, 7
        %v660 = vsub.s32 0, %v659
        %v661 = vrot.slane %v640, %v660
        %v663 = vmul.f32 %v656, %v661
        %v665 = vlaneseq
        %v666 = vshrl.u32 %v665, 7
        %v667 = vsub.s32 0, %v666
        %v668 = vrot.slane %v641, %v667
        %v670 = vadd.f32 %v663, %v668
        %v671 = vld [vmem:[%s4] sm:$0xff]
        %v672 = vld [vmem:[%s4 + $0x8] sm:$0xff]
        %v673 = vld [vmem:[%s4 + $0x10] sm:$0xff]
        %v674 = vld [vmem:[%s4 + $0x18] sm:$0xff]
        %v675 = vld [vmem:[%s5] sm:$0x1]
        %v677 = vlaneseq
        %v678 = vshrl.u32 %v677, 7
        %v679 = vsub.s32 0, %v678
        %v680 = vrot.slane %v675, %v679
        %v683 = vsel %vm642, %v670, 0
        %685 = vmatprep.subr.mxu0 0.0
        %686 = vmatpush1.msra.mxu0 %v671
        %687 = vmatprep.subr.mxu0 0.0
        %688 = vmatpush1.msra.mxu0 %v672
        %689 = vmatprep.subr.mxu0 0.0
        %690 = vmatpush1.msra.mxu0 %v673
        %691 = vmatprep.subr.mxu0 0.0
        %692 = vmatpush1.msra.mxu0 %v674
        %693 = vmatprep.subr.mxu0 0.0
        %694 = vmatpush1.msra.mxu0 0.0
        %695 = vmatprep.subr.mxu0 0.0
        %696 = vmatpush1.msra.mxu0 0.0
        %697 = vmatprep.subr.mxu0 0.0
        %698 = vmatpush1.msra.mxu0 0.0
        %699 = vmatprep.subr.mxu0 0.0
        %700 = vmatpush1.msra.mxu0 0.0
        %701 = vmatprep.subr.mxu0 0.0
        %702 = vmatpush1.msra.mxu0 0.0
        %703 = vmatprep.subr.mxu0 0.0
        %704 = vmatpush1.msra.mxu0 0.0
        %705 = vmatprep.subr.mxu0 0.0
        %706 = vmatpush1.msra.mxu0 0.0
        %707 = vmatprep.subr.mxu0 0.0
        %708 = vmatpush1.msra.mxu0 0.0
        %709 = vmatprep.subr.mxu0 0.0
        %710 = vmatpush1.msra.mxu0 0.0
        %711 = vmatprep.subr.mxu0 0.0
        %712 = vmatpush1.msra.mxu0 0.0
        %713 = vmatprep.subr.mxu0 0.0
        %714 = vmatpush1.msra.mxu0 0.0
        %715 = vmatprep.subr.mxu0 0.0
        %716 = vmatpush1.msra.mxu0 0.0
        %717 = vmatprep.subr.mxu0 0.0
        %718 = vmatpush1.msra.mxu0 0.0
        %719 = vmatprep.subr.mxu0 0.0
        %720 = vmatpush1.msra.mxu0 0.0
        %721 = vmatprep.subr.mxu0 0.0
        %722 = vmatpush1.msra.mxu0 0.0
        %723 = vmatprep.subr.mxu0 0.0
        %724 = vmatpush1.msra.mxu0 0.0
        %725 = vmatprep.subr.mxu0 0.0
        %726 = vmatpush1.msra.mxu0 0.0
        %727 = vmatprep.subr.mxu0 0.0
        %728 = vmatpush1.msra.mxu0 0.0
        %729 = vmatprep.subr.mxu0 0.0
        %730 = vmatpush1.msra.mxu0 0.0
        %731 = vmatprep.subr.mxu0 0.0
        %732 = vmatpush1.msra.mxu0 0.0
        %733 = vmatprep.subr.mxu0 0.0
        %734 = vmatpush1.msra.mxu0 0.0
        %735 = vmatprep.subr.mxu0 0.0
        %736 = vmatpush1.msra.mxu0 0.0
        %737 = vmatprep.subr.mxu0 0.0
        %738 = vmatpush1.msra.mxu0 0.0
        %739 = vmatprep.subr.mxu0 0.0
        %740 = vmatpush1.msra.mxu0 0.0
        %741 = vmatprep.subr.mxu0 0.0
        %742 = vmatpush1.msra.mxu0 0.0
        %743 = vmatprep.subr.mxu0 0.0
        %744 = vmatpush1.msra.mxu0 0.0
        %745 = vmatprep.subr.mxu0 0.0
        %746 = vmatpush1.msra.mxu0 0.0
        %747 = vmatprep.subr.mxu0 0.0
        %748 = vmatpush1.msra.mxu0 0.0
        %749 = vmatprep.mubr.f32.mxu0 0.0
        %750 = vmatmul.mubr.f32.gmra.mrb[0].mxu0 %v683
        %v751 = vpop.f32.mrb[0].mxu0
        %v752 = vadd.f32 %v680, %v751
        %v753 = vpop.f32.mrb[0].mxu0
        %754 = vdwg.mxu0
        %756 = vrot.lane.b32.xlu0 %v752, 96
        %v757 = vpop.permute.xlu0 %756
        %vm758 = vcmask 64512
        %v759 = vsel %vm758, %v752, 0
        %v761 = vsel %vm758, %v757, 0
        %763 = vmatprep.subr.mxu0 0.0
        %764 = vmatpush1.xpose.msra.mxu0 %v761
        %765 = vmatprep.subr.mxu0 0.0
        %766 = vmatpush1.xpose.msra.mxu0 0.0
        %767 = vmatprep.subr.mxu0 0.0
        %768 = vmatpush1.xpose.msra.mxu0 0.0
        %769 = vmatprep.subr.mxu0 0.0
        %770 = vmatpush1.xpose.msra.mxu0 0.0
        %771 = vmatprep.subr.mxu0 0.0
        %772 = vmatpush1.xpose.msra.mxu0 0.0
        %773 = vmatprep.subr.mxu0 0.0
        %774 = vmatpush1.xpose.msra.mxu0 0.0
        %775 = vmatprep.subr.mxu0 0.0
        %776 = vmatpush1.xpose.msra.mxu0 0.0
        %777 = vmatprep.subr.mxu0 0.0
        %778 = vmatpush1.xpose.msra.mxu0 0.0
        %779 = vmatprep.subr.mxu0 0.0
        %780 = vmatpush1.xpose.msra.mxu0 0.0
        %781 = vmatprep.subr.mxu0 0.0
        %782 = vmatpush1.xpose.msra.mxu0 0.0
        %783 = vmatprep.subr.mxu0 0.0
        %784 = vmatpush1.xpose.msra.mxu0 0.0
        %785 = vmatprep.subr.mxu0 0.0
        %786 = vmatpush1.xpose.msra.mxu0 0.0
        %787 = vmatprep.subr.mxu0 0.0
        %788 = vmatpush1.xpose.msra.mxu0 0.0
        %789 = vmatprep.subr.mxu0 0.0
        %790 = vmatpush1.xpose.msra.mxu0 0.0
        %791 = vmatprep.subr.mxu0 0.0
        %792 = vmatpush1.xpose.msra.mxu0 0.0
        %793 = vmatprep.subr.mxu0 0.0
        %794 = vmatpush1.xpose.msra.mxu0 0.0
        %795 = vmatprep.subr.mxu0 0.0
        %796 = vmatpush1.xpose.msra.mxu0 0.0
        %797 = vmatprep.subr.mxu0 0.0
        %798 = vmatpush1.xpose.msra.mxu0 0.0
        %799 = vmatprep.subr.mxu0 0.0
        %800 = vmatpush1.xpose.msra.mxu0 0.0
        %801 = vmatprep.subr.mxu0 0.0
        %802 = vmatpush1.xpose.msra.mxu0 0.0
        %803 = vmatprep.subr.mxu0 0.0
        %804 = vmatpush1.xpose.msra.mxu0 0.0
        %805 = vmatprep.subr.mxu0 0.0
        %806 = vmatpush1.xpose.msra.mxu0 0.0
        %807 = vmatprep.subr.mxu0 0.0
        %808 = vmatpush1.xpose.msra.mxu0 0.0
        %809 = vmatprep.subr.mxu0 0.0
        %810 = vmatpush1.xpose.msra.mxu0 0.0
        %811 = vmatprep.subr.mxu0 0.0
        %812 = vmatpush1.xpose.msra.mxu0 0.0
        %813 = vmatprep.subr.mxu0 0.0
        %814 = vmatpush1.xpose.msra.mxu0 0.0
        %815 = vmatprep.subr.mxu0 0.0
        %816 = vmatpush1.xpose.msra.mxu0 0.0
        %817 = vmatprep.subr.mxu0 0.0
        %818 = vmatpush1.xpose.msra.mxu0 0.0
        %819 = vmatprep.subr.mxu0 0.0
        %820 = vmatpush1.xpose.msra.mxu0 0.0
        %821 = vmatprep.subr.mxu0 0.0
        %822 = vmatpush1.xpose.msra.mxu0 0.0
        %823 = vmatprep.subr.mxu0 0.0
        %824 = vmatpush1.xpose.msra.mxu0 0.0
        %825 = vmatprep.subr.mxu0 0.0
        %826 = vmatpush1.xpose.msra.mxu0 0.0
        %827 = vmatprep.mubr.f32.mxu0 0.0
        %828 = vmatmul.mubr.f32.gmra.mrb[0].mxu0 %v759
        %v829 = vpop.f32.mrb[0].mxu0
        %v830 = vadd.f32 0.0, %v829
        %v831 = vpop.f32.mrb[0].mxu0
        %832 = vdwg.mxu0
        %v833 = vmul.f32 %v830, 0.35355338
        %v835 = vlaneseq
        %v836 = vshrl.u32 %v835, 7
        %v837 = vsub.s32 0, %v836
        %v838 = vrot.slane %v639, %v837
        %v840 = vadd.f32 %v833, %v838
        %v841 = vsel %vm758, %v840, -inf
        %842 = vmax.xlane.f32.xlu0 %v841
        %v843 = vpop.xlane.xlu0 %842
        %v844 = vsub.f32 %v840, %v843
        %v845 = vmul.f32 %v844, 1.442695
        %v846 = vpow.pop %v845
        %v847 = vsel %vm758, %v846, 0.0
        %848 = vadd.xlane.f32.xlu0 %v847
        %v849 = vpop.xlane.xlu0 %848
        %v850 = vrcp.pop %v849
        %v851 = vmul.f32 %v846, %v850
        %852 = vrot.lane.b32.xlu0 %v752, 64
        %v853 = vpop.permute.xlu0 %852
        %v856 = vsel %vm758, %v851, 0
        %858 = vmatprep.subr.mxu0 0.0
        %859 = vmatpush1.msra.mxu0 %v853
        %860 = vmatprep.subr.mxu0 0.0
        %861 = vmatpush1.msra.mxu0 0.0
        %862 = vmatprep.subr.mxu0 0.0
        %863 = vmatpush1.msra.mxu0 0.0
        %864 = vmatprep.subr.mxu0 0.0
        %865 = vmatpush1.msra.mxu0 0.0
        %866 = vmatprep.subr.mxu0 0.0
        %867 = vmatpush1.msra.mxu0 0.0
        %868 = vmatprep.subr.mxu0 0.0
        %869 = vmatpush1.msra.mxu0 0.0
        %870 = vmatprep.subr.mxu0 0.0
        %871 = vmatpush1.msra.mxu0 0.0
        %872 = vmatprep.subr.mxu0 0.0
        %873 = vmatpush1.msra.mxu0 0.0
        %874 = vmatprep.subr.mxu0 0.0
        %875 = vmatpush1.msra.mxu0 0.0
        %876 = vmatprep.subr.mxu0 0.0
        %877 = vmatpush1.msra.mxu0 0.0
        %878 = vmatprep.subr.mxu0 0.0
        %879 = vmatpush1.msra.mxu0 0.0
        %880 = vmatprep.subr.mxu0 0.0
        %881 = vmatpush1.msra.mxu0 0.0
        %882 = vmatprep.subr.mxu0 0.0
        %883 = vmatpush1.msra.mxu0 0.0
        %884 = vmatprep.subr.mxu0 0.0
        %885 = vmatpush1.msra.mxu0 0.0
        %886 = vmatprep.subr.mxu0 0.0
        %887 = vmatpush1.msra.mxu0 0.0
        %888 = vmatprep.subr.mxu0 0.0
        %889 = vmatpush1.msra.mxu0 0.0
        %890 = vmatprep.subr.mxu0 0.0
        %891 = vmatpush1.msra.mxu0 0.0
        %892 = vmatprep.subr.mxu0 0.0
        %893 = vmatpush1.msra.mxu0 0.0
        %894 = vmatprep.subr.mxu0 0.0
        %895 = vmatpush1.msra.mxu0 0.0
        %896 = vmatprep.subr.mxu0 0.0
        %897 = vmatpush1.msra.mxu0 0.0
        %898 = vmatprep.subr.mxu0 0.0
        %899 = vmatpush1.msra.mxu0 0.0
        %900 = vmatprep.subr.mxu0 0.0
        %901 = vmatpush1.msra.mxu0 0.0
        %902 = vmatprep.subr.mxu0 0.0
        %903 = vmatpush1.msra.mxu0 0.0
        %904 = vmatprep.subr.mxu0 0.0
        %905 = vmatpush1.msra.mxu0 0.0
        %906 = vmatprep.subr.mxu0 0.0
        %907 = vmatpush1.msra.mxu0 0.0
        %908 = vmatprep.subr.mxu0 0.0
        %909 = vmatpush1.msra.mxu0 0.0
        %910 = vmatprep.subr.mxu0 0.0
        %911 = vmatpush1.msra.mxu0 0.0
        %912 = vmatprep.subr.mxu0 0.0
        %913 = vmatpush1.msra.mxu0 0.0
        %914 = vmatprep.subr.mxu0 0.0
        %915 = vmatpush1.msra.mxu0 0.0
        %916 = vmatprep.subr.mxu0 0.0
        %917 = vmatpush1.msra.mxu0 0.0
        %918 = vmatprep.subr.mxu0 0.0
        %919 = vmatpush1.msra.mxu0 0.0
        %920 = vmatprep.subr.mxu0 0.0
        %921 = vmatpush1.msra.mxu0 0.0
        %922 = vmatprep.mubr.f32.mxu0 0.0
        %923 = vmatmul.mubr.f32.gmra.mrb[0].mxu0 %v856
        %v924 = vpop.f32.mrb[0].mxu0
        %v925 = vadd.f32 0.0, %v924
        %v926 = vpop.f32.mrb[0].mxu0
        %927 = vdwg.mxu0
        %928 = vrot.lane.b32.xlu0 %v752, 120
        %v929 = vpop.permute.xlu0 %928
        %930 = vrot.lane.b32.xlu0 %v752, 88
        %v931 = vpop.permute.xlu0 %930
        %v932 = vsel %vm758, %v929, 0
        %v934 = vsel %vm758, %v931, 0
        %936 = vmatprep.subr.mxu0 0.0
        %937 = vmatpush1.xpose.msra.mxu0 %v934
        %938 = vmatprep.subr.mxu0 0.0
        %939 = vmatpush1.xpose.msra.mxu0 0.0
        %940 = vmatprep.subr.mxu0 0.0
        %941 = vmatpush1.xpose.msra.mxu0 0.0
        %942 = vmatprep.subr.mxu0 0.0
        %943 = vmatpush1.xpose.msra.mxu0 0.0
        %944 = vmatprep.subr.mxu0 0.0
        %945 = vmatpush1.xpose.msra.mxu0 0.0
        %946 = vmatprep.subr.mxu0 0.0
        %947 = vmatpush1.xpose.msra.mxu0 0.0
        %948 = vmatprep.subr.mxu0 0.0
        %949 = vmatpush1.xpose.msra.mxu0 0.0
        %950 = vmatprep.subr.mxu0 0.0
        %951 = vmatpush1.xpose.msra.mxu0 0.0
        %952 = vmatprep.subr.mxu0 0.0
        %953 = vmatpush1.xpose.msra.mxu0 0.0
        %954 = vmatprep.subr.mxu0 0.0
        %955 = vmatpush1.xpose.msra.mxu0 0.0
        %956 = vmatprep.subr.mxu0 0.0
        %957 = vmatpush1.xpose.msra.mxu0 0.0
        %958 = vmatprep.subr.mxu0 0.0
        %959 = vmatpush1.xpose.msra.mxu0 0.0
        %960 = vmatprep.subr.mxu0 0.0
        %961 = vmatpush1.xpose.msra.mxu0 0.0
        %962 = vmatprep.subr.mxu0 0.0
        %963 = vmatpush1.xpose.msra.mxu0 0.0
        %964 = vmatprep.subr.mxu0 0.0
        %965 = vmatpush1.xpose.msra.mxu0 0.0
        %966 = vmatprep.subr.mxu0 0.0
        %967 = vmatpush1.xpose.msra.mxu0 0.0
        %968 = vmatprep.subr.mxu0 0.0
        %969 = vmatpush1.xpose.msra.mxu0 0.0
        %970 = vmatprep.subr.mxu0 0.0
        %971 = vmatpush1.xpose.msra.mxu0 0.0
        %972 = vmatprep.subr.mxu0 0.0
        %973 = vmatpush1.xpose.msra.mxu0 0.0
        %974 = vmatprep.subr.mxu0 0.0
        %975 = vmatpush1.xpose.msra.mxu0 0.0
        %976 = vmatprep.subr.mxu0 0.0
        %977 = vmatpush1.xpose.msra.mxu0 0.0
        %978 = vmatprep.subr.mxu0 0.0
        %979 = vmatpush1.xpose.msra.mxu0 0.0
        %980 = vmatprep.subr.mxu0 0.0
        %981 = vmatpush1.xpose.msra.mxu0 0.0
        %982 = vmatprep.subr.mxu0 0.0
        %983 = vmatpush1.xpose.msra.mxu0 0.0
        %984 = vmatprep.subr.mxu0 0.0
        %985 = vmatpush1.xpose.msra.mxu0 0.0
        %986 = vmatprep.subr.mxu0 0.0
        %987 = vmatpush1.xpose.msra.mxu0 0.0
        %988 = vmatprep.subr.mxu0 0.0
        %989 = vmatpush1.xpose.msra.mxu0 0.0
        %990 = vmatprep.subr.mxu0 0.0
        %991 = vmatpush1.xpose.msra.mxu0 0.0
        %992 = vmatprep.subr.mxu0 0.0
        %993 = vmatpush1.xpose.msra.mxu0 0.0
        %994 = vmatprep.subr.mxu0 0.0
        %995 = vmatpush1.xpose.msra.mxu0 0.0
        %996 = vmatprep.subr.mxu0 0.0
        %997 = vmatpush1.xpose.msra.mxu0 0.0
        %998 = vmatprep.subr.mxu0 0.0
        %999 = vmatpush1.xpose.msra.mxu0 0.0
        %1000 = vmatprep.mubr.f32.mxu0 0.0
        %1001 = vmatmul.mubr.f32.gmra.mrb[0].mxu0 %v932
        %v1002 = vpop.f32.mrb[0].mxu0
        %v1003 = vadd.f32 0.0, %v1002
        %v1004 = vpop.f32.mrb[0].mxu0
        %1005 = vdwg.mxu0
        %v1006 = vmul.f32 %v1003, 0.35355338
        %v1007 = vadd.f32 %v1006, %v838
        %v1008 = vsel %vm758, %v1007, -inf
        %1009 = vmax.xlane.f32.xlu0 %v1008
        %v1010 = vpop.xlane.xlu0 %1009
        %v1011 = vsub.f32 %v1007, %v1010
        %v1012 = vmul.f32 %v1011, 1.442695
        %v1013 = vpow.pop %v1012
        %v1014 = vsel %vm758, %v1013, 0.0
        %1015 = vadd.xlane.f32.xlu0 %v1014
        %v1016 = vpop.xlane.xlu0 %1015
        %v1017 = vrcp.pop %v1016
        %v1018 = vmul.f32 %v1013, %v1017
        %1019 = vrot.lane.b32.xlu0 %v752, 56
        %v1020 = vpop.permute.xlu0 %1019
        %v1023 = vsel %vm758, %v1018, 0
        %1025 = vmatprep.subr.mxu0 0.0
        %1026 = vmatpush1.msra.mxu0 %v1020
        %1027 = vmatprep.subr.mxu0 0.0
        %1028 = vmatpush1.msra.mxu0 0.0
        %1029 = vmatprep.subr.mxu0 0.0
        %1030 = vmatpush1.msra.mxu0 0.0
        %1031 = vmatprep.subr.mxu0 0.0
        %1032 = vmatpush1.msra.mxu0 0.0
        %1033 = vmatprep.subr.mxu0 0.0
        %1034 = vmatpush1.msra.mxu0 0.0
        %1035 = vmatprep.subr.mxu0 0.0
        %1036 = vmatpush1.msra.mxu0 0.0
        %1037 = vmatprep.subr.mxu0 0.0
        %1038 = vmatpush1.msra.mxu0 0.0
        %1039 = vmatprep.subr.mxu0 0.0
        %1040 = vmatpush1.msra.mxu0 0.0
        %1041 = vmatprep.subr.mxu0 0.0
        %1042 = vmatpush1.msra.mxu0 0.0
        %1043 = vmatprep.subr.mxu0 0.0
        %1044 = vmatpush1.msra.mxu0 0.0
        %1045 = vmatprep.subr.mxu0 0.0
        %1046 = vmatpush1.msra.mxu0 0.0
        %1047 = vmatprep.subr.mxu0 0.0
        %1048 = vmatpush1.msra.mxu0 0.0
        %1049 = vmatprep.subr.mxu0 0.0
        %1050 = vmatpush1.msra.mxu0 0.0
        %1051 = vmatprep.subr.mxu0 0.0
        %1052 = vmatpush1.msra.mxu0 0.0
        %1053 = vmatprep.subr.mxu0 0.0
        %1054 = vmatpush1.msra.mxu0 0.0
        %1055 = vmatprep.subr.mxu0 0.0
        %1056 = vmatpush1.msra.mxu0 0.0
        %1057 = vmatprep.subr.mxu0 0.0
        %1058 = vmatpush1.msra.mxu0 0.0
        %1059 = vmatprep.subr.mxu0 0.0
        %1060 = vmatpush1.msra.mxu0 0.0
        %1061 = vmatprep.subr.mxu0 0.0
        %1062 = vmatpush1.msra.mxu0 0.0
        %1063 = vmatprep.subr.mxu0 0.0
        %1064 = vmatpush1.msra.mxu0 0.0
        %1065 = vmatprep.subr.mxu0 0.0
        %1066 = vmatpush1.msra.mxu0 0.0
        %1067 = vmatprep.subr.mxu0 0.0
        %1068 = vmatpush1.msra.mxu0 0.0
        %1069 = vmatprep.subr.mxu0 0.0
        %1070 = vmatpush1.msra.mxu0 0.0
        %1071 = vmatprep.subr.mxu0 0.0
        %1072 = vmatpush1.msra.mxu0 0.0
        %1073 = vmatprep.subr.mxu0 0.0
        %1074 = vmatpush1.msra.mxu0 0.0
        %1075 = vmatprep.subr.mxu0 0.0
        %1076 = vmatpush1.msra.mxu0 0.0
        %1077 = vmatprep.subr.mxu0 0.0
        %1078 = vmatpush1.msra.mxu0 0.0
        %1079 = vmatprep.subr.mxu0 0.0
        %1080 = vmatpush1.msra.mxu0 0.0
        %1081 = vmatprep.subr.mxu0 0.0
        %1082 = vmatpush1.msra.mxu0 0.0
        %1083 = vmatprep.subr.mxu0 0.0
        %1084 = vmatpush1.msra.mxu0 0.0
        %1085 = vmatprep.subr.mxu0 0.0
        %1086 = vmatpush1.msra.mxu0 0.0
        %1087 = vmatprep.subr.mxu0 0.0
        %1088 = vmatpush1.msra.mxu0 0.0
        %1089 = vmatprep.mubr.f32.mxu0 0.0
        %1090 = vmatmul.mubr.f32.gmra.mrb[0].mxu0 %v1023
        %v1091 = vpop.f32.mrb[0].mxu0
        %v1092 = vadd.f32 0.0, %v1091
        %v1093 = vpop.f32.mrb[0].mxu0
        %1094 = vdwg.mxu0
        %1095 = vrot.lane.b32.xlu0 %v752, 112
        %v1096 = vpop.permute.xlu0 %1095
        %1097 = vrot.lane.b32.xlu0 %v752, 80
        %v1098 = vpop.permute.xlu0 %1097
        %v1099 = vsel %vm758, %v1096, 0
        %v1101 = vsel %vm758, %v1098, 0
        %1103 = vmatprep.subr.mxu0 0.0
        %1104 = vmatpush1.xpose.msra.mxu0 %v1101
        %1105 = vmatprep.subr.mxu0 0.0
        %1106 = vmatpush1.xpose.msra.mxu0 0.0
        %1107 = vmatprep.subr.mxu0 0.0
        %1108 = vmatpush1.xpose.msra.mxu0 0.0
        %1109 = vmatprep.subr.mxu0 0.0
        %1110 = vmatpush1.xpose.msra.mxu0 0.0
        %1111 = vmatprep.subr.mxu0 0.0
        %1112 = vmatpush1.xpose.msra.mxu0 0.0
        %1113 = vmatprep.subr.mxu0 0.0
        %1114 = vmatpush1.xpose.msra.mxu0 0.0
        %1115 = vmatprep.subr.mxu0 0.0
        %1116 = vmatpush1.xpose.msra.mxu0 0.0
        %1117 = vmatprep.subr.mxu0 0.0
        %1118 = vmatpush1.xpose.msra.mxu0 0.0
        %1119 = vmatprep.subr.mxu0 0.0
        %1120 = vmatpush1.xpose.msra.mxu0 0.0
        %1121 = vmatprep.subr.mxu0 0.0
        %1122 = vmatpush1.xpose.msra.mxu0 0.0
        %1123 = vmatprep.subr.mxu0 0.0
        %1124 = vmatpush1.xpose.msra.mxu0 0.0
        %1125 = vmatprep.subr.mxu0 0.0
        %1126 = vmatpush1.xpose.msra.mxu0 0.0
        %1127 = vmatprep.subr.mxu0 0.0
        %1128 = vmatpush1.xpose.msra.mxu0 0.0
        %1129 = vmatprep.subr.mxu0 0.0
        %1130 = vmatpush1.xpose.msra.mxu0 0.0
        %1131 = vmatprep.subr.mxu0 0.0
        %1132 = vmatpush1.xpose.msra.mxu0 0.0
        %1133 = vmatprep.subr.mxu0 0.0
        %1134 = vmatpush1.xpose.msra.mxu0 0.0
        %1135 = vmatprep.subr.mxu0 0.0
        %1136 = vmatpush1.xpose.msra.mxu0 0.0
        %1137 = vmatprep.subr.mxu0 0.0
        %1138 = vmatpush1.xpose.msra.mxu0 0.0
        %1139 = vmatprep.subr.mxu0 0.0
        %1140 = vmatpush1.xpose.msra.mxu0 0.0
        %1141 = vmatprep.subr.mxu0 0.0
        %1142 = vmatpush1.xpose.msra.mxu0 0.0
        %1143 = vmatprep.subr.mxu0 0.0
        %1144 = vmatpush1.xpose.msra.mxu0 0.0
        %1145 = vmatprep.subr.mxu0 0.0
        %1146 = vmatpush1.xpose.msra.mxu0 0.0
        %1147 = vmatprep.subr.mxu0 0.0
        %1148 = vmatpush1.xpose.msra.mxu0 0.0
        %1149 = vmatprep.subr.mxu0 0.0
        %1150 = vmatpush1.xpose.msra.mxu0 0.0
        %1151 = vmatprep.subr.mxu0 0.0
        %1152 = vmatpush1.xpose.msra.mxu0 0.0
        %1153 = vmatprep.subr.mxu0 0.0
        %1154 = vmatpush1.xpose.msra.mxu0 0.0
        %1155 = vmatprep.subr.mxu0 0.0
        %1156 = vmatpush1.xpose.msra.mxu0 0.0
        %1157 = vmatprep.subr.mxu0 0.0
        %1158 = vmatpush1.xpose.msra.mxu0 0.0
        %1159 = vmatprep.subr.mxu0 0.0
        %1160 = vmatpush1.xpose.msra.mxu0 0.0
        %1161 = vmatprep.subr.mxu0 0.0
        %1162 = vmatpush1.xpose.msra.mxu0 0.0
        %1163 = vmatprep.subr.mxu0 0.0
        %1164 = vmatpush1.xpose.msra.mxu0 0.0
        %1165 = vmatprep.subr.mxu0 0.0
        %1166 = vmatpush1.xpose.msra.mxu0 0.0
        %1167 = vmatprep.mubr.f32.mxu0 0.0
        %1168 = vmatmul.mubr.f32.gmra.mrb[0].mxu0 %v1099
        %v1169 = vpop.f32.mrb[0].mxu0
        %v1170 = vadd.f32 0.0, %v1169
        %v1171 = vpop.f32.mrb[0].mxu0
        %1172 = vdwg.mxu0
        %v1173 = vmul.f32 %v1170, 0.35355338
        %v1174 = vadd.f32 %v1173, %v838
        %v1175 = vsel %vm758, %v1174, -inf
        %1176 = vmax.xlane.f32.xlu0 %v1175
        %v1177 = vpop.xlane.xlu0 %1176
        %v1178 = vsub.f32 %v1174, %v1177
        %v1179 = vmul.f32 %v1178, 1.442695
        %v1180 = vpow.pop %v1179
        %v1181 = vsel %vm758, %v1180, 0.0
        %1182 = vadd.xlane.f32.xlu0 %v1181
        %v1183 = vpop.xlane.xlu0 %1182
        %v1184 = vrcp.pop %v1183
        %v1185 = vmul.f32 %v1180, %v1184
        %1186 = vrot.lane.b32.xlu0 %v752, 48
        %v1187 = vpop.permute.xlu0 %1186
        %v1190 = vsel %vm758, %v1185, 0
        %1192 = vmatprep.subr.mxu0 0.0
        %1193 = vmatpush1.msra.mxu0 %v1187
        %1194 = vmatprep.subr.mxu0 0.0
        %1195 = vmatpush1.msra.mxu0 0.0
        %1196 = vmatprep.subr.mxu0 0.0
        %1197 = vmatpush1.msra.mxu0 0.0
        %1198 = vmatprep.subr.mxu0 0.0
        %1199 = vmatpush1.msra.mxu0 0.0
        %1200 = vmatprep.subr.mxu0 0.0
        %1201 = vmatpush1.msra.mxu0 0.0
        %1202 = vmatprep.subr.mxu0 0.0
        %1203 = vmatpush1.msra.mxu0 0.0
        %1204 = vmatprep.subr.mxu0 0.0
        %1205 = vmatpush1.msra.mxu0 0.0
        %1206 = vmatprep.subr.mxu0 0.0
        %1207 = vmatpush1.msra.mxu0 0.0
        %1208 = vmatprep.subr.mxu0 0.0
        %1209 = vmatpush1.msra.mxu0 0.0
        %1210 = vmatprep.subr.mxu0 0.0
        %1211 = vmatpush1.msra.mxu0 0.0
        %1212 = vmatprep.subr.mxu0 0.0
        %1213 = vmatpush1.msra.mxu0 0.0
        %1214 = vmatprep.subr.mxu0 0.0
        %1215 = vmatpush1.msra.mxu0 0.0
        %1216 = vmatprep.subr.mxu0 0.0
        %1217 = vmatpush1.msra.mxu0 0.0
        %1218 = vmatprep.subr.mxu0 0.0
        %1219 = vmatpush1.msra.mxu0 0.0
        %1220 = vmatprep.subr.mxu0 0.0
        %1221 = vmatpush1.msra.mxu0 0.0
        %1222 = vmatprep.subr.mxu0 0.0
        %1223 = vmatpush1.msra.mxu0 0.0
        %1224 = vmatprep.subr.mxu0 0.0
        %1225 = vmatpush1.msra.mxu0 0.0
        %1226 = vmatprep.subr.mxu0 0.0
        %1227 = vmatpush1.msra.mxu0 0.0
        %1228 = vmatprep.subr.mxu0 0.0
        %1229 = vmatpush1.msra.mxu0 0.0
        %1230 = vmatprep.subr.mxu0 0.0
        %1231 = vmatpush1.msra.mxu0 0.0
        %1232 = vmatprep.subr.mxu0 0.0
        %1233 = vmatpush1.msra.mxu0 0.0
        %1234 = vmatprep.subr.mxu0 0.0
        %1235 = vmatpush1.msra.mxu0 0.0
        %1236 = vmatprep.subr.mxu0 0.0
        %1237 = vmatpush1.msra.mxu0 0.0
        %1238 = vmatprep.subr.mxu0 0.0
        %1239 = vmatpush1.msra.mxu0 0.0
        %1240 = vmatprep.subr.mxu0 0.0
        %1241 = vmatpush1.msra.mxu0 0.0
        %1242 = vmatprep.subr.mxu0 0.0
        %1243 = vmatpush1.msra.mxu0 0.0
        %1244 = vmatprep.subr.mxu0 0.0
        %1245 = vmatpush1.msra.mxu0 0.0
        %1246 = vmatprep.subr.mxu0 0.0
        %1247 = vmatpush1.msra.mxu0 0.0
        %1248 = vmatprep.subr.mxu0 0.0
        %1249 = vmatpush1.msra.mxu0 0.0
        %1250 = vmatprep.subr.mxu0 0.0
        %1251 = vmatpush1.msra.mxu0 0.0
        %1252 = vmatprep.subr.mxu0 0.0
        %1253 = vmatpush1.msra.mxu0 0.0
        %1254 = vmatprep.subr.mxu0 0.0
        %1255 = vmatpush1.msra.mxu0 0.0
        %1256 = vmatprep.mubr.f32.mxu0 0.0
        %1257 = vmatmul.mubr.f32.gmra.mrb[0].mxu0 %v1190
        %v1258 = vpop.f32.mrb[0].mxu0
        %v1259 = vadd.f32 0.0, %v1258
        %v1260 = vpop.f32.mrb[0].mxu0
        %1261 = vdwg.mxu0
        %1262 = vrot.lane.b32.xlu0 %v752, 104
        %v1263 = vpop.permute.xlu0 %1262
        %1264 = vrot.lane.b32.xlu0 %v752, 72
        %v1265 = vpop.permute.xlu0 %1264
        %v1266 = vsel %vm758, %v1263, 0
        %v1268 = vsel %vm758, %v1265, 0
        %1270 = vmatprep.subr.mxu0 0.0
        %1271 = vmatpush1.xpose.msra.mxu0 %v1268
        %1272 = vmatprep.subr.mxu0 0.0
        %1273 = vmatpush1.xpose.msra.mxu0 0.0
        %1274 = vmatprep.subr.mxu0 0.0
        %1275 = vmatpush1.xpose.msra.mxu0 0.0
        %1276 = vmatprep.subr.mxu0 0.0
        %1277 = vmatpush1.xpose.msra.mxu0 0.0
        %1278 = vmatprep.subr.mxu0 0.0
        %1279 = vmatpush1.xpose.msra.mxu0 0.0
        %1280 = vmatprep.subr.mxu0 0.0
        %1281 = vmatpush1.xpose.msra.mxu0 0.0
        %1282 = vmatprep.subr.mxu0 0.0
        %1283 = vmatpush1.xpose.msra.mxu0 0.0
        %1284 = vmatprep.subr.mxu0 0.0
        %1285 = vmatpush1.xpose.msra.mxu0 0.0
        %1286 = vmatprep.subr.mxu0 0.0
        %1287 = vmatpush1.xpose.msra.mxu0 0.0
        %1288 = vmatprep.subr.mxu0 0.0
        %1289 = vmatpush1.xpose.msra.mxu0 0.0
        %1290 = vmatprep.subr.mxu0 0.0
        %1291 = vmatpush1.xpose.msra.mxu0 0.0
        %1292 = vmatprep.subr.mxu0 0.0
        %1293 = vmatpush1.xpose.msra.mxu0 0.0
        %1294 = vmatprep.subr.mxu0 0.0
        %1295 = vmatpush1.xpose.msra.mxu0 0.0
        %1296 = vmatprep.subr.mxu0 0.0
        %1297 = vmatpush1.xpose.msra.mxu0 0.0
        %1298 = vmatprep.subr.mxu0 0.0
        %1299 = vmatpush1.xpose.msra.mxu0 0.0
        %1300 = vmatprep.subr.mxu0 0.0
        %1301 = vmatpush1.xpose.msra.mxu0 0.0
        %1302 = vmatprep.subr.mxu0 0.0
        %1303 = vmatpush1.xpose.msra.mxu0 0.0
        %1304 = vmatprep.subr.mxu0 0.0
        %1305 = vmatpush1.xpose.msra.mxu0 0.0
        %1306 = vmatprep.subr.mxu0 0.0
        %1307 = vmatpush1.xpose.msra.mxu0 0.0
        %1308 = vmatprep.subr.mxu0 0.0
        %1309 = vmatpush1.xpose.msra.mxu0 0.0
        %1310 = vmatprep.subr.mxu0 0.0
        %1311 = vmatpush1.xpose.msra.mxu0 0.0
        %1312 = vmatprep.subr.mxu0 0.0
        %1313 = vmatpush1.xpose.msra.mxu0 0.0
        %1314 = vmatprep.subr.mxu0 0.0
        %1315 = vmatpush1.xpose.msra.mxu0 0.0
        %1316 = vmatprep.subr.mxu0 0.0
        %1317 = vmatpush1.xpose.msra.mxu0 0.0
        %1318 = vmatprep.subr.mxu0 0.0
        %1319 = vmatpush1.xpose.msra.mxu0 0.0
        %1320 = vmatprep.subr.mxu0 0.0
        %1321 = vmatpush1.xpose.msra.mxu0 0.0
        %1322 = vmatprep.subr.mxu0 0.0
        %1323 = vmatpush1.xpose.msra.mxu0 0.0
        %1324 = vmatprep.subr.mxu0 0.0
        %1325 = vmatpush1.xpose.msra.mxu0 0.0
        %1326 = vmatprep.subr.mxu0 0.0
        %1327 = vmatpush1.xpose.msra.mxu0 0.0
        %1328 = vmatprep.subr.mxu0 0.0
        %1329 = vmatpush1.xpose.msra.mxu0 0.0
        %1330 = vmatprep.subr.mxu0 0.0
        %1331 = vmatpush1.xpose.msra.mxu0 0.0
        %1332 = vmatprep.subr.mxu0 0.0
        %1333 = vmatpush1.xpose.msra.mxu0 0.0
        %1334 = vmatprep.mubr.f32.mxu0 0.0
        %1335 = vmatmul.mubr.f32.gmra.mrb[0].mxu0 %v1266
        %v1336 = vpop.f32.mrb[0].mxu0
        %v1337 = vadd.f32 0.0, %v1336
        %v1338 = vpop.f32.mrb[0].mxu0
        %1339 = vdwg.mxu0
        %v1340 = vmul.f32 %v1337, 0.35355338
        %v1341 = vadd.f32 %v1340, %v838
        %v1342 = vsel %vm758, %v1341, -inf
        %1343 = vmax.xlane.f32.xlu0 %v1342
        %v1344 = vpop.xlane.xlu0 %1343
        %v1345 = vsub.f32 %v1341, %v1344
        %v1346 = vmul.f32 %v1345, 1.442695
        %v1347 = vpow.pop %v1346
        %v1348 = vsel %vm758, %v1347, 0.0
        %1349 = vadd.xlane.f32.xlu0 %v1348
        %v1350 = vpop.xlane.xlu0 %1349
        %v1351 = vrcp.pop %v1350
        %v1352 = vmul.f32 %v1347, %v1351
        %1353 = vrot.lane.b32.xlu0 %v752, 40
        %v1354 = vpop.permute.xlu0 %1353
        %v1357 = vsel %vm758, %v1352, 0
        %1359 = vmatprep.subr.mxu0 0.0
        %1360 = vmatpush1.msra.mxu0 %v1354
        %1361 = vmatprep.subr.mxu0 0.0
        %1362 = vmatpush1.msra.mxu0 0.0
        %1363 = vmatprep.subr.mxu0 0.0
        %1364 = vmatpush1.msra.mxu0 0.0
        %1365 = vmatprep.subr.mxu0 0.0
        %1366 = vmatpush1.msra.mxu0 0.0
        %1367 = vmatprep.subr.mxu0 0.0
        %1368 = vmatpush1.msra.mxu0 0.0
        %1369 = vmatprep.subr.mxu0 0.0
        %1370 = vmatpush1.msra.mxu0 0.0
        %1371 = vmatprep.subr.mxu0 0.0
        %1372 = vmatpush1.msra.mxu0 0.0
        %1373 = vmatprep.subr.mxu0 0.0
        %1374 = vmatpush1.msra.mxu0 0.0
        %1375 = vmatprep.subr.mxu0 0.0
        %1376 = vmatpush1.msra.mxu0 0.0
        %1377 = vmatprep.subr.mxu0 0.0
        %1378 = vmatpush1.msra.mxu0 0.0
        %1379 = vmatprep.subr.mxu0 0.0
        %1380 = vmatpush1.msra.mxu0 0.0
        %1381 = vmatprep.subr.mxu0 0.0
        %1382 = vmatpush1.msra.mxu0 0.0
        %1383 = vmatprep.subr.mxu0 0.0
        %1384 = vmatpush1.msra.mxu0 0.0
        %1385 = vmatprep.subr.mxu0 0.0
        %1386 = vmatpush1.msra.mxu0 0.0
        %1387 = vmatprep.subr.mxu0 0.0
        %1388 = vmatpush1.msra.mxu0 0.0
        %1389 = vmatprep.subr.mxu0 0.0
        %1390 = vmatpush1.msra.mxu0 0.0
        %1391 = vmatprep.subr.mxu0 0.0
        %1392 = vmatpush1.msra.mxu0 0.0
        %1393 = vmatprep.subr.mxu0 0.0
        %1394 = vmatpush1.msra.mxu0 0.0
        %1395 = vmatprep.subr.mxu0 0.0
        %1396 = vmatpush1.msra.mxu0 0.0
        %1397 = vmatprep.subr.mxu0 0.0
        %1398 = vmatpush1.msra.mxu0 0.0
        %1399 = vmatprep.subr.mxu0 0.0
        %1400 = vmatpush1.msra.mxu0 0.0
        %1401 = vmatprep.subr.mxu0 0.0
        %1402 = vmatpush1.msra.mxu0 0.0
        %1403 = vmatprep.subr.mxu0 0.0
        %1404 = vmatpush1.msra.mxu0 0.0
        %1405 = vmatprep.subr.mxu0 0.0
        %1406 = vmatpush1.msra.mxu0 0.0
        %1407 = vmatprep.subr.mxu0 0.0
        %1408 = vmatpush1.msra.mxu0 0.0
        %1409 = vmatprep.subr.mxu0 0.0
        %1410 = vmatpush1.msra.mxu0 0.0
        %1411 = vmatprep.subr.mxu0 0.0
        %1412 = vmatpush1.msra.mxu0 0.0
        %1413 = vmatprep.subr.mxu0 0.0
        %1414 = vmatpush1.msra.mxu0 0.0
        %1415 = vmatprep.subr.mxu0 0.0
        %1416 = vmatpush1.msra.mxu0 0.0
        %1417 = vmatprep.subr.mxu0 0.0
        %1418 = vmatpush1.msra.mxu0 0.0
        %1419 = vmatprep.subr.mxu0 0.0
        %1420 = vmatpush1.msra.mxu0 0.0
        %1421 = vmatprep.subr.mxu0 0.0
        %1422 = vmatpush1.msra.mxu0 0.0
        %1423 = vmatprep.mubr.f32.mxu0 0.0
        %1424 = vmatmul.mubr.f32.gmra.mrb[0].mxu0 %v1357
        %v1425 = vpop.f32.mrb[0].mxu0
        %v1426 = vadd.f32 0.0, %v1425
        %v1427 = vpop.f32.mrb[0].mxu0
        %1428 = vdwg.mxu0
        %1430 = vrot.lane.b32.xlu0 %v1092, 8
        %v1431 = vpop.permute.xlu0 %1430
        %1434 = vrot.lane.b32.xlu0 %v1259, 16
        %v1435 = vpop.permute.xlu0 %1434
        %1438 = vrot.lane.b32.xlu0 %v1426, 24
        %v1439 = vpop.permute.xlu0 %1438
        %v1441 = vsel %vm758, %v925, %v1431
        %vm1442 = vcmask 130048
        %v1443 = vsel %vm1442, %v1441, %v1435
        %vm1444 = vcmask 195584
        %v1445 = vsel %vm1444, %v1443, %v1439
        %v1446 = vld [vmem:[%s6] sm:$0xff]
        %v1447 = vld [vmem:[%s6 + $0x8] sm:$0xff]
        %v1448 = vld [vmem:[%s6 + $0x10] sm:$0xff]
        %v1449 = vld [vmem:[%s6 + $0x18] sm:$0xff]
        %v1450 = vld [vmem:[%s7] sm:$0x1]
        %v1452 = vlaneseq
        %v1453 = vshrl.u32 %v1452, 7
        %v1454 = vsub.s32 0, %v1453
        %v1455 = vrot.slane %v1450, %v1454
        %v1458 = vsel %vm642, %v1445, 0
        %1460 = vmatprep.subr.mxu0 0.0
        %1461 = vmatpush1.msra.mxu0 %v1446
        %1462 = vmatprep.subr.mxu0 0.0
        %1463 = vmatpush1.msra.mxu0 %v1447
        %1464 = vmatprep.subr.mxu0 0.0
        %1465 = vmatpush1.msra.mxu0 %v1448
        %1466 = vmatprep.subr.mxu0 0.0
        %1467 = vmatpush1.msra.mxu0 %v1449
        %1468 = vmatprep.subr.mxu0 0.0
        %1469 = vmatpush1.msra.mxu0 0.0
        %1470 = vmatprep.subr.mxu0 0.0
        %1471 = vmatpush1.msra.mxu0 0.0
        %1472 = vmatprep.subr.mxu0 0.0
        %1473 = vmatpush1.msra.mxu0 0.0
        %1474 = vmatprep.subr.mxu0 0.0
        %1475 = vmatpush1.msra.mxu0 0.0
        %1476 = vmatprep.subr.mxu0 0.0
        %1477 = vmatpush1.msra.mxu0 0.0
        %1478 = vmatprep.subr.mxu0 0.0
        %1479 = vmatpush1.msra.mxu0 0.0
        %1480 = vmatprep.subr.mxu0 0.0
        %1481 = vmatpush1.msra.mxu0 0.0
        %1482 = vmatprep.subr.mxu0 0.0
        %1483 = vmatpush1.msra.mxu0 0.0
        %1484 = vmatprep.subr.mxu0 0.0
        %1485 = vmatpush1.msra.mxu0 0.0
        %1486 = vmatprep.subr.mxu0 0.0
        %1487 = vmatpush1.msra.mxu0 0.0
        %1488 = vmatprep.subr.mxu0 0.0
        %1489 = vmatpush1.msra.mxu0 0.0
        %1490 = vmatprep.subr.mxu0 0.0
        %1491 = vmatpush1.msra.mxu0 0.0
        %1492 = vmatprep.subr.mxu0 0.0
        %1493 = vmatpush1.msra.mxu0 0.0
        %1494 = vmatprep.subr.mxu0 0.0
        %1495 = vmatpush1.msra.mxu0 0.0
        %1496 = vmatprep.subr.mxu0 0.0
        %1497 = vmatpush1.msra.mxu0 0.0
        %1498 = vmatprep.subr.mxu0 0.0
        %1499 = vmatpush1.msra.mxu0 0.0
        %1500 = vmatprep.subr.mxu0 0.0
        %1501 = vmatpush1.msra.mxu0 0.0
        %1502 = vmatprep.subr.mxu0 0.0
        %1503 = vmatpush1.msra.mxu0 0.0
        %1504 = vmatprep.subr.mxu0 0.0
        %1505 = vmatpush1.msra.mxu0 0.0
        %1506 = vmatprep.subr.mxu0 0.0
        %1507 = vmatpush1.msra.mxu0 0.0
        %1508 = vmatprep.subr.mxu0 0.0
        %1509 = vmatpush1.msra.mxu0 0.0
        %1510 = vmatprep.subr.mxu0 0.0
        %1511 = vmatpush1.msra.mxu0 0.0
        %1512 = vmatprep.subr.mxu0 0.0
        %1513 = vmatpush1.msra.mxu0 0.0
        %1514 = vmatprep.subr.mxu0 0.0
        %1515 = vmatpush1.msra.mxu0 0.0
        %1516 = vmatprep.subr.mxu0 0.0
        %1517 = vmatpush1.msra.mxu0 0.0
        %1518 = vmatprep.subr.mxu0 0.0
        %1519 = vmatpush1.msra.mxu0 0.0
        %1520 = vmatprep.subr.mxu0 0.0
        %1521 = vmatpush1.msra.mxu0 0.0
        %1522 = vmatprep.subr.mxu0 0.0
        %1523 = vmatpush1.msra.mxu0 0.0
        %1524 = vmatprep.mubr.f32.mxu0 0.0
        %1525 = vmatmul.mubr.f32.gmra.mrb[0].mxu0 %v1458
        %v1526 = vpop.f32.mrb[0].mxu0
        %v1527 = vadd.f32 %v1455, %v1526
        %v1528 = vpop.f32.mrb[0].mxu0
        %1529 = vdwg.mxu0
        %v1530 = vadd.f32 %v1527, %v670
        %v1531 = vld [vmem:[%s8] sm:$0x1]
        %v1532 = vld [vmem:[%s9] sm:$0x1]
        %v1533 = vsel %vm642, %v1530, 0.0
        %1534 = vadd.xlane.f32.xlu0 %v1533
        %v1535 = vpop.xlane.xlu0 %1534
        %v1536 = vmul.f32 %v1535, %v646
        %v1537 = vsub.f32 %v1530, %v1536
        %v1538 = vmul.f32 %v1537, %v1537
        %v1539 = vsel %vm642, %v1538, 0.0
        %1540 = vadd.xlane.f32.xlu0 %v1539
        %v1541 = vpop.xlane.xlu0 %1540
        %v1542 = vmul.f32 %v1541, %v646
        %v1543 = vadd.f32 %v1542, 1e-12
        %v1544 = vrsqrt.pop %v1543
        %v1545 = vmul.f32 %v1537, %v1544
        %v1547 = vlaneseq
        %v1548 = vshrl.u32 %v1547, 7
        %v1549 = vsub.s32 0, %v1548
        %v1550 = vrot.slane %v1531, %v1549
        %v1552 = vmul.f32 %v1545, %v1550
        %v1554 = vlaneseq
        %v1555 = vshrl.u32 %v1554, 7
        %v1556 = vsub.s32 0, %v1555
        %v1557 = vrot.slane %v1532, %v1556
        %v1559 = vadd.f32 %v1552, %v1557
        %v1560 = vld [vmem:[%s10] sm:$0xff]
        %v1561 = vld [vmem:[%s10 + $0x8] sm:$0xff]
        %v1562 = vld [vmem:[%s10 + $0x10] sm:$0xff]
        %v1563 = vld [vmem:[%s10 + $0x18] sm:$0xff]
        %v1564 = vld [vmem:[%s11] sm:$0x1]
        %v1566 = vlaneseq
        %v1567 = vshrl.u32 %v1566, 7
        %v1568 = vsub.s32 0, %v1567
        %v1569 = vrot.slane %v1564, %v1568
        %v1572 = vsel %vm642, %v1559, 0
        %1574 = vmatprep.subr.mxu0 0.0
        %1575 = vmatpush1.msra.mxu0 %v1560
        %1576 = vmatprep.subr.mxu0 0.0
        %1577 = vmatpush1.msra.mxu0 %v1561
        %1578 = vmatprep.subr.mxu0 0.0
        %1579 = vmatpush1.msra.mxu0 %v1562
        %1580 = vmatprep.subr.mxu0 0.0
        %1581 = vmatpush1.msra.mxu0 %v1563
        %1582 = vmatprep.subr.mxu0 0.0
        %1583 = vmatpush1.msra.mxu0 0.0
        %1584 = vmatprep.subr.mxu0 0.0
        %1585 = vmatpush1.msra.mxu0 0.0
        %1586 = vmatprep.subr.mxu0 0.0
        %1587 = vmatpush1.msra.mxu0 0.0
        %1588 = vmatprep.subr.mxu0 0.0
        %1589 = vmatpush1.msra.mxu0 0.0
        %1590 = vmatprep.subr.mxu0 0.0
        %1591 = vmatpush1.msra.mxu0 0.0
        %1592 = vmatprep.subr.mxu0 0.0
        %1593 = vmatpush1.msra.mxu0 0.0
        %1594 = vmatprep.subr.mxu0 0.0
        %1595 = vmatpush1.msra.mxu0 0.0
        %1596 = vmatprep.subr.mxu0 0.0
        %1597 = vmatpush1.msra.mxu0 0.0
        %1598 = vmatprep.subr.mxu0 0.0
        %1599 = vmatpush1.msra.mxu0 0.0
        %1600 = vmatprep.subr.mxu0 0.0
        %1601 = vmatpush1.msra.mxu0 0.0
        %1602 = vmatprep.subr.mxu0 0.0
        %1603 = vmatpush1.msra.mxu0 0.0
        %1604 = vmatprep.subr.mxu0 0.0
        %1605 = vmatpush1.msra.mxu0 0.0
        %1606 = vmatprep.subr.mxu0 0.0
        %1607 = vmatpush1.msra.mxu0 0.0
        %1608 = vmatprep.subr.mxu0 0.0
        %1609 = vmatpush1.msra.mxu0 0.0
        %1610 = vmatprep.subr.mxu0 0.0
        %1611 = vmatpush1.msra.mxu0 0.0
        %1612 = vmatprep.subr.mxu0 0.0
        %1613 = vmatpush1.msra.mxu0 0.0
        %1614 = vmatprep.subr.mxu0 0.0
        %1615 = vmatpush1.msra.mxu0 0.0
        %1616 = vmatprep.subr.mxu0 0.0
        %1617 = vmatpush1.msra.mxu0 0.0
        %1618 = vmatprep.subr.mxu0 0.0
        %1619 = vmatpush1.msra.mxu0 0.0
        %1620 = vmatprep.subr.mxu0 0.0
        %1621 = vmatpush1.msra.mxu0 0.0
        %1622 = vmatprep.subr.mxu0 0.0
        %1623 = vmatpush1.msra.mxu0 0.0
        %1624 = vmatprep.subr.mxu0 0.0
        %1625 = vmatpush1.msra.mxu0 0.0
        %1626 = vmatprep.subr.mxu0 0.0
        %1627 = vmatpush1.msra.mxu0 0.0
        %1628 = vmatprep.subr.mxu0 0.0
        %1629 = vmatpush1.msra.mxu0 0.0
        %1630 = vmatprep.subr.mxu0 0.0
        %1631 = vmatpush1.msra.mxu0 0.0
        %1632 = vmatprep.subr.mxu0 0.0
        %1633 = vmatpush1.msra.mxu0 0.0
        %1634 = vmatprep.subr.mxu0 0.0
        %1635 = vmatpush1.msra.mxu0 0.0
        %1636 = vmatprep.subr.mxu0 0.0
        %1637 = vmatpush1.msra.mxu0 0.0
        %1638 = vmatprep.mubr.f32.mxu0 0.0
        %1639 = vmatmul.mubr.f32.gmra.mrb[0].mxu0 %v1572
        %v1640 = vpop.f32.mrb[0].mxu0
        %v1641 = vadd.f32 %v1569, %v1640
        %v1642 = vpop.f32.mrb[0].mxu0
        %1643 = vdwg.mxu0
        %v1644 = vmul.f32 %v1641, 0.5
        %v1645 = vmul.f32 %v1641, 0.044715
        %v1646 = vmul.f32 %v1645, %v1641
        %v1647 = vmul.f32 %v1646, %v1641
        %v1648 = vadd.f32 %v1641, %v1647
        %v1649 = vmul.f32 %v1648, 0.7978846
        %v1650 = vtanh.pop %v1649
        %v1651 = vadd.f32 %v1650, 1.0
        %v1652 = vmul.f32 %v1644, %v1651
        %v1653 = vld [vmem:[%s12] sm:$0xff]
        %v1654 = vld [vmem:[%s12 + $0x8] sm:$0xff]
        %v1655 = vld [vmem:[%s12 + $0x10] sm:$0xff]
        %v1656 = vld [vmem:[%s12 + $0x18] sm:$0xff]
        %v1657 = vld [vmem:[%s12 + $0x20] sm:$0xff]
        %v1658 = vld [vmem:[%s12 + $0x28] sm:$0xff]
        %v1659 = vld [vmem:[%s12 + $0x30] sm:$0xff]
        %v1660 = vld [vmem:[%s12 + $0x38] sm:$0xff]
        %v1661 = vld [vmem:[%s13] sm:$0x1]
        %v1663 = vlaneseq
        %v1664 = vshrl.u32 %v1663, 7
        %v1665 = vsub.s32 0, %v1664
        %v1666 = vrot.slane %v1661, %v1665
        %vm1668 = vcmask 523264
        %v1670 = vsel %vm1668, %v1652, 0
        %1672 = vmatprep.subr.mxu0 0.0
        %1673 = vmatpush1.msra.mxu0 %v1653
        %1674 = vmatprep.subr.mxu0 0.0
        %1675 = vmatpush1.msra.mxu0 %v1654
        %1676 = vmatprep.subr.mxu0 0.0
        %1677 = vmatpush1.msra.mxu0 %v1655
        %1678 = vmatprep.subr.mxu0 0.0
        %1679 = vmatpush1.msra.mxu0 %v1656
        %1680 = vmatprep.subr.mxu0 0.0
        %1681 = vmatpush1.msra.mxu0 %v1657
        %1682 = vmatprep.subr.mxu0 0.0
        %1683 = vmatpush1.msra.mxu0 %v1658
        %1684 = vmatprep.subr.mxu0 0.0
        %1685 = vmatpush1.msra.mxu0 %v1659
        %1686 = vmatprep.subr.mxu0 0.0
        %1687 = vmatpush1.msra.mxu0 %v1660
        %1688 = vmatprep.subr.mxu0 0.0
        %1689 = vmatpush1.msra.mxu0 0.0
        %1690 = vmatprep.subr.mxu0 0.0
        %1691 = vmatpush1.msra.mxu0 0.0
        %1692 = vmatprep.subr.mxu0 0.0
        %1693 = vmatpush1.msra.mxu0 0.0
        %1694 = vmatprep.subr.mxu0 0.0
        %1695 = vmatpush1.msra.mxu0 0.0
        %1696 = vmatprep.subr.mxu0 0.0
        %1697 = vmatpush1.msra.mxu0 0.0
        %1698 = vmatprep.subr.mxu0 0.0
        %1699 = vmatpush1.msra.mxu0 0.0
        %1700 = vmatprep.subr.mxu0 0.0
        %1701 = vmatpush1.msra.mxu0 0.0
        %1702 = vmatprep.subr.mxu0 0.0
        %1703 = vmatpush1.msra.mxu0 0.0
        %1704 = vmatprep.subr.mxu0 0.0
        %1705 = vmatpush1.msra.mxu0 0.0
        %1706 = vmatprep.subr.mxu0 0.0
        %1707 = vmatpush1.msra.mxu0 0.0
        %1708 = vmatprep.subr.mxu0 0.0
        %1709 = vmatpush1.msra.mxu0 0.0
        %1710 = vmatprep.subr.mxu0 0.0
        %1711 = vmatpush1.msra.mxu0 0.0
        %1712 = vmatprep.subr.mxu0 0.0
        %1713 = vmatpush1.msra.mxu0 0.0
        %1714 = vmatprep.subr.mxu0 0.0
        %1715 = vmatpush1.msra.mxu0 0.0
        %1716 = vmatprep.subr.mxu0 0.0
        %1717 = vmatpush1.msra.mxu0 0.0
        %1718 = vmatprep.subr.mxu0 0.0
        %1719 = vmatpush1.msra.mxu0 0.0
        %1720 = vmatprep.subr.mxu0 0.0
        %1721 = vmatpush1.msra.mxu0 0.0
        %1722 = vmatprep.subr.mxu0 0.0
        %1723 = vmatpush1.msra.mxu0 0.0
        %1724 = vmatprep.subr.mxu0 0.0
        %1725 = vmatpush1.msra.mxu0 0.0
        %1726 = vmatprep.subr.mxu0 0.0
        %1727 = vmatpush1.msra.mxu0 0.0
        %1728 = vmatprep.subr.mxu0 0.0
        %1729 = vmatpush1.msra.mxu0 0.0
        %1730 = vmatprep.subr.mxu0 0.0
        %1731 = vmatpush1.msra.mxu0 0.0
        %1732 = vmatprep.subr.mxu0 0.0
        %1733 = vmatpush1.msra.mxu0 0.0
        %1734 = vmatprep.subr.mxu0 0.0
        %1735 = vmatpush1.msra.mxu0 0.0
        %1736 = vmatprep.mubr.f32.mxu0 0.0
        %1737 = vmatmul.mubr.f32.gmra.mrb[0].mxu0 %v1670
        %v1738 = vpop.f32.mrb[0].mxu0
        %v1739 = vadd.f32 %v1666, %v1738
        %v1740 = vpop.f32.mrb[0].mxu0
        %1741 = vdwg.mxu0
        %v1742 = vadd.f32 %v1739, %v1559
        %v1743 = vld [vmem:[%s14] sm:$0x1]
        %v1744 = vld [vmem:[%s15] sm:$0x1]
        %v1745 = vsel %vm642, %v1742, 0.0
        %1746 = vadd.xlane.f32.xlu0 %v1745
        %v1747 = vpop.xlane.xlu0 %1746
        %v1748 = vmul.f32 %v1747, %v646
        %v1749 = vsub.f32 %v1742, %v1748
        %v1750 = vmul.f32 %v1749, %v1749
        %v1751 = vsel %vm642, %v1750, 0.0
        %1752 = vadd.xlane.f32.xlu0 %v1751
        %v1753 = vpop.xlane.xlu0 %1752
        %v1754 = vmul.f32 %v1753, %v646
        %v1755 = vadd.f32 %v1754, 1e-12
        %v1756 = vrsqrt.pop %v1755
        %v1757 = vmul.f32 %v1749, %v1756
        %v1759 = vlaneseq
        %v1760 = vshrl.u32 %v1759, 7
        %v1761 = vsub.s32 0, %v1760
        %v1762 = vrot.slane %v1743, %v1761
        %v1764 = vmul.f32 %v1757, %v1762
        %v1766 = vlaneseq
        %v1767 = vshrl.u32 %v1766, 7
        %v1768 = vsub.s32 0, %v1767
        %v1769 = vrot.slane %v1744, %v1768
        %v1771 = vadd.f32 %v1764, %v1769
        %s1772 = scalar_lea.vmem %s4, 32
        %v1773 = vld [vmem:[%s1772] sm:$0xff]
        %v1774 = vld [vmem:[%s1772 + $0x8] sm:$0xff]
        %v1775 = vld [vmem:[%s1772 + $0x10] sm:$0xff]
        %v1776 = vld [vmem:[%s1772 + $0x18] sm:$0xff]
        %s1777 = scalar_lea.vmem %s5, 1
        %v1778 = vld [vmem:[%s1777] sm:$0x1]
        %v1780 = vlaneseq
        %v1781 = vshrl.u32 %v1780, 7
        %v1782 = vsub.s32 0, %v1781
        %v1783 = vrot.slane %v1778, %v1782
        %v1786 = vsel %vm642, %v1771, 0
        %1788 = vmatprep.subr.mxu0 0.0
        %1789 = vmatpush1.msra.mxu0 %v1773
        %1790 = vmatprep.subr.mxu0 0.0
        %1791 = vmatpush1.msra.mxu0 %v1774
        %1792 = vmatprep.subr.mxu0 0.0
        %1793 = vmatpush1.msra.mxu0 %v1775
        %1794 = vmatprep.subr.mxu0 0.0
        %1795 = vmatpush1.msra.mxu0 %v1776
        %1796 = vmatprep.subr.mxu0 0.0
        %1797 = vmatpush1.msra.mxu0 0.0
        %1798 = vmatprep.subr.mxu0 0.0
        %1799 = vmatpush1.msra.mxu0 0.0
        %1800 = vmatprep.subr.mxu0 0.0
        %1801 = vmatpush1.msra.mxu0 0.0
        %1802 = vmatprep.subr.mxu0 0.0
        %1803 = vmatpush1.msra.mxu0 0.0
        %1804 = vmatprep.subr.mxu0 0.0
        %1805 = vmatpush1.msra.mxu0 0.0
        %1806 = vmatprep.subr.mxu0 0.0
        %1807 = vmatpush1.msra.mxu0 0.0
        %1808 = vmatprep.subr.mxu0 0.0
        %1809 = vmatpush1.msra.mxu0 0.0
        %1810 = vmatprep.subr.mxu0 0.0
        %1811 = vmatpush1.msra.mxu0 0.0
        %1812 = vmatprep.subr.mxu0 0.0
        %1813 = vmatpush1.msra.mxu0 0.0
        %1814 = vmatprep.subr.mxu0 0.0
        %1815 = vmatpush1.msra.mxu0 0.0
        %1816 = vmatprep.subr.mxu0 0.0
        %1817 = vmatpush1.msra.mxu0 0.0
        %1818 = vmatprep.subr.mxu0 0.0
        %1819 = vmatpush1.msra.mxu0 0.0
        %1820 = vmatprep.subr.mxu0 0.0
        %1821 = vmatpush1.msra.mxu0 0.0
        %1822 = vmatprep.subr.mxu0 0.0
        %1823 = vmatpush1.msra.mxu0 0.0
        %1824 = vmatprep.subr.mxu0 0.0
        %1825 = vmatpush1.msra.mxu0 0.0
        %1826 = vmatprep.subr.mxu0 0.0
        %1827 = vmatpush1.msra.mxu0 0.0
        %1828 = vmatprep.subr.mxu0 0.0
        %1829 = vmatpush1.msra.mxu0 0.0
        %1830 = vmatprep.subr.mxu0 0.0
        %1831 = vmatpush1.msra.mxu0 0.0
        %1832 = vmatprep.subr.mxu0 0.0
        %1833 = vmatpush1.msra.mxu0 0.0
        %1834 = vmatprep.subr.mxu0 0.0
        %1835 = vmatpush1.msra.mxu0 0.0
        %1836 = vmatprep.subr.mxu0 0.0
        %1837 = vmatpush1.msra.mxu0 0.0
        %1838 = vmatprep.subr.mxu0 0.0
        %1839 = vmatpush1.msra.mxu0 0.0
        %1840 = vmatprep.subr.mxu0 0.0
        %1841 = vmatpush1.msra.mxu0 0.0
        %1842 = vmatprep.subr.mxu0 0.0
        %1843 = vmatpush1.msra.mxu0 0.0
        %1844 = vmatprep.subr.mxu0 0.0
        %1845 = vmatpush1.msra.mxu0 0.0
        %1846 = vmatprep.subr.mxu0 0.0
        %1847 = vmatpush1.msra.mxu0 0.0
        %1848 = vmatprep.subr.mxu0 0.0
        %1849 = vmatpush1.msra.mxu0 0.0
        %1850 = vmatprep.subr.mxu0 0.0
        %1851 = vmatpush1.msra.mxu0 0.0
        %1852 = vmatprep.mubr.f32.mxu0 0.0
        %1853 = vmatmul.mubr.f32.gmra.mrb[0].mxu0 %v1786
        %v1854 = vpop.f32.mrb[0].mxu0
        %v1855 = vadd.f32 %v1783, %v1854
        %v1856 = vpop.f32.mrb[0].mxu0
        %1857 = vdwg.mxu0
        %1859 = vrot.lane.b32.xlu0 %v1855, 96
        %v1860 = vpop.permute.xlu0 %1859
        %v1861 = vsel %vm758, %v1855, 0
        %v1863 = vsel %vm758, %v1860, 0
        %1865 = vmatprep.subr.mxu0 0.0
        %1866 = vmatpush1.xpose.msra.mxu0 %v1863
        %1867 = vmatprep.subr.mxu0 0.0
        %1868 = vmatpush1.xpose.msra.mxu0 0.0
        %1869 = vmatprep.subr.mxu0 0.0
        %1870 = vmatpush1.xpose.msra.mxu0 0.0
        %1871 = vmatprep.subr.mxu0 0.0
        %1872 = vmatpush1.xpose.msra.mxu0 0.0
        %1873 = vmatprep.subr.mxu0 0.0
        %1874 = vmatpush1.xpose.msra.mxu0 0.0
        %1875 = vmatprep.subr.mxu0 0.0
        %1876 = vmatpush1.xpose.msra.mxu0 0.0
        %1877 = vmatprep.subr.mxu0 0.0
        %1878 = vmatpush1.xpose.msra.mxu0 0.0
        %1879 = vmatprep.subr.mxu0 0.0
        %1880 = vmatpush1.xpose.msra.mxu0 0.0
        %1881 = vmatprep.subr.mxu0 0.0
        %1882 = vmatpush1.xpose.msra.mxu0 0.0
        %1883 = vmatprep.subr.mxu0 0.0
        %1884 = vmatpush1.xpose.msra.mxu0 0.0
        %1885 = vmatprep.subr.mxu0 0.0
        %1886 = vmatpush1.xpose.msra.mxu0 0.0
        %1887 = vmatprep.subr.mxu0 0.0
        %1888 = vmatpush1.xpose.msra.mxu0 0.0
        %1889 = vmatprep.subr.mxu0 0.0
        %1890 = vmatpush1.xpose.msra.mxu0 0.0
        %1891 = vmatprep.subr.mxu0 0.0
        %1892 = vmatpush1.xpose.msra.mxu0 0.0
        %1893 = vmatprep.subr.mxu0 0.0
        %1894 = vmatpush1.xpose.msra.mxu0 0.0
        %1895 = vmatprep.subr.mxu0 0.0
        %1896 = vmatpush1.xpose.msra.mxu0 0.0
        %1897 = vmatprep.subr.mxu0 0.0
        %1898 = vmatpush1.xpose.msra.mxu0 0.0
        %1899 = vmatprep.subr.mxu0 0.0
        %1900 = vmatpush1.xpose.msra.mxu0 0.0
        %1901 = vmatprep.subr.mxu0 0.0
        %1902 = vmatpush1.xpose.msra.mxu0 0.0
        %1903 = vmatprep.subr.mxu0 0.0
        %1904 = vmatpush1.xpose.msra.mxu0 0.0
        %1905 = vmatprep.subr.mxu0 0.0
        %1906 = vmatpush1.xpose.msra.mxu0 0.0
        %1907 = vmatprep.subr.mxu0 0.0
        %1908 = vmatpush1.xpose.msra.mxu0 0.0
        %1909 = vmatprep.subr.mxu0 0.0
        %1910 = vmatpush1.xpose.msra.mxu0 0.0
        %1911 = vmatprep.subr.mxu0 0.0
        %1912 = vmatpush1.xpose.msra.mxu0 0.0
        %1913 = vmatprep.subr.mxu0 0.0
        %1914 = vmatpush1.xpose.msra.mxu0 0.0
        %1915 = vmatprep.subr.mxu0 0.0
        %1916 = vmatpush1.xpose.msra.mxu0 0.0
        %1917 = vmatprep.subr.mxu0 0.0
        %1918 = vmatpush1.xpose.msra.mxu0 0.0
        %1919 = vmatprep.subr.mxu0 0.0
        %1920 = vmatpush1.xpose.msra.mxu0 0.0
        %1921 = vmatprep.subr.mxu0 0.0
        %1922 = vmatpush1.xpose.msra.mxu0 0.0
        %1923 = vmatprep.subr.mxu0 0.0
        %1924 = vmatpush1.xpose.msra.mxu0 0.0
        %1925 = vmatprep.subr.mxu0 0.0
        %1926 = vmatpush1.xpose.msra.mxu0 0.0
        %1927 = vmatprep.subr.mxu0 0.0
        %1928 = vmatpush1.xpose.msra.mxu0 0.0
        %1929 = vmatprep.mubr.f32.mxu0 0.0
        %1930 = vmatmul.mubr.f32.gmra.mrb[0].mxu0 %v1861
        %v1931 = vpop.f32.mrb[0].mxu0
        %v1932 = vadd.f32 0.0, %v1931
        %v1933 = vpop.f32.mrb[0].mxu0
        %1934 = vdwg.mxu0
        %v1935 = vmul.f32 %v1932, 0.35355338
        %v1936 = vadd.f32 %v1935, %v838
        %v1937 = vsel %vm758, %v1936, -inf
        %1938 = vmax.xlane.f32.xlu0 %v1937
        %v1939 = vpop.xlane.xlu0 %1938
        %v1940 = vsub.f32 %v1936, %v1939
        %v1941 = vmul.f32 %v1940, 1.442695
        %v1942 = vpow.pop %v1941
        %v1943 = vsel %vm758, %v1942, 0.0
        %1944 = vadd.xlane.f32.xlu0 %v1943
        %v1945 = vpop.xlane.xlu0 %1944
        %v1946 = vrcp.pop %v1945
        %v1947 = vmul.f32 %v1942, %v1946
        %1948 = vrot.lane.b32.xlu0 %v1855, 64
        %v1949 = vpop.permute.xlu0 %1948
        %v1952 = vsel %vm758, %v1947, 0
        %1954 = vmatprep.subr.mxu0 0.0
        %1955 = vmatpush1.msra.mxu0 %v1949
        %1956 = vmatprep.subr.mxu0 0.0
        %1957 = vmatpush1.msra.mxu0 0.0
        %1958 = vmatprep.subr.mxu0 0.0
        %1959 = vmatpush1.msra.mxu0 0.0
        %1960 = vmatprep.subr.mxu0 0.0
        %1961 = vmatpush1.msra.mxu0 0.0
        %1962 = vmatprep.subr.mxu0 0.0
        %1963 = vmatpush1.msra.mxu0 0.0
        %1964 = vmatprep.subr.mxu0 0.0
        %1965 = vmatpush1.msra.mxu0 0.0
        %1966 = vmatprep.subr.mxu0 0.0
        %1967 = vmatpush1.msra.mxu0 0.0
        %1968 = vmatprep.subr.mxu0 0.0
        %1969 = vmatpush1.msra.mxu0 0.0
        %1970 = vmatprep.subr.mxu0 0.0
        %1971 = vmatpush1.msra.mxu0 0.0
        %1972 = vmatprep.subr.mxu0 0.0
        %1973 = vmatpush1.msra.mxu0 0.0
        %1974 = vmatprep.subr.mxu0 0.0
        %1975 = vmatpush1.msra.mxu0 0.0
        %1976 = vmatprep.subr.mxu0 0.0
        %1977 = vmatpush1.msra.mxu0 0.0
        %1978 = vmatprep.subr.mxu0 0.0
        %1979 = vmatpush1.msra.mxu0 0.0
        %1980 = vmatprep.subr.mxu0 0.0
        %1981 = vmatpush1.msra.mxu0 0.0
        %1982 = vmatprep.subr.mxu0 0.0
        %1983 = vmatpush1.msra.mxu0 0.0
        %1984 = vmatprep.subr.mxu0 0.0
        %1985 = vmatpush1.msra.mxu0 0.0
        %1986 = vmatprep.subr.mxu0 0.0
        %1987 = vmatpush1.msra.mxu0 0.0
        %1988 = vmatprep.subr.mxu0 0.0
        %1989 = vmatpush1.msra.mxu0 0.0
        %1990 = vmatprep.subr.mxu0 0.0
        %1991 = vmatpush1.msra.mxu0 0.0
        %1992 = vmatprep.subr.mxu0 0.0
        %1993 = vmatpush1.msra.mxu0 0.0
        %1994 = vmatprep.subr.mxu0 0.0
        %1995 = vmatpush1.msra.mxu0 0.0
        %1996 = vmatprep.subr.mxu0 0.0
        %1997 = vmatpush1.msra.mxu0 0.0
        %1998 = vmatprep.subr.mxu0 0.0
        %1999 = vmatpush1.msra.mxu0 0.0
        %2000 = vmatprep.subr.mxu0 0.0
        %2001 = vmatpush1.msra.mxu0 0.0
        %2002 = vmatprep.subr.mxu0 0.0
        %2003 = vmatpush1.msra.mxu0 0.0
        %2004 = vmatprep.subr.mxu0 0.0
        %2005 = vmatpush1.msra.mxu0 0.0
        %2006 = vmatprep.subr.mxu0 0.0
        %2007 = vmatpush1.msra.mxu0 0.0
        %2008 = vmatprep.subr.mxu0 0.0
        %2009 = vmatpush1.msra.mxu0 0.0
        %2010 = vmatprep.subr.mxu0 0.0
        %2011 = vmatpush1.msra.mxu0 0.0
        %2012 = vmatprep.subr.mxu0 0.0
        %2013 = vmatpush1.msra.mxu0 0.0
        %2014 = vmatprep.subr.mxu0 0.0
        %2015 = vmatpush1.msra.mxu0 0.0
        %2016 = vmatprep.subr.mxu0 0.0
        %2017 = vmatpush1.msra.mxu0 0.0
        %2018 = vmatprep.mubr.f32.mxu0 0.0
        %2019 = vmatmul.mubr.f32.gmra.mrb[0].mxu0 %v1952
        %v2020 = vpop.f32.mrb[0].mxu0
        %v2021 = vadd.f32 0.0, %v2020
        %v2022 = vpop.f32.mrb[0].mxu0
        %2023 = vdwg.mxu0
        %2024 = vrot.lane.b32.xlu0 %v1855, 120
        %v2025 = vpop.permute.xlu0 %2024
        %2026 = vrot.lane.b32.xlu0 %v1855, 88
        %v2027 = vpop.permute.xlu0 %2026
        %v2028 = vsel %vm758, %v2025, 0
        %v2030 = vsel %vm758, %v2027, 0
        %2032 = vmatprep.subr.mxu0 0.0
        %2033 = vmatpush1.xpose.msra.mxu0 %v2030
        %2034 = vmatprep.subr.mxu0 0.0
        %2035 = vmatpush1.xpose.msra.mxu0 0.0
        %2036 = vmatprep.subr.mxu0 0.0
        %2037 = vmatpush1.xpose.msra.mxu0 0.0
        %2038 = vmatprep.subr.mxu0 0.0
        %2039 = vmatpush1.xpose.msra.mxu0 0.0
        %2040 = vmatprep.subr.mxu0 0.0
        %2041 = vmatpush1.xpose.msra.mxu0 0.0
        %2042 = vmatprep.subr.mxu0 0.0
        %2043 = vmatpush1.xpose.msra.mxu0 0.0
        %2044 = vmatprep.subr.mxu0 0.0
        %2045 = vmatpush1.xpose.msra.mxu0 0.0
        %2046 = vmatprep.subr.mxu0 0.0
        %2047 = vmatpush1.xpose.msra.mxu0 0.0
        %2048 = vmatprep.subr.mxu0 0.0
        %2049 = vmatpush1.xpose.msra.mxu0 0.0
        %2050 = vmatprep.subr.mxu0 0.0
        %2051 = vmatpush1.xpose.msra.mxu0 0.0
        %2052 = vmatprep.subr.mxu0 0.0
        %2053 = vmatpush1.xpose.msra.mxu0 0.0
        %2054 = vmatprep.subr.mxu0 0.0
        %2055 = vmatpush1.xpose.msra.mxu0 0.0
        %2056 = vmatprep.subr.mxu0 0.0
        %2057 = vmatpush1.xpose.msra.mxu0 0.0
        %2058 = vmatprep.subr.mxu0 0.0
        %2059 = vmatpush1.xpose.msra.mxu0 0.0
        %2060 = vmatprep.subr.mxu0 0.0
        %2061 = vmatpush1.xpose.msra.mxu0 0.0
        %2062 = vmatprep.subr.mxu0 0.0
        %2063 = vmatpush1.xpose.msra.mxu0 0.0
        %2064 = vmatprep.subr.mxu0 0.0
        %2065 = vmatpush1.xpose.msra.mxu0 0.0
        %2066 = vmatprep.subr.mxu0 0.0
        %2067 = vmatpush1.xpose.msra.mxu0 0.0
        %2068 = vmatprep.subr.mxu0 0.0
        %2069 = vmatpush1.xpose.msra.mxu0 0.0
        %2070 = vmatprep.subr.mxu0 0.0
        %2071 = vmatpush1.xpose.msra.mxu0 0.0
        %2072 = vmatprep.subr.mxu0 0.0
        %2073 = vmatpush1.xpose.msra.mxu0 0.0
        %2074 = vmatprep.subr.mxu0 0.0
        %2075 = vmatpush1.xpose.msra.mxu0 0.0
        %2076 = vmatprep.subr.mxu0 0.0
        %2077 = vmatpush1.xpose.msra.mxu0 0.0
        %2078 = vmatprep.subr.mxu0 0.0
        %2079 = vmatpush1.xpose.msra.mxu0 0.0
        %2080 = vmatprep.subr.mxu0 0.0
        %2081 = vmatpush1.xpose.msra.mxu0 0.0
        %2082 = vmatprep.subr.mxu0 0.0
        %2083 = vmatpush1.xpose.msra.mxu0 0.0
        %2084 = vmatprep.subr.mxu0 0.0
        %2085 = vmatpush1.xpose.msra.mxu0 0.0
        %2086 = vmatprep.subr.mxu0 0.0
        %2087 = vmatpush1.xpose.msra.mxu0 0.0
        %2088 = vmatprep.subr.mxu0 0.0
        %2089 = vmatpush1.xpose.msra.mxu0 0.0
        %2090 = vmatprep.subr.mxu0 0.0
        %2091 = vmatpush1.xpose.msra.mxu0 0.0
        %2092 = vmatprep.subr.mxu0 0.0
        %2093 = vmatpush1.xpose.msra.mxu0 0.0
        %2094 = vmatprep.subr.mxu0 0.0
        %2095 = vmatpush1.xpose.msra.mxu0 0.0
        %2096 = vmatprep.mubr.f32.mxu0 0.0
        %2097 = vmatmul.mubr.f32.gmra.mrb[0].mxu0 %v2028
        %v2098 = vpop.f32.mrb[0].mxu0
        %v2099 = vadd.f32 0.0, %v2098
        %v2100 = vpop.f32.mrb[0].mxu0
        %2101 = vdwg.mxu0
        %v2102 = vmul.f32 %v2099, 0.35355338
        %v2103 = vadd.f32 %v2102, %v838
        %v2104 = vsel %vm758, %v2103, -inf
        %2105 = vmax.xlane.f32.xlu0 %v2104
        %v2106 = vpop.xlane.xlu0 %2105
        %v2107 = vsub.f32 %v2103, %v2106
        %v2108 = vmul.f32 %v2107, 1.442695
        %v2109 = vpow.pop %v2108
        %v2110 = vsel %vm758, %v2109, 0.0
        %2111 = vadd.xlane.f32.xlu0 %v2110
        %v2112 = vpop.xlane.xlu0 %2111
        %v2113 = vrcp.pop %v2112
        %v2114 = vmul.f32 %v2109, %v2113
        %2115 = vrot.lane.b32.xlu0 %v1855, 56
        %v2116 = vpop.permute.xlu0 %2115
        %v2119 = vsel %vm758, %v2114, 0
        %2121 = vmatprep.subr.mxu0 0.0
        %2122 = vmatpush1.msra.mxu0 %v2116
        %2123 = vmatprep.subr.mxu0 0.0
        %2124 = vmatpush1.msra.mxu0 0.0
        %2125 = vmatprep.subr.mxu0 0.0
        %2126 = vmatpush1.msra.mxu0 0.0
        %2127 = vmatprep.subr.mxu0 0.0
        %2128 = vmatpush1.msra.mxu0 0.0
        %2129 = vmatprep.subr.mxu0 0.0
        %2130 = vmatpush1.msra.mxu0 0.0
        %2131 = vmatprep.subr.mxu0 0.0
        %2132 = vmatpush1.msra.mxu0 0.0
        %2133 = vmatprep.subr.mxu0 0.0
        %2134 = vmatpush1.msra.mxu0 0.0
        %2135 = vmatprep.subr.mxu0 0.0
        %2136 = vmatpush1.msra.mxu0 0.0
        %2137 = vmatprep.subr.mxu0 0.0
        %2138 = vmatpush1.msra.mxu0 0.0
        %2139 = vmatprep.subr.mxu0 0.0
        %2140 = vmatpush1.msra.mxu0 0.0
        %2141 = vmatprep.subr.mxu0 0.0
        %2142 = vmatpush1.msra.mxu0 0.0
        %2143 = vmatprep.subr.mxu0 0.0
        %2144 = vmatpush1.msra.mxu0 0.0
        %2145 = vmatprep.subr.mxu0 0.0
        %2146 = vmatpush1.msra.mxu0 0.0
        %2147 = vmatprep.subr.mxu0 0.0
        %2148 = vmatpush1.msra.mxu0 0.0
        %2149 = vmatprep.subr.mxu0 0.0
        %2150 = vmatpush1.msra.mxu0 0.0
        %2151 = vmatprep.subr.mxu0 0.0
        %2152 = vmatpush1.msra.mxu0 0.0
        %2153 = vmatprep.subr.mxu0 0.0
        %2154 = vmatpush1.msra.mxu0 0.0
        %2155 = vmatprep.subr.mxu0 0.0
        %2156 = vmatpush1.msra.mxu0 0.0
        %2157 = vmatprep.subr.mxu0 0.0
        %2158 = vmatpush1.msra.mxu0 0.0
        %2159 = vmatprep.subr.mxu0 0.0
        %2160 = vmatpush1.msra.mxu0 0.0
        %2161 = vmatprep.subr.mxu0 0.0
        %2162 = vmatpush1.msra.mxu0 0.0
        %2163 = vmatprep.subr.mxu0 0.0
        %2164 = vmatpush1.msra.mxu0 0.0
        %2165 = vmatprep.subr.mxu0 0.0
        %2166 = vmatpush1.msra.mxu0 0.0
        %2167 = vmatprep.subr.mxu0 0.0
        %2168 = vmatpush1.msra.mxu0 0.0
        %2169 = vmatprep.subr.mxu0 0.0
        %2170 = vmatpush1.msra.mxu0 0.0
        %2171 = vmatprep.subr.mxu0 0.0
        %2172 = vmatpush1.msra.mxu0 0.0
        %2173 = vmatprep.subr.mxu0 0.0
        %2174 = vmatpush1.msra.mxu0 0.0
        %2175 = vmatprep.subr.mxu0 0.0
        %2176 = vmatpush1.msra.mxu0 0.0
        %2177 = vmatprep.subr.mxu0 0.0
        %2178 = vmatpush1.msra.mxu0 0.0
        %2179 = vmatprep.subr.mxu0 0.0
        %2180 = vmatpush1.msra.mxu0 0.0
        %2181 = vmatprep.subr.mxu0 0.0
        %2182 = vmatpush1.msra.mxu0 0.0
        %2183 = vmatprep.subr.mxu0 0.0
        %2184 = vmatpush1.msra.mxu0 0.0
        %2185 = vmatprep.mubr.f32.mxu0 0.0
        %2186 = vmatmul.mubr.f32.gmra.mrb[0].mxu0 %v2119
        %v2187 = vpop.f32.mrb[0].mxu0
        %v2188 = vadd.f32 0.0, %v2187
        %v2189 = vpop.f32.mrb[0].mxu0
        %2190 = vdwg.mxu0
        %2191 = vrot.lane.b32.xlu0 %v1855, 112
        %v2192 = vpop.permute.xlu0 %2191
        %2193 = vrot.lane.b32.xlu0 %v1855, 80
        %v2194 = vpop.permute.xlu0 %2193
        %v2195 = vsel %vm758, %v2192, 0
        %v2197 = vsel %vm758, %v2194, 0
        %2199 = vmatprep.subr.mxu0 0.0
        %2200 = vmatpush1.xpose.msra.mxu0 %v2197
        %2201 = vmatprep.subr.mxu0 0.0
        %2202 = vmatpush1.xpose.msra.mxu0 0.0
        %2203 = vmatprep.subr.mxu0 0.0
        %2204 = vmatpush1.xpose.msra.mxu0 0.0
        %2205 = vmatprep.subr.mxu0 0.0
        %2206 = vmatpush1.xpose.msra.mxu0 0.0
        %2207 = vmatprep.subr.mxu0 0.0
        %2208 = vmatpush1.xpose.msra.mxu0 0.0
        %2209 = vmatprep.subr.mxu0 0.0
        %2210 = vmatpush1.xpose.msra.mxu0 0.0
        %2211 = vmatprep.subr.mxu0 0.0
        %2212 = vmatpush1.xpose.msra.mxu0 0.0
        %2213 = vmatprep.subr.mxu0 0.0
        %2214 = vmatpush1.xpose.msra.mxu0 0.0
        %2215 = vmatprep.subr.mxu0 0.0
        %2216 = vmatpush1.xpose.msra.mxu0 0.0
        %2217 = vmatprep.subr.mxu0 0.0
        %2218 = vmatpush1.xpose.msra.mxu0 0.0
        %2219 = vmatprep.subr.mxu0 0.0
        %2220 = vmatpush1.xpose.msra.mxu0 0.0
        %2221 = vmatprep.subr.mxu0 0.0
        %2222 = vmatpush1.xpose.msra.mxu0 0.0
        %2223 = vmatprep.subr.mxu0 0.0
        %2224 = vmatpush1.xpose.msra.mxu0 0.0
        %2225 = vmatprep.subr.mxu0 0.0
        %2226 = vmatpush1.xpose.msra.mxu0 0.0
        %2227 = vmatprep.subr.mxu0 0.0
        %2228 = vmatpush1.xpose.msra.mxu0 0.0
        %2229 = vmatprep.subr.mxu0 0.0
        %2230 = vmatpush1.xpose.msra.mxu0 0.0
        %2231 = vmatprep.subr.mxu0 0.0
        %2232 = vmatpush1.xpose.msra.mxu0 0.0
        %2233 = vmatprep.subr.mxu0 0.0
        %2234 = vmatpush1.xpose.msra.mxu0 0.0
        %2235 = vmatprep.subr.mxu0 0.0
        %2236 = vmatpush1.xpose.msra.mxu0 0.0
        %2237 = vmatprep.subr.mxu0 0.0
        %2238 = vmatpush1.xpose.msra.mxu0 0.0
        %2239 = vmatprep.subr.mxu0 0.0
        %2240 = vmatpush1.xpose.msra.mxu0 0.0
        %2241 = vmatprep.subr.mxu0 0.0
        %2242 = vmatpush1.xpose.msra.mxu0 0.0
        %2243 = vmatprep.subr.mxu0 0.0
        %2244 = vmatpush1.xpose.msra.mxu0 0.0
        %2245 = vmatprep.subr.mxu0 0.0
        %2246 = vmatpush1.xpose.msra.mxu0 0.0
        %2247 = vmatprep.subr.mxu0 0.0
        %2248 = vmatpush1.xpose.msra.mxu0 0.0
        %2249 = vmatprep.subr.mxu0 0.0
        %2250 = vmatpush1.xpose.msra.mxu0 0.0
        %2251 = vmatprep.subr.mxu0 0.0
        %2252 = vmatpush1.xpose.msra.mxu0 0.0
        %2253 = vmatprep.subr.mxu0 0.0
        %2254 = vmatpush1.xpose.msra.mxu0 0.0
        %2255 = vmatprep.subr.mxu0 0.0
        %2256 = vmatpush1.xpose.msra.mxu0 0.0
        %2257 = vmatprep.subr.mxu0 0.0
        %2258 = vmatpush1.xpose.msra.mxu0 0.0
        %2259 = vmatprep.subr.mxu0 0.0
        %2260 = vmatpush1.xpose.msra.mxu0 0.0
        %2261 = vmatprep.subr.mxu0 0.0
        %2262 = vmatpush1.xpose.msra.mxu0 0.0
        %2263 = vmatprep.mubr.f32.mxu0 0.0
        %2264 = vmatmul.mubr.f32.gmra.mrb[0].mxu0 %v2195
        %v2265 = vpop.f32.mrb[0].mxu0
        %v2266 = vadd.f32 0.0, %v2265
        %v2267 = vpop.f32.mrb[0].mxu0
        %2268 = vdwg.mxu0
        %v2269 = vmul.f32 %v2266, 0.35355338
        %v2270 = vadd.f32 %v2269, %v838
        %v2271 = vsel %vm758, %v2270, -inf
        %2272 = vmax.xlane.f32.xlu0 %v2271
        %v2273 = vpop.xlane.xlu0 %2272
        %v2274 = vsub.f32 %v2270, %v2273
        %v2275 = vmul.f32 %v2274, 1.442695
        %v2276 = vpow.pop %v2275
        %v2277 = vsel %vm758, %v2276, 0.0
        %2278 = vadd.xlane.f32.xlu0 %v2277
        %v2279 = vpop.xlane.xlu0 %2278
        %v2280 = vrcp.pop %v2279
        %v2281 = vmul.f32 %v2276, %v2280
        %2282 = vrot.lane.b32.xlu0 %v1855, 48
        %v2283 = vpop.permute.xlu0 %2282
        %v2286 = vsel %vm758, %v2281, 0
        %2288 = vmatprep.subr.mxu0 0.0
        %2289 = vmatpush1.msra.mxu0 %v2283
        %2290 = vmatprep.subr.mxu0 0.0
        %2291 = vmatpush1.msra.mxu0 0.0
        %2292 = vmatprep.subr.mxu0 0.0
        %2293 = vmatpush1.msra.mxu0 0.0
        %2294 = vmatprep.subr.mxu0 0.0
        %2295 = vmatpush1.msra.mxu0 0.0
        %2296 = vmatprep.subr.mxu0 0.0
        %2297 = vmatpush1.msra.mxu0 0.0
        %2298 = vmatprep.subr.mxu0 0.0
        %2299 = vmatpush1.msra.mxu0 0.0
        %2300 = vmatprep.subr.mxu0 0.0
        %2301 = vmatpush1.msra.mxu0 0.0
        %2302 = vmatprep.subr.mxu0 0.0
        %2303 = vmatpush1.msra.mxu0 0.0
        %2304 = vmatprep.subr.mxu0 0.0
        %2305 = vmatpush1.msra.mxu0 0.0
        %2306 = vmatprep.subr.mxu0 0.0
        %2307 = vmatpush1.msra.mxu0 0.0
        %2308 = vmatprep.subr.mxu0 0.0
        %2309 = vmatpush1.msra.mxu0 0.0
        %2310 = vmatprep.subr.mxu0 0.0
        %2311 = vmatpush1.msra.mxu0 0.0
        %2312 = vmatprep.subr.mxu0 0.0
        %2313 = vmatpush1.msra.mxu0 0.0
        %2314 = vmatprep.subr.mxu0 0.0
        %2315 = vmatpush1.msra.mxu0 0.0
        %2316 = vmatprep.subr.mxu0 0.0
        %2317 = vmatpush1.msra.mxu0 0.0
        %2318 = vmatprep.subr.mxu0 0.0
        %2319 = vmatpush1.msra.mxu0 0.0
        %2320 = vmatprep.subr.mxu0 0.0
        %2321 = vmatpush1.msra.mxu0 0.0
        %2322 = vmatprep.subr.mxu0 0.0
        %2323 = vmatpush1.msra.mxu0 0.0
        %2324 = vmatprep.subr.mxu0 0.0
        %2325 = vmatpush1.msra.mxu0 0.0
        %2326 = vmatprep.subr.mxu0 0.0
        %2327 = vmatpush1.msra.mxu0 0.0
        %2328 = vmatprep.subr.mxu0 0.0
        %2329 = vmatpush1.msra.mxu0 0.0
        %2330 = vmatprep.subr.mxu0 0.0
        %2331 = vmatpush1.msra.mxu0 0.0
        %2332 = vmatprep.subr.mxu0 0.0
        %2333 = vmatpush1.msra.mxu0 0.0
        %2334 = vmatprep.subr.mxu0 0.0
        %2335 = vmatpush1.msra.mxu0 0.0
        %2336 = vmatprep.subr.mxu0 0.0
        %2337 = vmatpush1.msra.mxu0 0.0
        %2338 = vmatprep.subr.mxu0 0.0
        %2339 = vmatpush1.msra.mxu0 0.0
        %2340 = vmatprep.subr.mxu0 0.0
        %2341 = vmatpush1.msra.mxu0 0.0
        %2342 = vmatprep.subr.mxu0 0.0
        %2343 = vmatpush1.msra.mxu0 0.0
        %2344 = vmatprep.subr.mxu0 0.0
        %2345 = vmatpush1.msra.mxu0 0.0
        %2346 = vmatprep.subr.mxu0 0.0
        %2347 = vmatpush1.msra.mxu0 0.0
        %2348 = vmatprep.subr.mxu0 0.0
        %2349 = vmatpush1.msra.mxu0 0.0
        %2350 = vmatprep.subr.mxu0 0.0
        %2351 = vmatpush1.msra.mxu0 0.0
        %2352 = vmatprep.mubr.f32.mxu0 0.0
        %2353 = vmatmul.mubr.f32.gmra.mrb[0].mxu0 %v2286
        %v2354 = vpop.f32.mrb[0].mxu0
        %v2355 = vadd.f32 0.0, %v2354
        %v2356 = vpop.f32.mrb[0].mxu0
        %2357 = vdwg.mxu0
        %2358 = vrot.lane.b32.xlu0 %v1855, 104
        %v2359 = vpop.permute.xlu0 %2358
        %2360 = vrot.lane.b32.xlu0 %v1855, 72
        %v2361 = vpop.permute.xlu0 %2360
        %v2362 = vsel %vm758, %v2359, 0
        %v2364 = vsel %vm758, %v2361, 0
        %2366 = vmatprep.subr.mxu0 0.0
        %2367 = vmatpush1.xpose.msra.mxu0 %v2364
        %2368 = vmatprep.subr.mxu0 0.0
        %2369 = vmatpush1.xpose.msra.mxu0 0.0
        %2370 = vmatprep.subr.mxu0 0.0
        %2371 = vmatpush1.xpose.msra.mxu0 0.0
        %2372 = vmatprep.subr.mxu0 0.0
        %2373 = vmatpush1.xpose.msra.mxu0 0.0
        %2374 = vmatprep.subr.mxu0 0.0
        %2375 = vmatpush1.xpose.msra.mxu0 0.0
        %2376 = vmatprep.subr.mxu0 0.0
        %2377 = vmatpush1.xpose.msra.mxu0 0.0
        %2378 = vmatprep.subr.mxu0 0.0
        %2379 = vmatpush1.xpose.msra.mxu0 0.0
        %2380 = vmatprep.subr.mxu0 0.0
        %2381 = vmatpush1.xpose.msra.mxu0 0.0
        %2382 = vmatprep.subr.mxu0 0.0
        %2383 = vmatpush1.xpose.msra.mxu0 0.0
        %2384 = vmatprep.subr.mxu0 0.0
        %2385 = vmatpush1.xpose.msra.mxu0 0.0
        %2386 = vmatprep.subr.mxu0 0.0
        %2387 = vmatpush1.xpose.msra.mxu0 0.0
        %2388 = vmatprep.subr.mxu0 0.0
        %2389 = vmatpush1.xpose.msra.mxu0 0.0
        %2390 = vmatprep.subr.mxu0 0.0
        %2391 = vmatpush1.xpose.msra.mxu0 0.0
        %2392 = vmatprep.subr.mxu0 0.0
        %2393 = vmatpush1.xpose.msra.mxu0 0.0
        %2394 = vmatprep.subr.mxu0 0.0
        %2395 = vmatpush1.xpose.msra.mxu0 0.0
        %2396 = vmatprep.subr.mxu0 0.0
        %2397 = vmatpush1.xpose.msra.mxu0 0.0
        %2398 = vmatprep.subr.mxu0 0.0
        %2399 = vmatpush1.xpose.msra.mxu0 0.0
        %2400 = vmatprep.subr.mxu0 0.0
        %2401 = vmatpush1.xpose.msra.mxu0 0.0
        %2402 = vmatprep.subr.mxu0 0.0
        %2403 = vmatpush1.xpose.msra.mxu0 0.0
        %2404 = vmatprep.subr.mxu0 0.0
        %2405 = vmatpush1.xpose.msra.mxu0 0.0
        %2406 = vmatprep.subr.mxu0 0.0
        %2407 = vmatpush1.xpose.msra.mxu0 0.0
        %2408 = vmatprep.subr.mxu0 0.0
        %2409 = vmatpush1.xpose.msra.mxu0 0.0
        %2410 = vmatprep.subr.mxu0 0.0
        %2411 = vmatpush1.xpose.msra.mxu0 0.0
        %2412 = vmatprep.subr.mxu0 0.0
        %2413 = vmatpush1.xpose.msra.mxu0 0.0
        %2414 = vmatprep.subr.mxu0 0.0
        %2415 = vmatpush1.xpose.msra.mxu0 0.0
        %2416 = vmatprep.subr.mxu0 0.0
        %2417 = vmatpush1.xpose.msra.mxu0 0.0
        %2418 = vmatprep.subr.mxu0 0.0
        %2419 = vmatpush1.xpose.msra.mxu0 0.0
        %2420 = vmatprep.subr.mxu0 0.0
        %2421 = vmatpush1.xpose.msra.mxu0 0.0
        %2422 = vmatprep.subr.mxu0 0.0
        %2423 = vmatpush1.xpose.msra.mxu0 0.0
        %2424 = vmatprep.subr.mxu0 0.0
        %2425 = vmatpush1.xpose.msra.mxu0 0.0
        %2426 = vmatprep.subr.mxu0 0.0
        %2427 = vmatpush1.xpose.msra.mxu0 0.0
        %2428 = vmatprep.subr.mxu0 0.0
        %2429 = vmatpush1.xpose.msra.mxu0 0.0
        %2430 = vmatprep.mubr.f32.mxu0 0.0
        %2431 = vmatmul.mubr.f32.gmra.mrb[0].mxu0 %v2362
        %v2432 = vpop.f32.mrb[0].mxu0
        %v2433 = vadd.f32 0.0, %v2432
        %v2434 = vpop.f32.mrb[0].mxu0
        %2435 = vdwg.mxu0
        %v2436 = vmul.f32 %v2433, 0.35355338
        %v2437 = vadd.f32 %v2436, %v838
        %v2438 = vsel %vm758, %v2437, -inf
        %2439 = vmax.xlane.f32.xlu0 %v2438
        %v2440 = vpop.xlane.xlu0 %2439
        %v2441 = vsub.f32 %v2437, %v2440
        %v2442 = vmul.f32 %v2441, 1.442695
        %v2443 = vpow.pop %v2442
        %v2444 = vsel %vm758, %v2443, 0.0
        %2445 = vadd.xlane.f32.xlu0 %v2444
        %v2446 = vpop.xlane.xlu0 %2445
        %v2447 = vrcp.pop %v2446
        %v2448 = vmul.f32 %v2443, %v2447
        %2449 = vrot.lane.b32.xlu0 %v1855, 40
        %v2450 = vpop.permute.xlu0 %2449
        %v2453 = vsel %vm758, %v2448, 0
        %2455 = vmatprep.subr.mxu0 0.0
        %2456 = vmatpush1.msra.mxu0 %v2450
        %2457 = vmatprep.subr.mxu0 0.0
        %2458 = vmatpush1.msra.mxu0 0.0
        %2459 = vmatprep.subr.mxu0 0.0
        %2460 = vmatpush1.msra.mxu0 0.0
        %2461 = vmatprep.subr.mxu0 0.0
        %2462 = vmatpush1.msra.mxu0 0.0
        %2463 = vmatprep.subr.mxu0 0.0
        %2464 = vmatpush1.msra.mxu0 0.0
        %2465 = vmatprep.subr.mxu0 0.0
        %2466 = vmatpush1.msra.mxu0 0.0
        %2467 = vmatprep.subr.mxu0 0.0
        %2468 = vmatpush1.msra.mxu0 0.0
        %2469 = vmatprep.subr.mxu0 0.0
        %2470 = vmatpush1.msra.mxu0 0.0
        %2471 = vmatprep.subr.mxu0 0.0
        %2472 = vmatpush1.msra.mxu0 0.0
        %2473 = vmatprep.subr.mxu0 0.0
        %2474 = vmatpush1.msra.mxu0 0.0
        %2475 = vmatprep.subr.mxu0 0.0
        %2476 = vmatpush1.msra.mxu0 0.0
        %2477 = vmatprep.subr.mxu0 0.0
        %2478 = vmatpush1.msra.mxu0 0.0
        %2479 = vmatprep.subr.mxu0 0.0
        %2480 = vmatpush1.msra.mxu0 0.0
        %2481 = vmatprep.subr.mxu0 0.0
        %2482 = vmatpush1.msra.mxu0 0.0
        %2483 = vmatprep.subr.mxu0 0.0
        %2484 = vmatpush1.msra.mxu0 0.0
        %2485 = vmatprep.subr.mxu0 0.0
        %2486 = vmatpush1.msra.mxu0 0.0
        %2487 = vmatprep.subr.mxu0 0.0
        %2488 = vmatpush1.msra.mxu0 0.0
        %2489 = vmatprep.subr.mxu0 0.0
        %2490 = vmatpush1.msra.mxu0 0.0
        %2491 = vmatprep.subr.mxu0 0.0
        %2492 = vmatpush1.msra.mxu0 0.0
        %2493 = vmatprep.subr.mxu0 0.0
        %2494 = vmatpush1.msra.mxu0 0.0
        %2495 = vmatprep.subr.mxu0 0.0
        %2496 = vmatpush1.msra.mxu0 0.0
        %2497 = vmatprep.subr.mxu0 0.0
        %2498 = vmatpush1.msra.mxu0 0.0
        %2499 = vmatprep.subr.mxu0 0.0
        %2500 = vmatpush1.msra.mxu0 0.0
        %2501 = vmatprep.subr.mxu0 0.0
        %2502 = vmatpush1.msra.mxu0 0.0
        %2503 = vmatprep.subr.mxu0 0.0
        %2504 = vmatpush1.msra.mxu0 0.0
        %2505 = vmatprep.subr.mxu0 0.0
        %2506 = vmatpush1.msra.mxu0 0.0
        %2507 = vmatprep.subr.mxu0 0.0
        %2508 = vmatpush1.msra.mxu0 0.0
        %2509 = vmatprep.subr.mxu0 0.0
        %2510 = vmatpush1.msra.mxu0 0.0
        %2511 = vmatprep.subr.mxu0 0.0
        %2512 = vmatpush1.msra.mxu0 0.0
        %2513 = vmatprep.subr.mxu0 0.0
        %2514 = vmatpush1.msra.mxu0 0.0
        %2515 = vmatprep.subr.mxu0 0.0
        %2516 = vmatpush1.msra.mxu0 0.0
        %2517 = vmatprep.subr.mxu0 0.0
        %2518 = vmatpush1.msra.mxu0 0.0
        %2519 = vmatprep.mubr.f32.mxu0 0.0
        %2520 = vmatmul.mubr.f32.gmra.mrb[0].mxu0 %v2453
        %v2521 = vpop.f32.mrb[0].mxu0
        %v2522 = vadd.f32 0.0, %v2521
        %v2523 = vpop.f32.mrb[0].mxu0
        %2524 = vdwg.mxu0
        %2526 = vrot.lane.b32.xlu0 %v2188, 8
        %v2527 = vpop.permute.xlu0 %2526
        %2530 = vrot.lane.b32.xlu0 %v2355, 16
        %v2531 = vpop.permute.xlu0 %2530
        %2534 = vrot.lane.b32.xlu0 %v2522, 24
        %v2535 = vpop.permute.xlu0 %2534
        %v2537 = vsel %vm758, %v2021, %v2527
        %v2538 = vsel %vm1442, %v2537, %v2531
        %v2539 = vsel %vm1444, %v2538, %v2535
        %s2540 = scalar_lea.vmem %s6, 32
        %v2541 = vld [vmem:[%s2540] sm:$0xff]
        %v2542 = vld [vmem:[%s2540 + $0x8] sm:$0xff]
        %v2543 = vld [vmem:[%s2540 + $0x10] sm:$0xff]
        %v2544 = vld [vmem:[%s2540 + $0x18] sm:$0xff]
        %s2545 = scalar_lea.vmem %s7, 1
        %v2546 = vld [vmem:[%s2545] sm:$0x1]
        %v2548 = vlaneseq
        %v2549 = vshrl.u32 %v2548, 7
        %v2550 = vsub.s32 0, %v2549
        %v2551 = vrot.slane %v2546, %v2550
        %v2554 = vsel %vm642, %v2539, 0
        %2556 = vmatprep.subr.mxu0 0.0
        %2557 = vmatpush1.msra.mxu0 %v2541
        %2558 = vmatprep.subr.mxu0 0.0
        %2559 = vmatpush1.msra.mxu0 %v2542
        %2560 = vmatprep.subr.mxu0 0.0
        %2561 = vmatpush1.msra.mxu0 %v2543
        %2562 = vmatprep.subr.mxu0 0.0
        %2563 = vmatpush1.msra.mxu0 %v2544
        %2564 = vmatprep.subr.mxu0 0.0
        %2565 = vmatpush1.msra.mxu0 0.0
        %2566 = vmatprep.subr.mxu0 0.0
        %2567 = vmatpush1.msra.mxu0 0.0
        %2568 = vmatprep.subr.mxu0 0.0
        %2569 = vmatpush1.msra.mxu0 0.0
        %2570 = vmatprep.subr.mxu0 0.0
        %2571 = vmatpush1.msra.mxu0 0.0
        %2572 = vmatprep.subr.mxu0 0.0
        %2573 = vmatpush1.msra.mxu0 0.0
        %2574 = vmatprep.subr.mxu0 0.0
        %2575 = vmatpush1.msra.mxu0 0.0
        %2576 = vmatprep.subr.mxu0 0.0
        %2577 = vmatpush1.msra.mxu0 0.0
        %2578 = vmatprep.subr.mxu0 0.0
        %2579 = vmatpush1.msra.mxu0 0.0
        %2580 = vmatprep.subr.mxu0 0.0
        %2581 = vmatpush1.msra.mxu0 0.0
        %2582 = vmatprep.subr.mxu0 0.0
        %2583 = vmatpush1.msra.mxu0 0.0
        %2584 = vmatprep.subr.mxu0 0.0
        %2585 = vmatpush1.msra.mxu0 0.0
        %2586 = vmatprep.subr.mxu0 0.0
        %2587 = vmatpush1.msra.mxu0 0.0
        %2588 = vmatprep.subr.mxu0 0.0
        %2589 = vmatpush1.msra.mxu0 0.0
        %2590 = vmatprep.subr.mxu0 0.0
        %2591 = vmatpush1.msra.mxu0 0.0
        %2592 = vmatprep.subr.mxu0 0.0
        %2593 = vmatpush1.msra.mxu0 0.0
        %2594 = vmatprep.subr.mxu0 0.0
        %2595 = vmatpush1.msra.mxu0 0.0
        %2596 = vmatprep.subr.mxu0 0.0
        %2597 = vmatpush1.msra.mxu0 0.0
        %2598 = vmatprep.subr.mxu0 0.0
        %2599 = vmatpush1.msra.mxu0 0.0
        %2600 = vmatprep.subr.mxu0 0.0
        %2601 = vmatpush1.msra.mxu0 0.0
        %2602 = vmatprep.subr.mxu0 0.0
        %2603 = vmatpush1.msra.mxu0 0.0
        %2604 = vmatprep.subr.mxu0 0.0
        %2605 = vmatpush1.msra.mxu0 0.0
        %2606 = vmatprep.subr.mxu0 0.0
        %2607 = vmatpush1.msra.mxu0 0.0
        %2608 = vmatprep.subr.mxu0 0.0
        %2609 = vmatpush1.msra.mxu0 0.0
        %2610 = vmatprep.subr.mxu0 0.0
        %2611 = vmatpush1.msra.mxu0 0.0
        %2612 = vmatprep.subr.mxu0 0.0
        %2613 = vmatpush1.msra.mxu0 0.0
        %2614 = vmatprep.subr.mxu0 0.0
        %2615 = vmatpush1.msra.mxu0 0.0
        %2616 = vmatprep.subr.mxu0 0.0
        %2617 = vmatpush1.msra.mxu0 0.0
        %2618 = vmatprep.subr.mxu0 0.0
        %2619 = vmatpush1.msra.mxu0 0.0
        %2620 = vmatprep.mubr.f32.mxu0 0.0
        %2621 = vmatmul.mubr.f32.gmra.mrb[0].mxu0 %v2554
        %v2622 = vpop.f32.mrb[0].mxu0
        %v2623 = vadd.f32 %v2551, %v2622
        %v2624 = vpop.f32.mrb[0].mxu0
        %2625 = vdwg.mxu0
        %v2626 = vadd.f32 %v2623, %v1771
        %s2627 = scalar_lea.vmem %s8, 1
        %v2628 = vld [vmem:[%s2627] sm:$0x1]
        %s2629 = scalar_lea.vmem %s9, 1
        %v2630 = vld [vmem:[%s2629] sm:$0x1]
        %v2631 = vsel %vm642, %v2626, 0.0
        %2632 = vadd.xlane.f32.xlu0 %v2631
        %v2633 = vpop.xlane.xlu0 %2632
        %v2634 = vmul.f32 %v2633, %v646
        %v2635 = vsub.f32 %v2626, %v2634
        %v2636 = vmul.f32 %v2635, %v2635
        %v2637 = vsel %vm642, %v2636, 0.0
        %2638 = vadd.xlane.f32.xlu0 %v2637
        %v2639 = vpop.xlane.xlu0 %2638
        %v2640 = vmul.f32 %v2639, %v646
        %v2641 = vadd.f32 %v2640, 1e-12
        %v2642 = vrsqrt.pop %v2641
        %v2643 = vmul.f32 %v2635, %v2642
        %v2645 = vlaneseq
        %v2646 = vshrl.u32 %v2645, 7
        %v2647 = vsub.s32 0, %v2646
        %v2648 = vrot.slane %v2628, %v2647
        %v2650 = vmul.f32 %v2643, %v2648
        %v2652 = vlaneseq
        %v2653 = vshrl.u32 %v2652, 7
        %v2654 = vsub.s32 0, %v2653
        %v2655 = vrot.slane %v2630, %v2654
        %v2657 = vadd.f32 %v2650, %v2655
        %s2658 = scalar_lea.vmem %s10, 32
        %v2659 = vld [vmem:[%s2658] sm:$0xff]
        %v2660 = vld [vmem:[%s2658 + $0x8] sm:$0xff]
        %v2661 = vld [vmem:[%s2658 + $0x10] sm:$0xff]
        %v2662 = vld [vmem:[%s2658 + $0x18] sm:$0xff]
        %s2663 = scalar_lea.vmem %s11, 1
        %v2664 = vld [vmem:[%s2663] sm:$0x1]
        %v2666 = vlaneseq
        %v2667 = vshrl.u32 %v2666, 7
        %v2668 = vsub.s32 0, %v2667
        %v2669 = vrot.slane %v2664, %v2668
        %v2672 = vsel %vm642, %v2657, 0
        %2674 = vmatprep.subr.mxu0 0.0
        %2675 = vmatpush1.msra.mxu0 %v2659
        %2676 = vmatprep.subr.mxu0 0.0
        %2677 = vmatpush1.msra.mxu0 %v2660
        %2678 = vmatprep.subr.mxu0 0.0
        %2679 = vmatpush1.msra.mxu0 %v2661
        %2680 = vmatprep.subr.mxu0 0.0
        %2681 = vmatpush1.msra.mxu0 %v2662
        %2682 = vmatprep.subr.mxu0 0.0
        %2683 = vmatpush1.msra.mxu0 0.0
        %2684 = vmatprep.subr.mxu0 0.0
        %2685 = vmatpush1.msra.mxu0 0.0
        %2686 = vmatprep.subr.mxu0 0.0
        %2687 = vmatpush1.msra.mxu0 0.0
        %2688 = vmatprep.subr.mxu0 0.0
        %2689 = vmatpush1.msra.mxu0 0.0
        %2690 = vmatprep.subr.mxu0 0.0
        %2691 = vmatpush1.msra.mxu0 0.0
        %2692 = vmatprep.subr.mxu0 0.0
        %2693 = vmatpush1.msra.mxu0 0.0
        %2694 = vmatprep.subr.mxu0 0.0
        %2695 = vmatpush1.msra.mxu0 0.0
        %2696 = vmatprep.subr.mxu0 0.0
        %2697 = vmatpush1.msra.mxu0 0.0
        %2698 = vmatprep.subr.mxu0 0.0
        %2699 = vmatpush1.msra.mxu0 0.0
        %2700 = vmatprep.subr.mxu0 0.0
        %2701 = vmatpush1.msra.mxu0 0.0
        %2702 = vmatprep.subr.mxu0 0.0
        %2703 = vmatpush1.msra.mxu0 0.0
        %2704 = vmatprep.subr.mxu0 0.0
        %2705 = vmatpush1.msra.mxu0 0.0
        %2706 = vmatprep.subr.mxu0 0.0
        %2707 = vmatpush1.msra.mxu0 0.0
        %2708 = vmatprep.subr.mxu0 0.0
        %2709 = vmatpush1.msra.mxu0 0.0
        %2710 = vmatprep.subr.mxu0 0.0
        %2711 = vmatpush1.msra.mxu0 0.0
        %2712 = vmatprep.subr.mxu0 0.0
        %2713 = vmatpush1.msra.mxu0 0.0
        %2714 = vmatprep.subr.mxu0 0.0
        %2715 = vmatpush1.msra.mxu0 0.0
        %2716 = vmatprep.subr.mxu0 0.0
        %2717 = vmatpush1.msra.mxu0 0.0
        %2718 = vmatprep.subr.mxu0 0.0
        %2719 = vmatpush1.msra.mxu0 0.0
        %2720 = vmatprep.subr.mxu0 0.0
        %2721 = vmatpush1.msra.mxu0 0.0
        %2722 = vmatprep.subr.mxu0 0.0
        %2723 = vmatpush1.msra.mxu0 0.0
        %2724 = vmatprep.subr.mxu0 0.0
        %2725 = vmatpush1.msra.mxu0 0.0
        %2726 = vmatprep.subr.mxu0 0.0
        %2727 = vmatpush1.msra.mxu0 0.0
        %2728 = vmatprep.subr.mxu0 0.0
        %2729 = vmatpush1.msra.mxu0 0.0
        %2730 = vmatprep.subr.mxu0 0.0
        %2731 = vmatpush1.msra.mxu0 0.0
        %2732 = vmatprep.subr.mxu0 0.0
        %2733 = vmatpush1.msra.mxu0 0.0
        %2734 = vmatprep.subr.mxu0 0.0
        %2735 = vmatpush1.msra.mxu0 0.0
        %2736 = vmatprep.subr.mxu0 0.0
        %2737 = vmatpush1.msra.mxu0 0.0
        %2738 = vmatprep.mubr.f32.mxu0 0.0
        %2739 = vmatmul.mubr.f32.gmra.mrb[0].mxu0 %v2672
        %v2740 = vpop.f32.mrb[0].mxu0
        %v2741 = vadd.f32 %v2669, %v2740
        %v2742 = vpop.f32.mrb[0].mxu0
        %2743 = vdwg.mxu0
        %v2744 = vmul.f32 %v2741, 0.5
        %v2745 = vmul.f32 %v2741, 0.044715
        %v2746 = vmul.f32 %v2745, %v2741
        %v2747 = vmul.f32 %v2746, %v2741
        %v2748 = vadd.f32 %v2741, %v2747
        %v2749 = vmul.f32 %v2748, 0.7978846
        %v2750 = vtanh.pop %v2749
        %v2751 = vadd.f32 %v2750, 1.0
        %v2752 = vmul.f32 %v2744, %v2751
        %s2753 = scalar_lea.vmem %s12, 64
        %v2754 = vld [vmem:[%s2753] sm:$0xff]
        %v2755 = vld [vmem:[%s2753 + $0x8] sm:$0xff]
        %v2756 = vld [vmem:[%s2753 + $0x10] sm:$0xff]
        %v2757 = vld [vmem:[%s2753 + $0x18] sm:$0xff]
        %v2758 = vld [vmem:[%s2753 + $0x20] sm:$0xff]
        %v2759 = vld [vmem:[%s2753 + $0x28] sm:$0xff]
        %v2760 = vld [vmem:[%s2753 + $0x30] sm:$0xff]
        %v2761 = vld [vmem:[%s2753 + $0x38] sm:$0xff]
        %s2762 = scalar_lea.vmem %s13, 1
        %v2763 = vld [vmem:[%s2762] sm:$0x1]
        %v2765 = vlaneseq
        %v2766 = vshrl.u32 %v2765, 7
        %v2767 = vsub.s32 0, %v2766
        %v2768 = vrot.slane %v2763, %v2767
        %v2771 = vsel %vm1668, %v2752, 0
        %2773 = vmatprep.subr.mxu0 0.0
        %2774 = vmatpush1.msra.mxu0 %v2754
        %2775 = vmatprep.subr.mxu0 0.0
        %2776 = vmatpush1.msra.mxu0 %v2755
        %2777 = vmatprep.subr.mxu0 0.0
        %2778 = vmatpush1.msra.mxu0 %v2756
        %2779 = vmatprep.subr.mxu0 0.0
        %2780 = vmatpush1.msra.mxu0 %v2757
        %2781 = vmatprep.subr.mxu0 0.0
        %2782 = vmatpush1.msra.mxu0 %v2758
        %2783 = vmatprep.subr.mxu0 0.0
        %2784 = vmatpush1.msra.mxu0 %v2759
        %2785 = vmatprep.subr.mxu0 0.0
        %2786 = vmatpush1.msra.mxu0 %v2760
        %2787 = vmatprep.subr.mxu0 0.0
        %2788 = vmatpush1.msra.mxu0 %v2761
        %2789 = vmatprep.subr.mxu0 0.0
        %2790 = vmatpush1.msra.mxu0 0.0
        %2791 = vmatprep.subr.mxu0 0.0
        %2792 = vmatpush1.msra.mxu0 0.0
        %2793 = vmatprep.subr.mxu0 0.0
        %2794 = vmatpush1.msra.mxu0 0.0
        %2795 = vmatprep.subr.mxu0 0.0
        %2796 = vmatpush1.msra.mxu0 0.0
        %2797 = vmatprep.subr.mxu0 0.0
        %2798 = vmatpush1.msra.mxu0 0.0
        %2799 = vmatprep.subr.mxu0 0.0
        %2800 = vmatpush1.msra.mxu0 0.0
        %2801 = vmatprep.subr.mxu0 0.0
        %2802 = vmatpush1.msra.mxu0 0.0
        %2803 = vmatprep.subr.mxu0 0.0
        %2804 = vmatpush1.msra.mxu0 0.0
        %2805 = vmatprep.subr.mxu0 0.0
        %2806 = vmatpush1.msra.mxu0 0.0
        %2807 = vmatprep.subr.mxu0 0.0
        %2808 = vmatpush1.msra.mxu0 0.0
        %2809 = vmatprep.subr.mxu0 0.0
        %2810 = vmatpush1.msra.mxu0 0.0
        %2811 = vmatprep.subr.mxu0 0.0
        %2812 = vmatpush1.msra.mxu0 0.0
        %2813 = vmatprep.subr.mxu0 0.0
        %2814 = vmatpush1.msra.mxu0 0.0
        %2815 = vmatprep.subr.mxu0 0.0
        %2816 = vmatpush1.msra.mxu0 0.0
        %2817 = vmatprep.subr.mxu0 0.0
        %2818 = vmatpush1.msra.mxu0 0.0
        %2819 = vmatprep.subr.mxu0 0.0
        %2820 = vmatpush1.msra.mxu0 0.0
        %2821 = vmatprep.subr.mxu0 0.0
        %2822 = vmatpush1.msra.mxu0 0.0
        %2823 = vmatprep.subr.mxu0 0.0
        %2824 = vmatpush1.msra.mxu0 0.0
        %2825 = vmatprep.subr.mxu0 0.0
        %2826 = vmatpush1.msra.mxu0 0.0
        %2827 = vmatprep.subr.mxu0 0.0
        %2828 = vmatpush1.msra.mxu0 0.0
        %2829 = vmatprep.subr.mxu0 0.0
        %2830 = vmatpush1.msra.mxu0 0.0
        %2831 = vmatprep.subr.mxu0 0.0
        %2832 = vmatpush1.msra.mxu0 0.0
        %2833 = vmatprep.subr.mxu0 0.0
        %2834 = vmatpush1.msra.mxu0 0.0
        %2835 = vmatprep.subr.mxu0 0.0
        %2836 = vmatpush1.msra.mxu0 0.0
        %2837 = vmatprep.mubr.f32.mxu0 0.0
        %2838 = vmatmul.mubr.f32.gmra.mrb[0].mxu0 %v2771
        %v2839 = vpop.f32.mrb[0].mxu0
        %v2840 = vadd.f32 %v2768, %v2839
        %v2841 = vpop.f32.mrb[0].mxu0
        %2842 = vdwg.mxu0
        %v2843 = vadd.f32 %v2840, %v2657
        %s2844 = scalar_lea.vmem %s14, 1
        %v2845 = vld [vmem:[%s2844] sm:$0x1]
        %s2846 = scalar_lea.vmem %s15, 1
        %v2847 = vld [vmem:[%s2846] sm:$0x1]
        %v2848 = vsel %vm642, %v2843, 0.0
        %2849 = vadd.xlane.f32.xlu0 %v2848
        %v2850 = vpop.xlane.xlu0 %2849
        %v2851 = vmul.f32 %v2850, %v646
        %v2852 = vsub.f32 %v2843, %v2851
        %v2853 = vmul.f32 %v2852, %v2852
        %v2854 = vsel %vm642, %v2853, 0.0
        %2855 = vadd.xlane.f32.xlu0 %v2854
        %v2856 = vpop.xlane.xlu0 %2855
        %v2857 = vmul.f32 %v2856, %v646
        %v2858 = vadd.f32 %v2857, 1e-12
        %v2859 = vrsqrt.pop %v2858
        %v2860 = vmul.f32 %v2852, %v2859
        %v2862 = vlaneseq
        %v2863 = vshrl.u32 %v2862, 7
        %v2864 = vsub.s32 0, %v2863
        %v2865 = vrot.slane %v2845, %v2864
        %v2867 = vmul.f32 %v2860, %v2865
        %v2869 = vlaneseq
        %v2870 = vshrl.u32 %v2869, 7
        %v2871 = vsub.s32 0, %v2870
        %v2872 = vrot.slane %v2847, %v2871
        %v2874 = vadd.f32 %v2867, %v2872
        %v2875 = vsel %vm642, %v2874, 0.0
        %v2876 = vrot.slane %v2875, 4
        %v2877 = vadd.f32 %v2875, %v2876
        %v2878 = vrot.slane %v2877, 2
        %v2879 = vadd.f32 %v2877, %v2878
        %v2880 = vrot.slane %v2879, 1
        %v2881 = vadd.f32 %v2879, %v2880
        %v2882 = vrcp.pop 8.0
        %v2883 = vmul.f32 %v2881, %v2882
        %v2884 = vld [vmem:[%s16] sm:$0xff]
        %v2885 = vld [vmem:[%s16 + $0x8] sm:$0xff]
        %v2886 = vld [vmem:[%s16 + $0x10] sm:$0xff]
        %v2887 = vld [vmem:[%s16 + $0x18] sm:$0xff]
        %v2888 = vld [vmem:[%s17] sm:$0x1]
        %v2890 = vsel %vm642, %v2883, 0
        %2892 = vmatprep.subr.mxu0 0.0
        %2893 = vmatpush1.msra.mxu0 %v2884
        %2894 = vmatprep.subr.mxu0 0.0
        %2895 = vmatpush1.msra.mxu0 %v2885
        %2896 = vmatprep.subr.mxu0 0.0
        %2897 = vmatpush1.msra.mxu0 %v2886
        %2898 = vmatprep.subr.mxu0 0.0
        %2899 = vmatpush1.msra.mxu0 %v2887
        %2900 = vmatprep.subr.mxu0 0.0
        %2901 = vmatpush1.msra.mxu0 0.0
        %2902 = vmatprep.subr.mxu0 0.0
        %2903 = vmatpush1.msra.mxu0 0.0
        %2904 = vmatprep.subr.mxu0 0.0
        %2905 = vmatpush1.msra.mxu0 0.0
        %2906 = vmatprep.subr.mxu0 0.0
        %2907 = vmatpush1.msra.mxu0 0.0
        %2908 = vmatprep.subr.mxu0 0.0
        %2909 = vmatpush1.msra.mxu0 0.0
        %2910 = vmatprep.subr.mxu0 0.0
        %2911 = vmatpush1.msra.mxu0 0.0
        %2912 = vmatprep.subr.mxu0 0.0
        %2913 = vmatpush1.msra.mxu0 0.0
        %2914 = vmatprep.subr.mxu0 0.0
        %2915 = vmatpush1.msra.mxu0 0.0
        %2916 = vmatprep.subr.mxu0 0.0
        %2917 = vmatpush1.msra.mxu0 0.0
        %2918 = vmatprep.subr.mxu0 0.0
        %2919 = vmatpush1.msra.mxu0 0.0
        %2920 = vmatprep.subr.mxu0 0.0
        %2921 = vmatpush1.msra.mxu0 0.0
        %2922 = vmatprep.subr.mxu0 0.0
        %2923 = vmatpush1.msra.mxu0 0.0
        %2924 = vmatprep.subr.mxu0 0.0
        %2925 = vmatpush1.msra.mxu0 0.0
        %2926 = vmatprep.subr.mxu0 0.0
        %2927 = vmatpush1.msra.mxu0 0.0
        %2928 = vmatprep.subr.mxu0 0.0
        %2929 = vmatpush1.msra.mxu0 0.0
        %2930 = vmatprep.subr.mxu0 0.0
        %2931 = vmatpush1.msra.mxu0 0.0
        %2932 = vmatprep.subr.mxu0 0.0
        %2933 = vmatpush1.msra.mxu0 0.0
        %2934 = vmatprep.subr.mxu0 0.0
        %2935 = vmatpush1.msra.mxu0 0.0
        %2936 = vmatprep.subr.mxu0 0.0
        %2937 = vmatpush1.msra.mxu0 0.0
        %2938 = vmatprep.subr.mxu0 0.0
        %2939 = vmatpush1.msra.mxu0 0.0
        %2940 = vmatprep.subr.mxu0 0.0
        %2941 = vmatpush1.msra.mxu0 0.0
        %2942 = vmatprep.subr.mxu0 0.0
        %2943 = vmatpush1.msra.mxu0 0.0
        %2944 = vmatprep.subr.mxu0 0.0
        %2945 = vmatpush1.msra.mxu0 0.0
        %2946 = vmatprep.subr.mxu0 0.0
        %2947 = vmatpush1.msra.mxu0 0.0
        %2948 = vmatprep.subr.mxu0 0.0
        %2949 = vmatpush1.msra.mxu0 0.0
        %2950 = vmatprep.subr.mxu0 0.0
        %2951 = vmatpush1.msra.mxu0 0.0
        %2952 = vmatprep.subr.mxu0 0.0
        %2953 = vmatpush1.msra.mxu0 0.0
        %2954 = vmatprep.subr.mxu0 0.0
        %2955 = vmatpush1.msra.mxu0 0.0
        %2956 = vmatprep.mubr.f32.mxu0 0.0
        %2957 = vmatmul.mubr.f32.gmra.mrb[0].mxu0 %v2890
        %v2958 = vpop.f32.mrb[0].mxu0
        %v2959 = vadd.f32 %v2888, %v2958
        %v2960 = vpop.f32.mrb[0].mxu0
        %2961 = vdwg.mxu0
        %v2962 = vmax.f32 %v2959, 0.0
        %v2963 = vld [vmem:[%s18] sm:$0xff]
        %v2964 = vld [vmem:[%s18 + $0x8] sm:$0xff]
        %v2965 = vld [vmem:[%s18 + $0x10] sm:$0xff]
        %v2966 = vld [vmem:[%s18 + $0x18] sm:$0xff]
        %v2967 = vld [vmem:[%s18 + $0x20] sm:$0xff]
        %v2968 = vld [vmem:[%s18 + $0x28] sm:$0xff]
        %v2969 = vld [vmem:[%s18 + $0x30] sm:$0xff]
        %v2970 = vld [vmem:[%s18 + $0x38] sm:$0xff]
        %v2971 = vld [vmem:[%s18 + $0x40] sm:$0xff]
        %v2972 = vld [vmem:[%s18 + $0x48] sm:$0xff]
        %v2973 = vld [vmem:[%s18 + $0x50] sm:$0xff]
        %v2974 = vld [vmem:[%s18 + $0x58] sm:$0xff]
        %v2975 = vld [vmem:[%s18 + $0x60] sm:$0xff]
        %v2976 = vld [vmem:[%s18 + $0x68] sm:$0xff]
        %v2977 = vld [vmem:[%s18 + $0x70] sm:$0xff]
        %v2978 = vld [vmem:[%s18 + $0x78] sm:$0xff]
        %v2979 = vld [vmem:[%s19] sm:$0x1]
        %2980 = vmatprep.subr.mxu0 0.0
        %2981 = vmatpush1.msra.mxu0 %v2963
        %2982 = vmatprep.subr.mxu0 0.0
        %2983 = vmatpush1.msra.mxu0 %v2964
        %2984 = vmatprep.subr.mxu0 0.0
        %2985 = vmatpush1.msra.mxu0 %v2965
        %2986 = vmatprep.subr.mxu0 0.0
        %2987 = vmatpush1.msra.mxu0 %v2966
        %2988 = vmatprep.subr.mxu0 0.0
        %2989 = vmatpush1.msra.mxu0 %v2967
        %2990 = vmatprep.subr.mxu0 0.0
        %2991 = vmatpush1.msra.mxu0 %v2968
        %2992 = vmatprep.subr.mxu0 0.0
        %2993 = vmatpush1.msra.mxu0 %v2969
        %2994 = vmatprep.subr.mxu0 0.0
        %2995 = vmatpush1.msra.mxu0 %v2970
        %2996 = vmatprep.subr.mxu0 0.0
        %2997 = vmatpush1.msra.mxu0 %v2971
        %2998 = vmatprep.subr.mxu0 0.0
        %2999 = vmatpush1.msra.mxu0 %v2972
        %3000 = vmatprep.subr.mxu0 0.0
        %3001 = vmatpush1.msra.mxu0 %v2973
        %3002 = vmatprep.subr.mxu0 0.0
        %3003 = vmatpush1.msra.mxu0 %v2974
        %3004 = vmatprep.subr.mxu0 0.0
        %3005 = vmatpush1.msra.mxu0 %v2975
        %3006 = vmatprep.subr.mxu0 0.0
        %3007 = vmatpush1.msra.mxu0 %v2976
        %3008 = vmatprep.subr.mxu0 0.0
        %3009 = vmatpush1.msra.mxu0 %v2977
        %3010 = vmatprep.subr.mxu0 0.0
        %3011 = vmatpush1.msra.mxu0 %v2978
        %3012 = vmatprep.subr.mxu0 0.0
        %3013 = vmatpush1.msra.mxu0 0.0
        %3014 = vmatprep.subr.mxu0 0.0
        %3015 = vmatpush1.msra.mxu0 0.0
        %3016 = vmatprep.subr.mxu0 0.0
        %3017 = vmatpush1.msra.mxu0 0.0
        %3018 = vmatprep.subr.mxu0 0.0
        %3019 = vmatpush1.msra.mxu0 0.0
        %3020 = vmatprep.subr.mxu0 0.0
        %3021 = vmatpush1.msra.mxu0 0.0
        %3022 = vmatprep.subr.mxu0 0.0
        %3023 = vmatpush1.msra.mxu0 0.0
        %3024 = vmatprep.subr.mxu0 0.0
        %3025 = vmatpush1.msra.mxu0 0.0
        %3026 = vmatprep.subr.mxu0 0.0
        %3027 = vmatpush1.msra.mxu0 0.0
        %3028 = vmatprep.subr.mxu0 0.0
        %3029 = vmatpush1.msra.mxu0 0.0
        %3030 = vmatprep.subr.mxu0 0.0
        %3031 = vmatpush1.msra.mxu0 0.0
        %3032 = vmatprep.subr.mxu0 0.0
        %3033 = vmatpush1.msra.mxu0 0.0
        %3034 = vmatprep.subr.mxu0 0.0
        %3035 = vmatpush1.msra.mxu0 0.0
        %3036 = vmatprep.subr.mxu0 0.0
        %3037 = vmatpush1.msra.mxu0 0.0
        %3038 = vmatprep.subr.mxu0 0.0
        %3039 = vmatpush1.msra.mxu0 0.0
        %3040 = vmatprep.subr.mxu0 0.0
        %3041 = vmatpush1.msra.mxu0 0.0
        %3042 = vmatprep.subr.mxu0 0.0
        %3043 = vmatpush1.msra.mxu0 0.0
        %3044 = vmatprep.mubr.f32.mxu0 0.0
        %3045 = vmatmul.mubr.f32.gmra.mrb[0].mxu0 %v2962
        %v3046 = vpop.f32.mrb[0].mxu0
        %v3047 = vadd.f32 %v2979, %v3046
        %v3048 = vpop.f32.mrb[0].mxu0
        %3049 = vdwg.mxu0
        %vm3050 = vcmask 188416
        %3051 = vst.msk [vmem:[%s630] sm:$0x1] %vm3050, %v3047
        %s3052 = sand.u32 %s472, 1
        %s3053 = scalar_lea.sflag [#allocation3], %s3052
        %s3054 = sand.u32 %s472, 1
        %s3055 = scalar_lea.vmem [#allocation2], %s3054
        // Predicated region
        $region101: #{bert_classifier_forward.1} parent=99 // pred_check
          %p3056 = pneg %p482
        $region102: #{bert_classifier_forward.1} parent=99 // pred_check_branch
          %3058 = sbr.rel (%p3056) target = $region104
        $region103: #{bert_classifier_forward.1} parent=99 // pred_region
          %s3060 = ssub.s32 16, 16
          %3061 = vsyncadd %s3053, %s3060
          %s3062 = smul.addr %s34, 16
          %s3063 = scalar_lea.hbm %s20, %s3062
          %s3065 = sshll.u32 %s3055, 4
          %s3066 = int_to_ptr.vmem [resolvable:$true] %s3065
          %3068 = dma.vmem_to_hbm [thread:$0]  %s3066, 16, %s3063, %s3053
        $region104: #{bert_classifier_forward.1} parent=99 // pred_fallthru
          _
      $region100: #{bert_classifier_forward.1} parent=5 // pred_fallthru
        _
      %p3069 = scmp.le.s32.totalorder 2, %s29
      // Predicated region
      $region105: #{bert_classifier_forward.1} parent=5 // pred_check
        %p3070 = pneg %p3069
      $region106: #{bert_classifier_forward.1} parent=5 // pred_check_branch
        %3072 = sbr.rel (%p3070) target = $region108
      $region107: #{bert_classifier_forward.1} parent=5 // pred_region
        %s3073 = ssub.s32 %s29, 2
        // Predicated region
        $region109: #{bert_classifier_forward.1} parent=107 // pred_check
          %p3074 = pneg %p488
        $region110: #{bert_classifier_forward.1} parent=107 // pred_check_branch
          %3076 = sbr.rel (%p3074) target = $region112
        $region111: #{bert_classifier_forward.1} parent=107 // pred_region
          %s3077 = sand.u32 %s473, 1
          %s3078 = scalar_lea.sflag [#allocation3], %s3077
          %s3079 = sand.u32 %s473, 1
          %s3080 = scalar_lea.vmem [#allocation2], %s3079
          %3081 = dma.done %s3078, 16
        $region112: #{bert_classifier_forward.1} parent=107 // pred_fallthru
          _
      $region108: #{bert_classifier_forward.1} parent=5 // pred_fallthru
        _
    $region6: #{bert_classifier_forward.1} parent=1 // loop_footer
      %s33 = sadd.s32 1, %s29
    $region7: #{bert_classifier_forward.1} parent=1 // loop_footer_branch
      %28 = sbr.rel target = $region3
    $region8: #{bert_classifier_forward.1} parent=1 // loop_exit
      _
    %3082 = vsyncpa [#allocation3], 1
    %s3083 = scalar_lea.sflag [#allocation3], 1
    %3084 = vsyncpa %s3083, 1

</llo_original>
